<compile_context>
chip_gen: v7x
topology: tpu7x:2x2x1
jax: 0.10.0
libtpu: 0.0.40
codegen_flags: <defaults>
</compile_context>

<pallas_src>
import jax
import jax.numpy as jnp
from jax import lax
from jax.experimental import pallas as pl
from jax.experimental.pallas import tpu as pltpu

# Sized against v7x's 64 MiB physical VMEM (default scoped limit is only 16/32 MiB).
_VMEM_LIMIT_BYTES = 48 * 1024 * 1024


def _round_up(n, m):
    return ((n + m - 1) // m) * m


def _batch_pad_unit(storage_dtype):
    # rows per packed sublane group: f32 -> 8, bf16 -> 16
    return 16 if jnp.dtype(storage_dtype).itemsize == 2 else 8


def _sigmoid1(x):
    # single-EUP sigmoid: sigmoid(x) == 0.5 * tanh(0.5 * x) + 0.5
    return 0.5 * jnp.tanh(0.5 * x) + 0.5


def _lstm_cell(gates, c, H):
    # PyTorch gate order: input, forget, cell(g), output
    i = _sigmoid1(gates[:, 0 * H:1 * H])
    f = _sigmoid1(gates[:, 1 * H:2 * H])
    g = jnp.tanh(gates[:, 2 * H:3 * H])
    o = _sigmoid1(gates[:, 3 * H:4 * H])
    c_new = f * c + i * g
    h_new = o * jnp.tanh(c_new)
    return h_new, c_new


# ----------------------------------------------------------------------------
# Fused bidirectional LSTM recurrence, time-chunked grid, state in VMEM scratch.
# ----------------------------------------------------------------------------
def _bilstm_chunk_kernel(xf_ref, xb_ref, wihf_ref, wihb_ref, whhf_ref, whhb_ref,
                         outf_ref, outb_ref,
                         gxf, gxb, hf, cf, hb, cb):
    # xf_ref / xb_ref : (TC, Bp, I)  forward / reversed-order input chunks
    # wih*_ref        : (I, 4H)      input weights (transposed), storage dtype
    # whh*_ref        : (H, 4H)      recurrent weights (transposed), f32
    # outf/outb_ref   : (TC, Bp, H)  per-direction hidden-state chunks
    # gxf/gxb         : (TC, Bp, 4H) f32 scratch for the chunk's input projection
    # hf/cf/hb/cb     : (Bp, H)      f32 state carried across grid steps
    TC, Bp, I = xf_ref.shape
    H = whhf_ref.shape[0]

    @pl.when(pl.program_id(0) == 0)
    def _():
        hf[...] = jnp.zeros_like(hf)
        cf[...] = jnp.zeros_like(cf)
        hb[...] = jnp.zeros_like(hb)
        cb[...] = jnp.zeros_like(cb)

    # Per-chunk input projection on the MXU — off the sequential chain, never in HBM.
    gxf[...] = jnp.dot(xf_ref[...].reshape(TC * Bp, I), wihf_ref[...],
                       preferred_element_type=jnp.float32).reshape(TC, Bp, 4 * H)
    gxb[...] = jnp.dot(xb_ref[...].reshape(TC * Bp, I), wihb_ref[...],
                       preferred_element_type=jnp.float32).reshape(TC, Bp, 4 * H)

    def body(t, carry):
        h_f, c_f, h_b, c_b = carry
        # only these two small recurrent matmuls sit on the sequential chain
        gates_f = gxf[t] + jnp.dot(h_f, whhf_ref[...],
                                   preferred_element_type=jnp.float32)
        gates_b = gxb[TC - 1 - t] + jnp.dot(h_b, whhb_ref[...],
                                            preferred_element_type=jnp.float32)
        h_f, c_f = _lstm_cell(gates_f, c_f, H)
        h_b, c_b = _lstm_cell(gates_b, c_b, H)
        outf_ref[t] = h_f                 # forward hidden at local time t
        outb_ref[TC - 1 - t] = h_b        # backward hidden at local time TC-1-t
        return (h_f, c_f, h_b, c_b)

    carry0 = (hf[...], cf[...], hb[...], cb[...])
    unroll = True if TC <= 32 else 8
    h_f, c_f, h_b, c_b = lax.fori_loop(0, TC, body, carry0, unroll=unroll)
    hf[...] = h_f
    cf[...] = c_f
    hb[...] = h_b
    cb[...] = c_b


def bilstm_forward(x, w_ih_f, w_hh_f, w_ih_b, w_hh_b, *,
                   t_chunk=16, storage_dtype=jnp.bfloat16):
    """Bidirectional LSTM (PyTorch nn.LSTM, bias=False). x: (T, B, I) -> (T, B, 2H)."""
    T, B, I = x.shape
    H = w_hh_f.shape[1]

    pad = _batch_pad_unit(storage_dtype)
    Bp = _round_up(max(B, pad), pad)
    TC = min(t_chunk, T)
    Tp = _round_up(T, TC)
    nT = Tp // TC

    x = jnp.asarray(x, jnp.float32)
    # Zero-pad batch + time. Zero time padding is neutral for a bias-free LSTM with
    # zero initial state, so the backward direction may start inside the padded tail.
    x = jnp.pad(x, ((0, Tp - T), (0, Bp - B), (0, 0))).astype(storage_dtype)

    wihf = jnp.asarray(w_ih_f, jnp.float32).T.astype(storage_dtype)   # (I, 4H)
    wihb = jnp.asarray(w_ih_b, jnp.float32).T.astype(storage_dtype)   # (I, 4H)
    whhf = jnp.asarray(w_hh_f, jnp.float32).T                         # (H, 4H)
    whhb = jnp.asarray(w_hh_b, jnp.float32).T                         # (H, 4H)

    out_f, out_b = pl.pallas_call(
        _bilstm_chunk_kernel,
        grid=(nT,),
        in_specs=[
            pl.BlockSpec((TC, Bp, I), lambda i: (i, 0, 0)),            # fwd x chunk
            pl.BlockSpec((TC, Bp, I), lambda i: (nT - 1 - i, 0, 0)),   # bwd x chunk
            pl.BlockSpec((I, 4 * H), lambda i: (0, 0)),
            pl.BlockSpec((I, 4 * H), lambda i: (0, 0)),
            pl.BlockSpec((H, 4 * H), lambda i: (0, 0)),
            pl.BlockSpec((H, 4 * H), lambda i: (0, 0)),
        ],
        out_specs=(
            pl.BlockSpec((TC, Bp, H), lambda i: (i, 0, 0)),            # fwd out chunk
            pl.BlockSpec((TC, Bp, H), lambda i: (nT - 1 - i, 0, 0)),   # bwd out chunk
        ),
        out_shape=(
            jax.ShapeDtypeStruct((Tp, Bp, H), jnp.float32),
            jax.ShapeDtypeStruct((Tp, Bp, H), jnp.float32),
        ),
        scratch_shapes=[
            pltpu.VMEM((TC, Bp, 4 * H), jnp.float32),   # gx fwd
            pltpu.VMEM((TC, Bp, 4 * H), jnp.float32),   # gx bwd
            pltpu.VMEM((Bp, H), jnp.float32),           # h fwd
            pltpu.VMEM((Bp, H), jnp.float32),           # c fwd
            pltpu.VMEM((Bp, H), jnp.float32),           # h bwd
            pltpu.VMEM((Bp, H), jnp.float32),           # c bwd
        ],
        compiler_params=pltpu.CompilerParams(
            dimension_semantics=("arbitrary",),
            vmem_limit_bytes=_VMEM_LIMIT_BYTES),
    )(x, x, wihf, wihb, whhf, whhb)

    # TODO(synk): on v7x, s1/s2 encoders could additionally be fused into one call
    # with a leading size-2 "parallel" grid axis to use both TensorCores.
    return jnp.concatenate([out_f[:T, :B], out_b[:T, :B]], axis=-1)


# ----------------------------------------------------------------------------
# Unidirectional LSTM returning ONLY the final hidden state (char LSTM),
# batch tiled over a "parallel" grid axis, projection fused in-kernel.
# ----------------------------------------------------------------------------
def _char_lstm_kernel(x_ref, wih_ref, whh_ref, out_ref, gx):
    # x_ref  : (W, NB, E)   one batch block of char embeddings
    # wih_ref: (E, 4C), whh_ref: (C, 4C)
    # out_ref: (NB, C)      final hidden only — no per-step HBM writeback
    W, NB, E = x_ref.shape
    C = whh_ref.shape[0]

    gx[...] = jnp.dot(x_ref[...].reshape(W * NB, E), wih_ref[...],
                      preferred_element_type=jnp.float32).reshape(W, NB, 4 * C)

    def body(t, carry):
        h, c = carry
        gates = gx[t] + jnp.dot(h, whh_ref[...], preferred_element_type=jnp.float32)
        return _lstm_cell(gates, c, C)

    zeros = jnp.zeros((NB, C), jnp.float32)
    unroll = True if W <= 32 else 8
    h_final, _ = lax.fori_loop(0, W, body, (zeros, zeros), unroll=unroll)
    out_ref[...] = h_final


def lstm_final_hidden(x, w_ih, w_hh, *, n_blk=256, storage_dtype=jnp.bfloat16):
    """Unidirectional LSTM (bias=False); returns only final hidden. x: (W,N,E) -> (N,C)."""
    W, N, E = x.shape
    C = w_hh.shape[1]

    pad = _batch_pad_unit(storage_dtype)
    Np0 = _round_up(max(N, pad), pad)
    NB = min(n_blk, Np0)
    Npad = _round_up(Np0, NB)
    nN = Npad // NB

    x = jnp.asarray(x, jnp.float32)
    x = jnp.pad(x, ((0, 0), (0, Npad - N), (0, 0))).astype(storage_dtype)
    wih = jnp.asarray(w_ih, jnp.float32).T.astype(storage_dtype)      # (E, 4C)
    whh = jnp.asarray(w_hh, jnp.float32).T                            # (C, 4C)

    h_last = pl.pallas_call(
        _char_lstm_kernel,
        grid=(nN,),
        in_specs=[
            pl.BlockSpec((W, NB, E), lambda n: (0, n, 0)),
            pl.BlockSpec((E, 4 * C), lambda n: (0, 0)),
            pl.BlockSpec((C, 4 * C), lambda n: (0, 0)),
        ],
        out_specs=pl.BlockSpec((NB, C), lambda n: (n, 0)),
        out_shape=jax.ShapeDtypeStruct((Npad, C), jnp.float32),
        scratch_shapes=[pltpu.VMEM((W, NB, 4 * C), jnp.float32)],
        compiler_params=pltpu.CompilerParams(
            dimension_semantics=("parallel",),
            vmem_limit_bytes=_VMEM_LIMIT_BYTES),
    )(x, wih, whh)
    return h_last[:N]


def char_representation_merged(ch_list, emb_char, w_ih, w_hh):
    """Shared-weight char LSTM over every word of every sentence in ch_list.

    Each ch: (T, W, B) int32. Returns a list of (T, B, char_size).
    Both sentences are merged into ONE kernel launch (bigger batch, one set of
    fixed per-call overheads). Equivalent to the reference's per-word-position
    loop with zero-init hidden, keeping only the final hidden state.
    """
    W = ch_list[0].shape[1]
    assert all(c.shape[1] == W for c in ch_list), "chars-per-word must match to merge"
    pieces, sizes = [], []
    for ch in ch_list:
        T, _, B = ch.shape
        ce = emb_char[ch]                                        # (T, W, B, Ec)
        ce = jnp.transpose(ce, (1, 0, 2, 3)).reshape(W, T * B, -1)
        pieces.append(ce)
        sizes.append((T, B))
    xc = jnp.concatenate(pieces, axis=1)                         # (W, sum(T*B), Ec)
    h = lstm_final_hidden(xc, w_ih, w_hh)                        # (sum(T*B), Cs)
    outs, off = [], 0
    for (T, B) in sizes:
        outs.append(h[off:off + T * B].reshape(T, B, -1))
        off += T * B
    return outs


# ----------------------------------------------------------------------------
# Model: deterministic parameter construction + forward
# ----------------------------------------------------------------------------
def init_params(key, num_words, num_chars, embed_size, char_emb_size,
                char_size, hid_size):
    ks = jax.random.split(key, 12)
    u = lambda k, shape, s=0.1: jax.random.uniform(k, shape, jnp.float32, -s, s)
    in_size = embed_size + char_size
    return {
        "emb": u(ks[0], (num_words + 1, embed_size), 1.0),
        "emb_char": u(ks[1], (num_chars + 1, char_emb_size), 1.0),
        "char_w_ih": u(ks[2], (4 * char_size, char_emb_size)),
        "char_w_hh": u(ks[3], (4 * char_size, char_size)),
        "s1_w_ih_f": u(ks[4], (4 * hid_size, in_size)),
        "s1_w_hh_f": u(ks[5], (4 * hid_size, hid_size)),
        "s1_w_ih_b": u(ks[6], (4 * hid_size, in_size)),
        "s1_w_hh_b": u(ks[7], (4 * hid_size, hid_size)),
        "s2_w_ih_f": u(ks[8], (4 * hid_size, in_size)),
        "s2_w_hh_f": u(ks[9], (4 * hid_size, hid_size)),
        "s2_w_ih_b": u(ks[10], (4 * hid_size, in_size)),
        "s2_w_hh_b": u(ks[11], (4 * hid_size, hid_size)),
    }


@jax.jit
def bilstm_model_forward(params, labels, s1, s2, ch1, ch2):
    del labels  # unused by the reference forward's computation
    s1_emb = params["emb"][s1]   # (T1, B, E)
    s2_emb = params["emb"][s2]   # (T2, B, E)
    # merged char-level LSTM (final hidden per word position)
    all_char1, all_char2 = char_representation_merged(
        [ch1, ch2], params["emb_char"], params["char_w_ih"], params["char_w_hh"])
    # context BiLSTMs over [word_emb ; char_repr]
    x1 = jnp.concatenate([s1_emb, all_char1], axis=-1)
    x2 = jnp.concatenate([s2_emb, all_char2], axis=-1)
    out1 = bilstm_forward(x1, params["s1_w_ih_f"], params["s1_w_hh_f"],
                          params["s1_w_ih_b"], params["s1_w_hh_b"])
    out2 = bilstm_forward(x2, params["s2_w_ih_f"], params["s2_w_hh_f"],
                          params["s2_w_ih_b"], params["s2_w_hh_b"])
    # TODO(synk): self.matching / self.pre not reproducible (MatchingLayer class
    # missing from reference source; `out` in `return out` is undefined there).
    return out1, out2


# ----------------------------------------------------------------------------
# Pure-JAX reference (for numerics validation of the Pallas recurrence kernels).
# ----------------------------------------------------------------------------
def _lstm_ref(x, w_ih, w_hh):
    H = w_hh.shape[1]

    def step(carry, xt):
        h, c = carry
        gates = xt @ w_ih.T + h @ w_hh.T
        i, f, g, o = jnp.split(gates, 4, axis=-1)
        c = jax.nn.sigmoid(f) * c + jax.nn.sigmoid(i) * jnp.tanh(g)
        h = jax.nn.sigmoid(o) * jnp.tanh(c)
        return (h, c), h

    B = x.shape[1]
    init = (jnp.zeros((B, H), jnp.float32), jnp.zeros((B, H), jnp.float32))
    _, hs = jax.lax.scan(step, init, x)
    return hs


def _bilstm_ref(x, wif, whf, wib, whb):
    out_f = _lstm_ref(x, wif, whf)
    out_b = jnp.flip(_lstm_ref(jnp.flip(x, 0), wib, whb), 0)
    return jnp.concatenate([out_f, out_b], axis=-1)


if __name__ == "__main__":
    T = 8          # sentence length (seq)
    B = 2          # batch
    W = 5          # chars per word
    NUM_WORDS = 50
    NUM_CHARS = 30
    EMBED = 16     # word embed size
    CHAR_EMB = 8   # char embed size
    CHAR_SIZE = 8  # char LSTM hidden
    HID = 32       # context LSTM hidden (per direction)

    key = jax.random.PRNGKey(0)
    kp, k1, k2, k3, k4, k5, k6, k7, k8 = jax.random.split(key, 9)

    params = init_params(kp, NUM_WORDS, NUM_CHARS, EMBED, CHAR_EMB,
                         CHAR_SIZE, HID)

    s1 = jax.random.randint(k1, (T, B), 0, NUM_WORDS + 1, dtype=jnp.int32)
    s2 = jax.random.randint(k2, (T, B), 0, NUM_WORDS + 1, dtype=jnp.int32)
    ch1 = jax.random.randint(k3, (T, W, B), 0, NUM_CHARS + 1, dtype=jnp.int32)
    ch2 = jax.random.randint(k4, (T, W, B), 0, NUM_CHARS + 1, dtype=jnp.int32)
    labels = jax.random.randint(k5, (B,), 0, 3, dtype=jnp.int32)

    I = EMBED + CHAR_SIZE

    # --- check 1: fused BiLSTM recurrence, single time chunk ---
    x_test = jax.random.normal(k6, (T, B, I), jnp.float32) * 0.5
    out_pl = bilstm_forward(x_test, params["s1_w_ih_f"], params["s1_w_hh_f"],
                            params["s1_w_ih_b"], params["s1_w_hh_b"])
    out_rf = _bilstm_ref(x_test, params["s1_w_ih_f"], params["s1_w_hh_f"],
                         params["s1_w_ih_b"], params["s1_w_hh_b"])
    err_bi = float(jnp.max(jnp.abs(out_pl - out_rf)))
    assert err_bi < 2e-2, f"bilstm mismatch: {err_bi}"

    # --- check 2: multi-chunk grid with state carry + time padding (T=10, chunk=4) ---
    x_test2 = jax.random.normal(k8, (10, B, I), jnp.float32) * 0.5
    out_pl2 = bilstm_forward(x_test2, params["s1_w_ih_f"], params["s1_w_hh_f"],
                             params["s1_w_ih_b"], params["s1_w_hh_b"], t_chunk=4)
    out_rf2 = _bilstm_ref(x_test2, params["s1_w_ih_f"], params["s1_w_hh_f"],
                          params["s1_w_ih_b"], params["s1_w_hh_b"])
    err_bi2 = float(jnp.max(jnp.abs(out_pl2 - out_rf2)))
    assert err_bi2 < 2e-2, f"chunked bilstm mismatch: {err_bi2}"

    # --- check 3: char LSTM final hidden ---
    xc_test = jax.random.normal(k7, (W, T * B, CHAR_EMB), jnp.float32) * 0.5
    hc_pl = lstm_final_hidden(xc_test, params["char_w_ih"], params["char_w_hh"])
    hc_rf = _lstm_ref(xc_test, params["char_w_ih"], params["char_w_hh"])[-1]
    err_ch = float(jnp.max(jnp.abs(hc_pl - hc_rf)))
    assert err_ch < 2e-2, f"char lstm mismatch: {err_ch}"

    # --- full model forward ---
    out1, out2 = bilstm_model_forward(params, labels, s1, s2, ch1, ch2)
    jax.block_until_ready((out1, out2))

    assert out1.shape == (T, B, 2 * HID), out1.shape
    assert out2.shape == (T, B, 2 * HID), out2.shape
    assert jnp.all(jnp.isfinite(out1)) and jnp.all(jnp.isfinite(out2))
    print("KERNEL_OK")
</pallas_src>

<mosaic_0001>
module attributes {stable_mosaic.version = 11 : i64} {
  func.func @_bilstm_chunk_kernel(%arg0: i32, %arg1: memref<8x16x24xbf16, #tpu.memory_space<vmem>>, %arg2: memref<8x16x24xbf16, #tpu.memory_space<vmem>>, %arg3: memref<24x128xbf16, #tpu.memory_space<vmem>>, %arg4: memref<24x128xbf16, #tpu.memory_space<vmem>>, %arg5: memref<32x128xf32, #tpu.memory_space<vmem>>, %arg6: memref<32x128xf32, #tpu.memory_space<vmem>>, %arg7: memref<8x16x32xf32, #tpu.memory_space<vmem>>, %arg8: memref<8x16x32xf32, #tpu.memory_space<vmem>>, %arg9: memref<8x16x128xf32, #tpu.memory_space<vmem>>, %arg10: memref<8x16x128xf32, #tpu.memory_space<vmem>>, %arg11: memref<16x32xf32, #tpu.memory_space<vmem>>, %arg12: memref<16x32xf32, #tpu.memory_space<vmem>>, %arg13: memref<16x32xf32, #tpu.memory_space<vmem>>, %arg14: memref<16x32xf32, #tpu.memory_space<vmem>>) attributes {dimension_semantics = [#tpu.dimension_semantics<arbitrary>], iteration_bounds = array<i64: 1>, scalar_prefetch = 0 : i64, scratch_operands = 6 : i64, tpu.core_type = #tpu.core_type<tc>, window_params = [{transform_indices = @transform_0, window_bounds = array<i64: 8, 16, 24>}, {transform_indices = @transform_1, window_bounds = array<i64: 8, 16, 24>}, {pipeline_mode = #tpu.pipeline_mode<synchronous>, transform_indices = @transform_2, window_bounds = array<i64: 24, 128>}, {pipeline_mode = #tpu.pipeline_mode<synchronous>, transform_indices = @transform_3, window_bounds = array<i64: 24, 128>}, {pipeline_mode = #tpu.pipeline_mode<synchronous>, transform_indices = @transform_4, window_bounds = array<i64: 32, 128>}, {pipeline_mode = #tpu.pipeline_mode<synchronous>, transform_indices = @transform_5, window_bounds = array<i64: 32, 128>}, {transform_indices = @transform_6, window_bounds = array<i64: 8, 16, 32>}, {transform_indices = @transform_7, window_bounds = array<i64: 8, 16, 32>}]} {
    %c0_i32 = arith.constant 0 : i32
    %0 = arith.cmpi eq, %arg0, %c0_i32 : i32
    %1 = arith.extui %0 : i1 to i32
    %c0_i32_0 = arith.constant 0 : i32
    %2 = arith.cmpi ne, %1, %c0_i32_0 : i32
    scf.if %2 {
      %cst_306 = arith.constant 0.000000e+00 : f32
      %695 = vector.broadcast %cst_306 : f32 to vector<16x32xf32>
      %c0_307 = arith.constant 0 : index
      %c0_308 = arith.constant 0 : index
      %696 = vector.load %arg11[%c0_307, %c0_308] : memref<16x32xf32, #tpu.memory_space<vmem>>, vector<16x32xf32>
      tpu.vector_store %arg11[%c0_307, %c0_308], %695 {strides = array<i32>} : memref<16x32xf32, #tpu.memory_space<vmem>>, vector<16x32xf32>,
      %cst_309 = arith.constant 0.000000e+00 : f32
      %697 = vector.broadcast %cst_309 : f32 to vector<16x32xf32>
      %c0_310 = arith.constant 0 : index
      %c0_311 = arith.constant 0 : index
      %698 = vector.load %arg12[%c0_310, %c0_311] : memref<16x32xf32, #tpu.memory_space<vmem>>, vector<16x32xf32>
      tpu.vector_store %arg12[%c0_310, %c0_311], %697 {strides = array<i32>} : memref<16x32xf32, #tpu.memory_space<vmem>>, vector<16x32xf32>,
      %cst_312 = arith.constant 0.000000e+00 : f32
      %699 = vector.broadcast %cst_312 : f32 to vector<16x32xf32>
      %c0_313 = arith.constant 0 : index
      %c0_314 = arith.constant 0 : index
      %700 = vector.load %arg13[%c0_313, %c0_314] : memref<16x32xf32, #tpu.memory_space<vmem>>, vector<16x32xf32>
      tpu.vector_store %arg13[%c0_313, %c0_314], %699 {strides = array<i32>} : memref<16x32xf32, #tpu.memory_space<vmem>>, vector<16x32xf32>,
      %cst_315 = arith.constant 0.000000e+00 : f32
      %701 = vector.broadcast %cst_315 : f32 to vector<16x32xf32>
      %c0_316 = arith.constant 0 : index
      %c0_317 = arith.constant 0 : index
      %702 = vector.load %arg14[%c0_316, %c0_317] : memref<16x32xf32, #tpu.memory_space<vmem>>, vector<16x32xf32>
      tpu.vector_store %arg14[%c0_316, %c0_317], %701 {strides = array<i32>} : memref<16x32xf32, #tpu.memory_space<vmem>>, vector<16x32xf32>,
    } else {
    }
    %c0 = arith.constant 0 : index
    %c0_1 = arith.constant 0 : index
    %c0_2 = arith.constant 0 : index
    %3 = vector.load %arg1[%c0, %c0_1, %c0_2] : memref<8x16x24xbf16, #tpu.memory_space<vmem>>, vector<8x16x24xbf16>
    %4 = vector.shape_cast %3 : vector<8x16x24xbf16> to vector<128x24xbf16>
    %c0_3 = arith.constant 0 : index
    %c0_4 = arith.constant 0 : index
    %5 = vector.load %arg3[%c0_3, %c0_4] : memref<24x128xbf16, #tpu.memory_space<vmem>>, vector<24x128xbf16>
    %cst = arith.constant dense<0.000000e+00> : vector<128x128xf32>
    %6 = tpu.matmul %4, %5, %cst {dimension_numbers = #tpu.dot_dimension_numbers<[1], [0], [0], [1], [0, 0, 1, 1], [], []>} : vector<128x24xbf16>, vector<24x128xbf16>, vector<128x128xf32> -> vector<128x128xf32>
    %7 = vector.shape_cast %6 : vector<128x128xf32> to vector<8x16x128xf32>
    %c0_5 = arith.constant 0 : index
    %c0_6 = arith.constant 0 : index
    %c0_7 = arith.constant 0 : index
    %8 = vector.load %arg9[%c0_5, %c0_6, %c0_7] : memref<8x16x128xf32, #tpu.memory_space<vmem>>, vector<8x16x128xf32>
    tpu.vector_store %arg9[%c0_5, %c0_6, %c0_7], %7 {strides = array<i32>} : memref<8x16x128xf32, #tpu.memory_space<vmem>>, vector<8x16x128xf32>,
    %c0_8 = arith.constant 0 : index
    %c0_9 = arith.constant 0 : index
    %c0_10 = arith.constant 0 : index
    %9 = vector.load %arg2[%c0_8, %c0_9, %c0_10] : memref<8x16x24xbf16, #tpu.memory_space<vmem>>, vector<8x16x24xbf16>
    %10 = vector.shape_cast %9 : vector<8x16x24xbf16> to vector<128x24xbf16>
    %c0_11 = arith.constant 0 : index
    %c0_12 = arith.constant 0 : index
    %11 = vector.load %arg4[%c0_11, %c0_12] : memref<24x128xbf16, #tpu.memory_space<vmem>>, vector<24x128xbf16>
    %cst_13 = arith.constant dense<0.000000e+00> : vector<128x128xf32>
    %12 = tpu.matmul %10, %11, %cst_13 {dimension_numbers = #tpu.dot_dimension_numbers<[1], [0], [0], [1], [0, 0, 1, 1], [], []>} : vector<128x24xbf16>, vector<24x128xbf16>, vector<128x128xf32> -> vector<128x128xf32>
    %13 = vector.shape_cast %12 : vector<128x128xf32> to vector<8x16x128xf32>
    %c0_14 = arith.constant 0 : index
    %c0_15 = arith.constant 0 : index
    %c0_16 = arith.constant 0 : index
    %14 = vector.load %arg10[%c0_14, %c0_15, %c0_16] : memref<8x16x128xf32, #tpu.memory_space<vmem>>, vector<8x16x128xf32>
    tpu.vector_store %arg10[%c0_14, %c0_15, %c0_16], %13 {strides = array<i32>} : memref<8x16x128xf32, #tpu.memory_space<vmem>>, vector<8x16x128xf32>,
    %c0_17 = arith.constant 0 : index
    %c0_18 = arith.constant 0 : index
    %15 = vector.load %arg11[%c0_17, %c0_18] : memref<16x32xf32, #tpu.memory_space<vmem>>, vector<16x32xf32>
    %c0_19 = arith.constant 0 : index
    %c0_20 = arith.constant 0 : index
    %16 = vector.load %arg12[%c0_19, %c0_20] : memref<16x32xf32, #tpu.memory_space<vmem>>, vector<16x32xf32>
    %c0_21 = arith.constant 0 : index
    %c0_22 = arith.constant 0 : index
    %17 = vector.load %arg13[%c0_21, %c0_22] : memref<16x32xf32, #tpu.memory_space<vmem>>, vector<16x32xf32>
    %c0_23 = arith.constant 0 : index
    %c0_24 = arith.constant 0 : index
    %18 = vector.load %arg14[%c0_23, %c0_24] : memref<16x32xf32, #tpu.memory_space<vmem>>, vector<16x32xf32>
    %c0_i32_25 = arith.constant 0 : i32
    %19 = arith.index_cast %c0_i32_25 : i32 to index
    %c0_26 = arith.constant 0 : index
    %c0_27 = arith.constant 0 : index
    %20 = vector.load %arg9[%19, %c0_26, %c0_27] : memref<8x16x128xf32, #tpu.memory_space<vmem>>, vector<1x16x128xf32>
    %21 = vector.shape_cast %20 : vector<1x16x128xf32> to vector<16x128xf32>
    %c0_28 = arith.constant 0 : index
    %c0_29 = arith.constant 0 : index
    %22 = vector.load %arg5[%c0_28, %c0_29] : memref<32x128xf32, #tpu.memory_space<vmem>>, vector<32x128xf32>
    %cst_30 = arith.constant dense<0.000000e+00> : vector<16x128xf32>
    %23 = tpu.matmul %15, %22, %cst_30 {dimension_numbers = #tpu.dot_dimension_numbers<[1], [0], [0], [1], [0, 0, 1, 1], [], []>} : vector<16x32xf32>, vector<32x128xf32>, vector<16x128xf32> -> vector<16x128xf32>
    %24 = arith.addf %21, %23 : vector<16x128xf32>
    %c7_i32 = arith.constant 7 : i32
    %25 = arith.subi %c7_i32, %c0_i32_25 : i32
    %26 = arith.index_cast %25 : i32 to index
    %c0_31 = arith.constant 0 : index
    %c0_32 = arith.constant 0 : index
    %27 = vector.load %arg10[%26, %c0_31, %c0_32] : memref<8x16x128xf32, #tpu.memory_space<vmem>>, vector<1x16x128xf32>
    %28 = vector.shape_cast %27 : vector<1x16x128xf32> to vector<16x128xf32>
    %c0_33 = arith.constant 0 : index
    %c0_34 = arith.constant 0 : index
    %29 = vector.load %arg6[%c0_33, %c0_34] : memref<32x128xf32, #tpu.memory_space<vmem>>, vector<32x128xf32>
    %cst_35 = arith.constant dense<0.000000e+00> : vector<16x128xf32>
    %30 = tpu.matmul %17, %29, %cst_35 {dimension_numbers = #tpu.dot_dimension_numbers<[1], [0], [0], [1], [0, 0, 1, 1], [], []>} : vector<16x32xf32>, vector<32x128xf32>, vector<16x128xf32> -> vector<16x128xf32>
    %31 = arith.addf %28, %30 : vector<16x128xf32>
    %32 = vector.extract_strided_slice %24 {offsets = [0, 0], sizes = [16, 32], strides = [1, 1]} : vector<16x128xf32> to vector<16x32xf32>
    %cst_36 = arith.constant 5.000000e-01 : f32
    %33 = vector.broadcast %cst_36 : f32 to vector<16x32xf32>
    %34 = arith.mulf %33, %32 : vector<16x32xf32>
    %35 = math.tanh %34 : vector<16x32xf32>
    %cst_37 = arith.constant 5.000000e-01 : f32
    %36 = vector.broadcast %cst_37 : f32 to vector<16x32xf32>
    %37 = arith.mulf %36, %35 : vector<16x32xf32>
    %cst_38 = arith.constant 5.000000e-01 : f32
    %38 = vector.broadcast %cst_38 : f32 to vector<16x32xf32>
    %39 = arith.addf %37, %38 : vector<16x32xf32>
    %40 = vector.extract_strided_slice %24 {offsets = [0, 32], sizes = [16, 32], strides = [1, 1]} : vector<16x128xf32> to vector<16x32xf32>
    %cst_39 = arith.constant 5.000000e-01 : f32
    %41 = vector.broadcast %cst_39 : f32 to vector<16x32xf32>
    %42 = arith.mulf %41, %40 : vector<16x32xf32>
    %43 = math.tanh %42 : vector<16x32xf32>
    %cst_40 = arith.constant 5.000000e-01 : f32
    %44 = vector.broadcast %cst_40 : f32 to vector<16x32xf32>
    %45 = arith.mulf %44, %43 : vector<16x32xf32>
    %cst_41 = arith.constant 5.000000e-01 : f32
    %46 = vector.broadcast %cst_41 : f32 to vector<16x32xf32>
    %47 = arith.addf %45, %46 : vector<16x32xf32>
    %48 = vector.extract_strided_slice %24 {offsets = [0, 64], sizes = [16, 32], strides = [1, 1]} : vector<16x128xf32> to vector<16x32xf32>
    %49 = math.tanh %48 : vector<16x32xf32>
    %50 = vector.extract_strided_slice %24 {offsets = [0, 96], sizes = [16, 32], strides = [1, 1]} : vector<16x128xf32> to vector<16x32xf32>
    %cst_42 = arith.constant 5.000000e-01 : f32
    %51 = vector.broadcast %cst_42 : f32 to vector<16x32xf32>
    %52 = arith.mulf %51, %50 : vector<16x32xf32>
    %53 = math.tanh %52 : vector<16x32xf32>
    %cst_43 = arith.constant 5.000000e-01 : f32
    %54 = vector.broadcast %cst_43 : f32 to vector<16x32xf32>
    %55 = arith.mulf %54, %53 : vector<16x32xf32>
    %cst_44 = arith.constant 5.000000e-01 : f32
    %56 = vector.broadcast %cst_44 : f32 to vector<16x32xf32>
    %57 = arith.addf %55, %56 : vector<16x32xf32>
    %58 = arith.mulf %47, %16 : vector<16x32xf32>
    %59 = arith.mulf %39, %49 : vector<16x32xf32>
    %60 = arith.addf %58, %59 : vector<16x32xf32>
    %61 = math.tanh %60 : vector<16x32xf32>
    %62 = arith.mulf %57, %61 : vector<16x32xf32>
    %63 = vector.extract_strided_slice %31 {offsets = [0, 0], sizes = [16, 32], strides = [1, 1]} : vector<16x128xf32> to vector<16x32xf32>
    %cst_45 = arith.constant 5.000000e-01 : f32
    %64 = vector.broadcast %cst_45 : f32 to vector<16x32xf32>
    %65 = arith.mulf %64, %63 : vector<16x32xf32>
    %66 = math.tanh %65 : vector<16x32xf32>
    %cst_46 = arith.constant 5.000000e-01 : f32
    %67 = vector.broadcast %cst_46 : f32 to vector<16x32xf32>
    %68 = arith.mulf %67, %66 : vector<16x32xf32>
    %cst_47 = arith.constant 5.000000e-01 : f32
    %69 = vector.broadcast %cst_47 : f32 to vector<16x32xf32>
    %70 = arith.addf %68, %69 : vector<16x32xf32>
    %71 = vector.extract_strided_slice %31 {offsets = [0, 32], sizes = [16, 32], strides = [1, 1]} : vector<16x128xf32> to vector<16x32xf32>
    %cst_48 = arith.constant 5.000000e-01 : f32
    %72 = vector.broadcast %cst_48 : f32 to vector<16x32xf32>
    %73 = arith.mulf %72, %71 : vector<16x32xf32>
    %74 = math.tanh %73 : vector<16x32xf32>
    %cst_49 = arith.constant 5.000000e-01 : f32
    %75 = vector.broadcast %cst_49 : f32 to vector<16x32xf32>
    %76 = arith.mulf %75, %74 : vector<16x32xf32>
    %cst_50 = arith.constant 5.000000e-01 : f32
    %77 = vector.broadcast %cst_50 : f32 to vector<16x32xf32>
    %78 = arith.addf %76, %77 : vector<16x32xf32>
    %79 = vector.extract_strided_slice %31 {offsets = [0, 64], sizes = [16, 32], strides = [1, 1]} : vector<16x128xf32> to vector<16x32xf32>
    %80 = math.tanh %79 : vector<16x32xf32>
    %81 = vector.extract_strided_slice %31 {offsets = [0, 96], sizes = [16, 32], strides = [1, 1]} : vector<16x128xf32> to vector<16x32xf32>
    %cst_51 = arith.constant 5.000000e-01 : f32
    %82 = vector.broadcast %cst_51 : f32 to vector<16x32xf32>
    %83 = arith.mulf %82, %81 : vector<16x32xf32>
    %84 = math.tanh %83 : vector<16x32xf32>
    %cst_52 = arith.constant 5.000000e-01 : f32
    %85 = vector.broadcast %cst_52 : f32 to vector<16x32xf32>
    %86 = arith.mulf %85, %84 : vector<16x32xf32>
    %cst_53 = arith.constant 5.000000e-01 : f32
    %87 = vector.broadcast %cst_53 : f32 to vector<16x32xf32>
    %88 = arith.addf %86, %87 : vector<16x32xf32>
    %89 = arith.mulf %78, %18 : vector<16x32xf32>
    %90 = arith.mulf %70, %80 : vector<16x32xf32>
    %91 = arith.addf %89, %90 : vector<16x32xf32>
    %92 = math.tanh %91 : vector<16x32xf32>
    %93 = arith.mulf %88, %92 : vector<16x32xf32>
    %94 = arith.index_cast %c0_i32_25 : i32 to index
    %c0_54 = arith.constant 0 : index
    %c0_55 = arith.constant 0 : index
    %95 = vector.load %arg7[%94, %c0_54, %c0_55] : memref<8x16x32xf32, #tpu.memory_space<vmem>>, vector<1x16x32xf32>
    %96 = vector.shape_cast %95 : vector<1x16x32xf32> to vector<16x32xf32>
    %97 = vector.shape_cast %62 : vector<16x32xf32> to vector<1x16x32xf32>
    tpu.vector_store %arg7[%94, %c0_54, %c0_55], %97 {strides = array<i32>} : memref<8x16x32xf32, #tpu.memory_space<vmem>>, vector<1x16x32xf32>,
    %c7_i32_56 = arith.constant 7 : i32
    %98 = arith.subi %c7_i32_56, %c0_i32_25 : i32
    %99 = arith.index_cast %98 : i32 to index
    %c0_57 = arith.constant 0 : index
    %c0_58 = arith.constant 0 : index
    %100 = vector.load %arg8[%99, %c0_57, %c0_58] : memref<8x16x32xf32, #tpu.memory_space<vmem>>, vector<1x16x32xf32>
    %101 = vector.shape_cast %100 : vector<1x16x32xf32> to vector<16x32xf32>
    %102 = vector.shape_cast %93 : vector<16x32xf32> to vector<1x16x32xf32>
    tpu.vector_store %arg8[%99, %c0_57, %c0_58], %102 {strides = array<i32>} : memref<8x16x32xf32, #tpu.memory_space<vmem>>, vector<1x16x32xf32>,
    %c1_i32 = arith.constant 1 : i32
    %103 = arith.index_cast %c1_i32 : i32 to index
    %c0_59 = arith.constant 0 : index
    %c0_60 = arith.constant 0 : index
    %104 = vector.load %arg9[%103, %c0_59, %c0_60] : memref<8x16x128xf32, #tpu.memory_space<vmem>>, vector<1x16x128xf32>
    %105 = vector.shape_cast %104 : vector<1x16x128xf32> to vector<16x128xf32>
    %c0_61 = arith.constant 0 : index
    %c0_62 = arith.constant 0 : index
    %106 = vector.load %arg5[%c0_61, %c0_62] : memref<32x128xf32, #tpu.memory_space<vmem>>, vector<32x128xf32>
    %cst_63 = arith.constant dense<0.000000e+00> : vector<16x128xf32>
    %107 = tpu.matmul %62, %106, %cst_63 {dimension_numbers = #tpu.dot_dimension_numbers<[1], [0], [0], [1], [0, 0, 1, 1], [], []>} : vector<16x32xf32>, vector<32x128xf32>, vector<16x128xf32> -> vector<16x128xf32>
    %108 = arith.addf %105, %107 : vector<16x128xf32>
    %c7_i32_64 = arith.constant 7 : i32
    %109 = arith.subi %c7_i32_64, %c1_i32 : i32
    %110 = arith.index_cast %109 : i32 to index
    %c0_65 = arith.constant 0 : index
    %c0_66 = arith.constant 0 : index
    %111 = vector.load %arg10[%110, %c0_65, %c0_66] : memref<8x16x128xf32, #tpu.memory_space<vmem>>, vector<1x16x128xf32>
    %112 = vector.shape_cast %111 : vector<1x16x128xf32> to vector<16x128xf32>
    %c0_67 = arith.constant 0 : index
    %c0_68 = arith.constant 0 : index
    %113 = vector.load %arg6[%c0_67, %c0_68] : memref<32x128xf32, #tpu.memory_space<vmem>>, vector<32x128xf32>
    %cst_69 = arith.constant dense<0.000000e+00> : vector<16x128xf32>
    %114 = tpu.matmul %93, %113, %cst_69 {dimension_numbers = #tpu.dot_dimension_numbers<[1], [0], [0], [1], [0, 0, 1, 1], [], []>} : vector<16x32xf32>, vector<32x128xf32>, vector<16x128xf32> -> vector<16x128xf32>
    %115 = arith.addf %112, %114 : vector<16x128xf32>
    %116 = vector.extract_strided_slice %108 {offsets = [0, 0], sizes = [16, 32], strides = [1, 1]} : vector<16x128xf32> to vector<16x32xf32>
    %cst_70 = arith.constant 5.000000e-01 : f32
    %117 = vector.broadcast %cst_70 : f32 to vector<16x32xf32>
    %118 = arith.mulf %117, %116 : vector<16x32xf32>
    %119 = math.tanh %118 : vector<16x32xf32>
    %cst_71 = arith.constant 5.000000e-01 : f32
    %120 = vector.broadcast %cst_71 : f32 to vector<16x32xf32>
    %121 = arith.mulf %120, %119 : vector<16x32xf32>
    %cst_72 = arith.constant 5.000000e-01 : f32
    %122 = vector.broadcast %cst_72 : f32 to vector<16x32xf32>
    %123 = arith.addf %121, %122 : vector<16x32xf32>
    %124 = vector.extract_strided_slice %108 {offsets = [0, 32], sizes = [16, 32], strides = [1, 1]} : vector<16x128xf32> to vector<16x32xf32>
    %cst_73 = arith.constant 5.000000e-01 : f32
    %125 = vector.broadcast %cst_73 : f32 to vector<16x32xf32>
    %126 = arith.mulf %125, %124 : vector<16x32xf32>
    %127 = math.tanh %126 : vector<16x32xf32>
    %cst_74 = arith.constant 5.000000e-01 : f32
    %128 = vector.broadcast %cst_74 : f32 to vector<16x32xf32>
    %129 = arith.mulf %128, %127 : vector<16x32xf32>
    %cst_75 = arith.constant 5.000000e-01 : f32
    %130 = vector.broadcast %cst_75 : f32 to vector<16x32xf32>
    %131 = arith.addf %129, %130 : vector<16x32xf32>
    %132 = vector.extract_strided_slice %108 {offsets = [0, 64], sizes = [16, 32], strides = [1, 1]} : vector<16x128xf32> to vector<16x32xf32>
    %133 = math.tanh %132 : vector<16x32xf32>
    %134 = vector.extract_strided_slice %108 {offsets = [0, 96], sizes = [16, 32], strides = [1, 1]} : vector<16x128xf32> to vector<16x32xf32>
    %cst_76 = arith.constant 5.000000e-01 : f32
    %135 = vector.broadcast %cst_76 : f32 to vector<16x32xf32>
    %136 = arith.mulf %135, %134 : vector<16x32xf32>
    %137 = math.tanh %136 : vector<16x32xf32>
    %cst_77 = arith.constant 5.000000e-01 : f32
    %138 = vector.broadcast %cst_77 : f32 to vector<16x32xf32>
    %139 = arith.mulf %138, %137 : vector<16x32xf32>
    %cst_78 = arith.constant 5.000000e-01 : f32
    %140 = vector.broadcast %cst_78 : f32 to vector<16x32xf32>
    %141 = arith.addf %139, %140 : vector<16x32xf32>
    %142 = arith.mulf %131, %60 : vector<16x32xf32>
    %143 = arith.mulf %123, %133 : vector<16x32xf32>
    %144 = arith.addf %142, %143 : vector<16x32xf32>
    %145 = math.tanh %144 : vector<16x32xf32>
    %146 = arith.mulf %141, %145 : vector<16x32xf32>
    %147 = vector.extract_strided_slice %115 {offsets = [0, 0], sizes = [16, 32], strides = [1, 1]} : vector<16x128xf32> to vector<16x32xf32>
    %cst_79 = arith.constant 5.000000e-01 : f32
    %148 = vector.broadcast %cst_79 : f32 to vector<16x32xf32>
    %149 = arith.mulf %148, %147 : vector<16x32xf32>
    %150 = math.tanh %149 : vector<16x32xf32>
    %cst_80 = arith.constant 5.000000e-01 : f32
    %151 = vector.broadcast %cst_80 : f32 to vector<16x32xf32>
    %152 = arith.mulf %151, %150 : vector<16x32xf32>
    %cst_81 = arith.constant 5.000000e-01 : f32
    %153 = vector.broadcast %cst_81 : f32 to vector<16x32xf32>
    %154 = arith.addf %152, %153 : vector<16x32xf32>
    %155 = vector.extract_strided_slice %115 {offsets = [0, 32], sizes = [16, 32], strides = [1, 1]} : vector<16x128xf32> to vector<16x32xf32>
    %cst_82 = arith.constant 5.000000e-01 : f32
    %156 = vector.broadcast %cst_82 : f32 to vector<16x32xf32>
    %157 = arith.mulf %156, %155 : vector<16x32xf32>
    %158 = math.tanh %157 : vector<16x32xf32>
    %cst_83 = arith.constant 5.000000e-01 : f32
    %159 = vector.broadcast %cst_83 : f32 to vector<16x32xf32>
    %160 = arith.mulf %159, %158 : vector<16x32xf32>
    %cst_84 = arith.constant 5.000000e-01 : f32
    %161 = vector.broadcast %cst_84 : f32 to vector<16x32xf32>
    %162 = arith.addf %160, %161 : vector<16x32xf32>
    %163 = vector.extract_strided_slice %115 {offsets = [0, 64], sizes = [16, 32], strides = [1, 1]} : vector<16x128xf32> to vector<16x32xf32>
    %164 = math.tanh %163 : vector<16x32xf32>
    %165 = vector.extract_strided_slice %115 {offsets = [0, 96], sizes = [16, 32], strides = [1, 1]} : vector<16x128xf32> to vector<16x32xf32>
    %cst_85 = arith.constant 5.000000e-01 : f32
    %166 = vector.broadcast %cst_85 : f32 to vector<16x32xf32>
    %167 = arith.mulf %166, %165 : vector<16x32xf32>
    %168 = math.tanh %167 : vector<16x32xf32>
    %cst_86 = arith.constant 5.000000e-01 : f32
    %169 = vector.broadcast %cst_86 : f32 to vector<16x32xf32>
    %170 = arith.mulf %169, %168 : vector<16x32xf32>
    %cst_87 = arith.constant 5.000000e-01 : f32
    %171 = vector.broadcast %cst_87 : f32 to vector<16x32xf32>
    %172 = arith.addf %170, %171 : vector<16x32xf32>
    %173 = arith.mulf %162, %91 : vector<16x32xf32>
    %174 = arith.mulf %154, %164 : vector<16x32xf32>
    %175 = arith.addf %173, %174 : vector<16x32xf32>
    %176 = math.tanh %175 : vector<16x32xf32>
    %177 = arith.mulf %172, %176 : vector<16x32xf32>
    %178 = arith.index_cast %c1_i32 : i32 to index
    %c0_88 = arith.constant 0 : index
    %c0_89 = arith.constant 0 : index
    %179 = vector.load %arg7[%178, %c0_88, %c0_89] : memref<8x16x32xf32, #tpu.memory_space<vmem>>, vector<1x16x32xf32>
    %180 = vector.shape_cast %179 : vector<1x16x32xf32> to vector<16x32xf32>
    %181 = vector.shape_cast %146 : vector<16x32xf32> to vector<1x16x32xf32>
    tpu.vector_store %arg7[%178, %c0_88, %c0_89], %181 {strides = array<i32>} : memref<8x16x32xf32, #tpu.memory_space<vmem>>, vector<1x16x32xf32>,
    %c7_i32_90 = arith.constant 7 : i32
    %182 = arith.subi %c7_i32_90, %c1_i32 : i32
    %183 = arith.index_cast %182 : i32 to index
    %c0_91 = arith.constant 0 : index
    %c0_92 = arith.constant 0 : index
    %184 = vector.load %arg8[%183, %c0_91, %c0_92] : memref<8x16x32xf32, #tpu.memory_space<vmem>>, vector<1x16x32xf32>
    %185 = vector.shape_cast %184 : vector<1x16x32xf32> to vector<16x32xf32>
    %186 = vector.shape_cast %177 : vector<16x32xf32> to vector<1x16x32xf32>
    tpu.vector_store %arg8[%183, %c0_91, %c0_92], %186 {strides = array<i32>} : memref<8x16x32xf32, #tpu.memory_space<vmem>>, vector<1x16x32xf32>,
    %c2_i32 = arith.constant 2 : i32
    %187 = arith.index_cast %c2_i32 : i32 to index
    %c0_93 = arith.constant 0 : index
    %c0_94 = arith.constant 0 : index
    %188 = vector.load %arg9[%187, %c0_93, %c0_94] : memref<8x16x128xf32, #tpu.memory_space<vmem>>, vector<1x16x128xf32>
    %189 = vector.shape_cast %188 : vector<1x16x128xf32> to vector<16x128xf32>
    %c0_95 = arith.constant 0 : index
    %c0_96 = arith.constant 0 : index
    %190 = vector.load %arg5[%c0_95, %c0_96] : memref<32x128xf32, #tpu.memory_space<vmem>>, vector<32x128xf32>
    %cst_97 = arith.constant dense<0.000000e+00> : vector<16x128xf32>
    %191 = tpu.matmul %146, %190, %cst_97 {dimension_numbers = #tpu.dot_dimension_numbers<[1], [0], [0], [1], [0, 0, 1, 1], [], []>} : vector<16x32xf32>, vector<32x128xf32>, vector<16x128xf32> -> vector<16x128xf32>
    %192 = arith.addf %189, %191 : vector<16x128xf32>
    %c7_i32_98 = arith.constant 7 : i32
    %193 = arith.subi %c7_i32_98, %c2_i32 : i32
    %194 = arith.index_cast %193 : i32 to index
    %c0_99 = arith.constant 0 : index
    %c0_100 = arith.constant 0 : index
    %195 = vector.load %arg10[%194, %c0_99, %c0_100] : memref<8x16x128xf32, #tpu.memory_space<vmem>>, vector<1x16x128xf32>
    %196 = vector.shape_cast %195 : vector<1x16x128xf32> to vector<16x128xf32>
    %c0_101 = arith.constant 0 : index
    %c0_102 = arith.constant 0 : index
    %197 = vector.load %arg6[%c0_101, %c0_102] : memref<32x128xf32, #tpu.memory_space<vmem>>, vector<32x128xf32>
    %cst_103 = arith.constant dense<0.000000e+00> : vector<16x128xf32>
    %198 = tpu.matmul %177, %197, %cst_103 {dimension_numbers = #tpu.dot_dimension_numbers<[1], [0], [0], [1], [0, 0, 1, 1], [], []>} : vector<16x32xf32>, vector<32x128xf32>, vector<16x128xf32> -> vector<16x128xf32>
    %199 = arith.addf %196, %198 : vector<16x128xf32>
    %200 = vector.extract_strided_slice %192 {offsets = [0, 0], sizes = [16, 32], strides = [1, 1]} : vector<16x128xf32> to vector<16x32xf32>
    %cst_104 = arith.constant 5.000000e-01 : f32
    %201 = vector.broadcast %cst_104 : f32 to vector<16x32xf32>
    %202 = arith.mulf %201, %200 : vector<16x32xf32>
    %203 = math.tanh %202 : vector<16x32xf32>
    %cst_105 = arith.constant 5.000000e-01 : f32
    %204 = vector.broadcast %cst_105 : f32 to vector<16x32xf32>
    %205 = arith.mulf %204, %203 : vector<16x32xf32>
    %cst_106 = arith.constant 5.000000e-01 : f32
    %206 = vector.broadcast %cst_106 : f32 to vector<16x32xf32>
    %207 = arith.addf %205, %206 : vector<16x32xf32>
    %208 = vector.extract_strided_slice %192 {offsets = [0, 32], sizes = [16, 32], strides = [1, 1]} : vector<16x128xf32> to vector<16x32xf32>
    %cst_107 = arith.constant 5.000000e-01 : f32
    %209 = vector.broadcast %cst_107 : f32 to vector<16x32xf32>
    %210 = arith.mulf %209, %208 : vector<16x32xf32>
    %211 = math.tanh %210 : vector<16x32xf32>
    %cst_108 = arith.constant 5.000000e-01 : f32
    %212 = vector.broadcast %cst_108 : f32 to vector<16x32xf32>
    %213 = arith.mulf %212, %211 : vector<16x32xf32>
    %cst_109 = arith.constant 5.000000e-01 : f32
    %214 = vector.broadcast %cst_109 : f32 to vector<16x32xf32>
    %215 = arith.addf %213, %214 : vector<16x32xf32>
    %216 = vector.extract_strided_slice %192 {offsets = [0, 64], sizes = [16, 32], strides = [1, 1]} : vector<16x128xf32> to vector<16x32xf32>
    %217 = math.tanh %216 : vector<16x32xf32>
    %218 = vector.extract_strided_slice %192 {offsets = [0, 96], sizes = [16, 32], strides = [1, 1]} : vector<16x128xf32> to vector<16x32xf32>
    %cst_110 = arith.constant 5.000000e-01 : f32
    %219 = vector.broadcast %cst_110 : f32 to vector<16x32xf32>
    %220 = arith.mulf %219, %218 : vector<16x32xf32>
    %221 = math.tanh %220 : vector<16x32xf32>
    %cst_111 = arith.constant 5.000000e-01 : f32
    %222 = vector.broadcast %cst_111 : f32 to vector<16x32xf32>
    %223 = arith.mulf %222, %221 : vector<16x32xf32>
    %cst_112 = arith.constant 5.000000e-01 : f32
    %224 = vector.broadcast %cst_112 : f32 to vector<16x32xf32>
    %225 = arith.addf %223, %224 : vector<16x32xf32>
    %226 = arith.mulf %215, %144 : vector<16x32xf32>
    %227 = arith.mulf %207, %217 : vector<16x32xf32>
    %228 = arith.addf %226, %227 : vector<16x32xf32>
    %229 = math.tanh %228 : vector<16x32xf32>
    %230 = arith.mulf %225, %229 : vector<16x32xf32>
    %231 = vector.extract_strided_slice %199 {offsets = [0, 0], sizes = [16, 32], strides = [1, 1]} : vector<16x128xf32> to vector<16x32xf32>
    %cst_113 = arith.constant 5.000000e-01 : f32
    %232 = vector.broadcast %cst_113 : f32 to vector<16x32xf32>
    %233 = arith.mulf %232, %231 : vector<16x32xf32>
    %234 = math.tanh %233 : vector<16x32xf32>
    %cst_114 = arith.constant 5.000000e-01 : f32
    %235 = vector.broadcast %cst_114 : f32 to vector<16x32xf32>
    %236 = arith.mulf %235, %234 : vector<16x32xf32>
    %cst_115 = arith.constant 5.000000e-01 : f32
    %237 = vector.broadcast %cst_115 : f32 to vector<16x32xf32>
    %238 = arith.addf %236, %237 : vector<16x32xf32>
    %239 = vector.extract_strided_slice %199 {offsets = [0, 32], sizes = [16, 32], strides = [1, 1]} : vector<16x128xf32> to vector<16x32xf32>
    %cst_116 = arith.constant 5.000000e-01 : f32
    %240 = vector.broadcast %cst_116 : f32 to vector<16x32xf32>
    %241 = arith.mulf %240, %239 : vector<16x32xf32>
    %242 = math.tanh %241 : vector<16x32xf32>
    %cst_117 = arith.constant 5.000000e-01 : f32
    %243 = vector.broadcast %cst_117 : f32 to vector<16x32xf32>
    %244 = arith.mulf %243, %242 : vector<16x32xf32>
    %cst_118 = arith.constant 5.000000e-01 : f32
    %245 = vector.broadcast %cst_118 : f32 to vector<16x32xf32>
    %246 = arith.addf %244, %245 : vector<16x32xf32>
    %247 = vector.extract_strided_slice %199 {offsets = [0, 64], sizes = [16, 32], strides = [1, 1]} : vector<16x128xf32> to vector<16x32xf32>
    %248 = math.tanh %247 : vector<16x32xf32>
    %249 = vector.extract_strided_slice %199 {offsets = [0, 96], sizes = [16, 32], strides = [1, 1]} : vector<16x128xf32> to vector<16x32xf32>
    %cst_119 = arith.constant 5.000000e-01 : f32
    %250 = vector.broadcast %cst_119 : f32 to vector<16x32xf32>
    %251 = arith.mulf %250, %249 : vector<16x32xf32>
    %252 = math.tanh %251 : vector<16x32xf32>
    %cst_120 = arith.constant 5.000000e-01 : f32
    %253 = vector.broadcast %cst_120 : f32 to vector<16x32xf32>
    %254 = arith.mulf %253, %252 : vector<16x32xf32>
    %cst_121 = arith.constant 5.000000e-01 : f32
    %255 = vector.broadcast %cst_121 : f32 to vector<16x32xf32>
    %256 = arith.addf %254, %255 : vector<16x32xf32>
    %257 = arith.mulf %246, %175 : vector<16x32xf32>
    %258 = arith.mulf %238, %248 : vector<16x32xf32>
    %259 = arith.addf %257, %258 : vector<16x32xf32>
    %260 = math.tanh %259 : vector<16x32xf32>
    %261 = arith.mulf %256, %260 : vector<16x32xf32>
    %262 = arith.index_cast %c2_i32 : i32 to index
    %c0_122 = arith.constant 0 : index
    %c0_123 = arith.constant 0 : index
    %263 = vector.load %arg7[%262, %c0_122, %c0_123] : memref<8x16x32xf32, #tpu.memory_space<vmem>>, vector<1x16x32xf32>
    %264 = vector.shape_cast %263 : vector<1x16x32xf32> to vector<16x32xf32>
    %265 = vector.shape_cast %230 : vector<16x32xf32> to vector<1x16x32xf32>
    tpu.vector_store %arg7[%262, %c0_122, %c0_123], %265 {strides = array<i32>} : memref<8x16x32xf32, #tpu.memory_space<vmem>>, vector<1x16x32xf32>,
    %c7_i32_124 = arith.constant 7 : i32
    %266 = arith.subi %c7_i32_124, %c2_i32 : i32
    %267 = arith.index_cast %266 : i32 to index
    %c0_125 = arith.constant 0 : index
    %c0_126 = arith.constant 0 : index
    %268 = vector.load %arg8[%267, %c0_125, %c0_126] : memref<8x16x32xf32, #tpu.memory_space<vmem>>, vector<1x16x32xf32>
    %269 = vector.shape_cast %268 : vector<1x16x32xf32> to vector<16x32xf32>
    %270 = vector.shape_cast %261 : vector<16x32xf32> to vector<1x16x32xf32>
    tpu.vector_store %arg8[%267, %c0_125, %c0_126], %270 {strides = array<i32>} : memref<8x16x32xf32, #tpu.memory_space<vmem>>, vector<1x16x32xf32>,
    %c3_i32 = arith.constant 3 : i32
    %271 = arith.index_cast %c3_i32 : i32 to index
    %c0_127 = arith.constant 0 : index
    %c0_128 = arith.constant 0 : index
    %272 = vector.load %arg9[%271, %c0_127, %c0_128] : memref<8x16x128xf32, #tpu.memory_space<vmem>>, vector<1x16x128xf32>
    %273 = vector.shape_cast %272 : vector<1x16x128xf32> to vector<16x128xf32>
    %c0_129 = arith.constant 0 : index
    %c0_130 = arith.constant 0 : index
    %274 = vector.load %arg5[%c0_129, %c0_130] : memref<32x128xf32, #tpu.memory_space<vmem>>, vector<32x128xf32>
    %cst_131 = arith.constant dense<0.000000e+00> : vector<16x128xf32>
    %275 = tpu.matmul %230, %274, %cst_131 {dimension_numbers = #tpu.dot_dimension_numbers<[1], [0], [0], [1], [0, 0, 1, 1], [], []>} : vector<16x32xf32>, vector<32x128xf32>, vector<16x128xf32> -> vector<16x128xf32>
    %276 = arith.addf %273, %275 : vector<16x128xf32>
    %c7_i32_132 = arith.constant 7 : i32
    %277 = arith.subi %c7_i32_132, %c3_i32 : i32
    %278 = arith.index_cast %277 : i32 to index
    %c0_133 = arith.constant 0 : index
    %c0_134 = arith.constant 0 : index
    %279 = vector.load %arg10[%278, %c0_133, %c0_134] : memref<8x16x128xf32, #tpu.memory_space<vmem>>, vector<1x16x128xf32>
    %280 = vector.shape_cast %279 : vector<1x16x128xf32> to vector<16x128xf32>
    %c0_135 = arith.constant 0 : index
    %c0_136 = arith.constant 0 : index
    %281 = vector.load %arg6[%c0_135, %c0_136] : memref<32x128xf32, #tpu.memory_space<vmem>>, vector<32x128xf32>
    %cst_137 = arith.constant dense<0.000000e+00> : vector<16x128xf32>
    %282 = tpu.matmul %261, %281, %cst_137 {dimension_numbers = #tpu.dot_dimension_numbers<[1], [0], [0], [1], [0, 0, 1, 1], [], []>} : vector<16x32xf32>, vector<32x128xf32>, vector<16x128xf32> -> vector<16x128xf32>
    %283 = arith.addf %280, %282 : vector<16x128xf32>
    %284 = vector.extract_strided_slice %276 {offsets = [0, 0], sizes = [16, 32], strides = [1, 1]} : vector<16x128xf32> to vector<16x32xf32>
    %cst_138 = arith.constant 5.000000e-01 : f32
    %285 = vector.broadcast %cst_138 : f32 to vector<16x32xf32>
    %286 = arith.mulf %285, %284 : vector<16x32xf32>
    %287 = math.tanh %286 : vector<16x32xf32>
    %cst_139 = arith.constant 5.000000e-01 : f32
    %288 = vector.broadcast %cst_139 : f32 to vector<16x32xf32>
    %289 = arith.mulf %288, %287 : vector<16x32xf32>
    %cst_140 = arith.constant 5.000000e-01 : f32
    %290 = vector.broadcast %cst_140 : f32 to vector<16x32xf32>
    %291 = arith.addf %289, %290 : vector<16x32xf32>
    %292 = vector.extract_strided_slice %276 {offsets = [0, 32], sizes = [16, 32], strides = [1, 1]} : vector<16x128xf32> to vector<16x32xf32>
    %cst_141 = arith.constant 5.000000e-01 : f32
    %293 = vector.broadcast %cst_141 : f32 to vector<16x32xf32>
    %294 = arith.mulf %293, %292 : vector<16x32xf32>
    %295 = math.tanh %294 : vector<16x32xf32>
    %cst_142 = arith.constant 5.000000e-01 : f32
    %296 = vector.broadcast %cst_142 : f32 to vector<16x32xf32>
    %297 = arith.mulf %296, %295 : vector<16x32xf32>
    %cst_143 = arith.constant 5.000000e-01 : f32
    %298 = vector.broadcast %cst_143 : f32 to vector<16x32xf32>
    %299 = arith.addf %297, %298 : vector<16x32xf32>
    %300 = vector.extract_strided_slice %276 {offsets = [0, 64], sizes = [16, 32], strides = [1, 1]} : vector<16x128xf32> to vector<16x32xf32>
    %301 = math.tanh %300 : vector<16x32xf32>
    %302 = vector.extract_strided_slice %276 {offsets = [0, 96], sizes = [16, 32], strides = [1, 1]} : vector<16x128xf32> to vector<16x32xf32>
    %cst_144 = arith.constant 5.000000e-01 : f32
    %303 = vector.broadcast %cst_144 : f32 to vector<16x32xf32>
    %304 = arith.mulf %303, %302 : vector<16x32xf32>
    %305 = math.tanh %304 : vector<16x32xf32>
    %cst_145 = arith.constant 5.000000e-01 : f32
    %306 = vector.broadcast %cst_145 : f32 to vector<16x32xf32>
    %307 = arith.mulf %306, %305 : vector<16x32xf32>
    %cst_146 = arith.constant 5.000000e-01 : f32
    %308 = vector.broadcast %cst_146 : f32 to vector<16x32xf32>
    %309 = arith.addf %307, %308 : vector<16x32xf32>
    %310 = arith.mulf %299, %228 : vector<16x32xf32>
    %311 = arith.mulf %291, %301 : vector<16x32xf32>
    %312 = arith.addf %310, %311 : vector<16x32xf32>
    %313 = math.tanh %312 : vector<16x32xf32>
    %314 = arith.mulf %309, %313 : vector<16x32xf32>
    %315 = vector.extract_strided_slice %283 {offsets = [0, 0], sizes = [16, 32], strides = [1, 1]} : vector<16x128xf32> to vector<16x32xf32>
    %cst_147 = arith.constant 5.000000e-01 : f32
    %316 = vector.broadcast %cst_147 : f32 to vector<16x32xf32>
    %317 = arith.mulf %316, %315 : vector<16x32xf32>
    %318 = math.tanh %317 : vector<16x32xf32>
    %cst_148 = arith.constant 5.000000e-01 : f32
    %319 = vector.broadcast %cst_148 : f32 to vector<16x32xf32>
    %320 = arith.mulf %319, %318 : vector<16x32xf32>
    %cst_149 = arith.constant 5.000000e-01 : f32
    %321 = vector.broadcast %cst_149 : f32 to vector<16x32xf32>
    %322 = arith.addf %320, %321 : vector<16x32xf32>
    %323 = vector.extract_strided_slice %283 {offsets = [0, 32], sizes = [16, 32], strides = [1, 1]} : vector<16x128xf32> to vector<16x32xf32>
    %cst_150 = arith.constant 5.000000e-01 : f32
    %324 = vector.broadcast %cst_150 : f32 to vector<16x32xf32>
    %325 = arith.mulf %324, %323 : vector<16x32xf32>
    %326 = math.tanh %325 : vector<16x32xf32>
    %cst_151 = arith.constant 5.000000e-01 : f32
    %327 = vector.broadcast %cst_151 : f32 to vector<16x32xf32>
    %328 = arith.mulf %327, %326 : vector<16x32xf32>
    %cst_152 = arith.constant 5.000000e-01 : f32
    %329 = vector.broadcast %cst_152 : f32 to vector<16x32xf32>
    %330 = arith.addf %328, %329 : vector<16x32xf32>
    %331 = vector.extract_strided_slice %283 {offsets = [0, 64], sizes = [16, 32], strides = [1, 1]} : vector<16x128xf32> to vector<16x32xf32>
    %332 = math.tanh %331 : vector<16x32xf32>
    %333 = vector.extract_strided_slice %283 {offsets = [0, 96], sizes = [16, 32], strides = [1, 1]} : vector<16x128xf32> to vector<16x32xf32>
    %cst_153 = arith.constant 5.000000e-01 : f32
    %334 = vector.broadcast %cst_153 : f32 to vector<16x32xf32>
    %335 = arith.mulf %334, %333 : vector<16x32xf32>
    %336 = math.tanh %335 : vector<16x32xf32>
    %cst_154 = arith.constant 5.000000e-01 : f32
    %337 = vector.broadcast %cst_154 : f32 to vector<16x32xf32>
    %338 = arith.mulf %337, %336 : vector<16x32xf32>
    %cst_155 = arith.constant 5.000000e-01 : f32
    %339 = vector.broadcast %cst_155 : f32 to vector<16x32xf32>
    %340 = arith.addf %338, %339 : vector<16x32xf32>
    %341 = arith.mulf %330, %259 : vector<16x32xf32>
    %342 = arith.mulf %322, %332 : vector<16x32xf32>
    %343 = arith.addf %341, %342 : vector<16x32xf32>
    %344 = math.tanh %343 : vector<16x32xf32>
    %345 = arith.mulf %340, %344 : vector<16x32xf32>
    %346 = arith.index_cast %c3_i32 : i32 to index
    %c0_156 = arith.constant 0 : index
    %c0_157 = arith.constant 0 : index
    %347 = vector.load %arg7[%346, %c0_156, %c0_157] : memref<8x16x32xf32, #tpu.memory_space<vmem>>, vector<1x16x32xf32>
    %348 = vector.shape_cast %347 : vector<1x16x32xf32> to vector<16x32xf32>
    %349 = vector.shape_cast %314 : vector<16x32xf32> to vector<1x16x32xf32>
    tpu.vector_store %arg7[%346, %c0_156, %c0_157], %349 {strides = array<i32>} : memref<8x16x32xf32, #tpu.memory_space<vmem>>, vector<1x16x32xf32>,
    %c7_i32_158 = arith.constant 7 : i32
    %350 = arith.subi %c7_i32_158, %c3_i32 : i32
    %351 = arith.index_cast %350 : i32 to index
    %c0_159 = arith.constant 0 : index
    %c0_160 = arith.constant 0 : index
    %352 = vector.load %arg8[%351, %c0_159, %c0_160] : memref<8x16x32xf32, #tpu.memory_space<vmem>>, vector<1x16x32xf32>
    %353 = vector.shape_cast %352 : vector<1x16x32xf32> to vector<16x32xf32>
    %354 = vector.shape_cast %345 : vector<16x32xf32> to vector<1x16x32xf32>
    tpu.vector_store %arg8[%351, %c0_159, %c0_160], %354 {strides = array<i32>} : memref<8x16x32xf32, #tpu.memory_space<vmem>>, vector<1x16x32xf32>,
    %c4_i32 = arith.constant 4 : i32
    %355 = arith.index_cast %c4_i32 : i32 to index
    %c0_161 = arith.constant 0 : index
    %c0_162 = arith.constant 0 : index
    %356 = vector.load %arg9[%355, %c0_161, %c0_162] : memref<8x16x128xf32, #tpu.memory_space<vmem>>, vector<1x16x128xf32>
    %357 = vector.shape_cast %356 : vector<1x16x128xf32> to vector<16x128xf32>
    %c0_163 = arith.constant 0 : index
    %c0_164 = arith.constant 0 : index
    %358 = vector.load %arg5[%c0_163, %c0_164] : memref<32x128xf32, #tpu.memory_space<vmem>>, vector<32x128xf32>
    %cst_165 = arith.constant dense<0.000000e+00> : vector<16x128xf32>
    %359 = tpu.matmul %314, %358, %cst_165 {dimension_numbers = #tpu.dot_dimension_numbers<[1], [0], [0], [1], [0, 0, 1, 1], [], []>} : vector<16x32xf32>, vector<32x128xf32>, vector<16x128xf32> -> vector<16x128xf32>
    %360 = arith.addf %357, %359 : vector<16x128xf32>
    %c7_i32_166 = arith.constant 7 : i32
    %361 = arith.subi %c7_i32_166, %c4_i32 : i32
    %362 = arith.index_cast %361 : i32 to index
    %c0_167 = arith.constant 0 : index
    %c0_168 = arith.constant 0 : index
    %363 = vector.load %arg10[%362, %c0_167, %c0_168] : memref<8x16x128xf32, #tpu.memory_space<vmem>>, vector<1x16x128xf32>
    %364 = vector.shape_cast %363 : vector<1x16x128xf32> to vector<16x128xf32>
    %c0_169 = arith.constant 0 : index
    %c0_170 = arith.constant 0 : index
    %365 = vector.load %arg6[%c0_169, %c0_170] : memref<32x128xf32, #tpu.memory_space<vmem>>, vector<32x128xf32>
    %cst_171 = arith.constant dense<0.000000e+00> : vector<16x128xf32>
    %366 = tpu.matmul %345, %365, %cst_171 {dimension_numbers = #tpu.dot_dimension_numbers<[1], [0], [0], [1], [0, 0, 1, 1], [], []>} : vector<16x32xf32>, vector<32x128xf32>, vector<16x128xf32> -> vector<16x128xf32>
    %367 = arith.addf %364, %366 : vector<16x128xf32>
    %368 = vector.extract_strided_slice %360 {offsets = [0, 0], sizes = [16, 32], strides = [1, 1]} : vector<16x128xf32> to vector<16x32xf32>
    %cst_172 = arith.constant 5.000000e-01 : f32
    %369 = vector.broadcast %cst_172 : f32 to vector<16x32xf32>
    %370 = arith.mulf %369, %368 : vector<16x32xf32>
    %371 = math.tanh %370 : vector<16x32xf32>
    %cst_173 = arith.constant 5.000000e-01 : f32
    %372 = vector.broadcast %cst_173 : f32 to vector<16x32xf32>
    %373 = arith.mulf %372, %371 : vector<16x32xf32>
    %cst_174 = arith.constant 5.000000e-01 : f32
    %374 = vector.broadcast %cst_174 : f32 to vector<16x32xf32>
    %375 = arith.addf %373, %374 : vector<16x32xf32>
    %376 = vector.extract_strided_slice %360 {offsets = [0, 32], sizes = [16, 32], strides = [1, 1]} : vector<16x128xf32> to vector<16x32xf32>
    %cst_175 = arith.constant 5.000000e-01 : f32
    %377 = vector.broadcast %cst_175 : f32 to vector<16x32xf32>
    %378 = arith.mulf %377, %376 : vector<16x32xf32>
    %379 = math.tanh %378 : vector<16x32xf32>
    %cst_176 = arith.constant 5.000000e-01 : f32
    %380 = vector.broadcast %cst_176 : f32 to vector<16x32xf32>
    %381 = arith.mulf %380, %379 : vector<16x32xf32>
    %cst_177 = arith.constant 5.000000e-01 : f32
    %382 = vector.broadcast %cst_177 : f32 to vector<16x32xf32>
    %383 = arith.addf %381, %382 : vector<16x32xf32>
    %384 = vector.extract_strided_slice %360 {offsets = [0, 64], sizes = [16, 32], strides = [1, 1]} : vector<16x128xf32> to vector<16x32xf32>
    %385 = math.tanh %384 : vector<16x32xf32>
    %386 = vector.extract_strided_slice %360 {offsets = [0, 96], sizes = [16, 32], strides = [1, 1]} : vector<16x128xf32> to vector<16x32xf32>
    %cst_178 = arith.constant 5.000000e-01 : f32
    %387 = vector.broadcast %cst_178 : f32 to vector<16x32xf32>
    %388 = arith.mulf %387, %386 : vector<16x32xf32>
    %389 = math.tanh %388 : vector<16x32xf32>
    %cst_179 = arith.constant 5.000000e-01 : f32
    %390 = vector.broadcast %cst_179 : f32 to vector<16x32xf32>
    %391 = arith.mulf %390, %389 : vector<16x32xf32>
    %cst_180 = arith.constant 5.000000e-01 : f32
    %392 = vector.broadcast %cst_180 : f32 to vector<16x32xf32>
    %393 = arith.addf %391, %392 : vector<16x32xf32>
    %394 = arith.mulf %383, %312 : vector<16x32xf32>
    %395 = arith.mulf %375, %385 : vector<16x32xf32>
    %396 = arith.addf %394, %395 : vector<16x32xf32>
    %397 = math.tanh %396 : vector<16x32xf32>
    %398 = arith.mulf %393, %397 : vector<16x32xf32>
    %399 = vector.extract_strided_slice %367 {offsets = [0, 0], sizes = [16, 32], strides = [1, 1]} : vector<16x128xf32> to vector<16x32xf32>
    %cst_181 = arith.constant 5.000000e-01 : f32
    %400 = vector.broadcast %cst_181 : f32 to vector<16x32xf32>
    %401 = arith.mulf %400, %399 : vector<16x32xf32>
    %402 = math.tanh %401 : vector<16x32xf32>
    %cst_182 = arith.constant 5.000000e-01 : f32
    %403 = vector.broadcast %cst_182 : f32 to vector<16x32xf32>
    %404 = arith.mulf %403, %402 : vector<16x32xf32>
    %cst_183 = arith.constant 5.000000e-01 : f32
    %405 = vector.broadcast %cst_183 : f32 to vector<16x32xf32>
    %406 = arith.addf %404, %405 : vector<16x32xf32>
    %407 = vector.extract_strided_slice %367 {offsets = [0, 32], sizes = [16, 32], strides = [1, 1]} : vector<16x128xf32> to vector<16x32xf32>
    %cst_184 = arith.constant 5.000000e-01 : f32
    %408 = vector.broadcast %cst_184 : f32 to vector<16x32xf32>
    %409 = arith.mulf %408, %407 : vector<16x32xf32>
    %410 = math.tanh %409 : vector<16x32xf32>
    %cst_185 = arith.constant 5.000000e-01 : f32
    %411 = vector.broadcast %cst_185 : f32 to vector<16x32xf32>
    %412 = arith.mulf %411, %410 : vector<16x32xf32>
    %cst_186 = arith.constant 5.000000e-01 : f32
    %413 = vector.broadcast %cst_186 : f32 to vector<16x32xf32>
    %414 = arith.addf %412, %413 : vector<16x32xf32>
    %415 = vector.extract_strided_slice %367 {offsets = [0, 64], sizes = [16, 32], strides = [1, 1]} : vector<16x128xf32> to vector<16x32xf32>
    %416 = math.tanh %415 : vector<16x32xf32>
    %417 = vector.extract_strided_slice %367 {offsets = [0, 96], sizes = [16, 32], strides = [1, 1]} : vector<16x128xf32> to vector<16x32xf32>
    %cst_187 = arith.constant 5.000000e-01 : f32
    %418 = vector.broadcast %cst_187 : f32 to vector<16x32xf32>
    %419 = arith.mulf %418, %417 : vector<16x32xf32>
    %420 = math.tanh %419 : vector<16x32xf32>
    %cst_188 = arith.constant 5.000000e-01 : f32
    %421 = vector.broadcast %cst_188 : f32 to vector<16x32xf32>
    %422 = arith.mulf %421, %420 : vector<16x32xf32>
    %cst_189 = arith.constant 5.000000e-01 : f32
    %423 = vector.broadcast %cst_189 : f32 to vector<16x32xf32>
    %424 = arith.addf %422, %423 : vector<16x32xf32>
    %425 = arith.mulf %414, %343 : vector<16x32xf32>
    %426 = arith.mulf %406, %416 : vector<16x32xf32>
    %427 = arith.addf %425, %426 : vector<16x32xf32>
    %428 = math.tanh %427 : vector<16x32xf32>
    %429 = arith.mulf %424, %428 : vector<16x32xf32>
    %430 = arith.index_cast %c4_i32 : i32 to index
    %c0_190 = arith.constant 0 : index
    %c0_191 = arith.constant 0 : index
    %431 = vector.load %arg7[%430, %c0_190, %c0_191] : memref<8x16x32xf32, #tpu.memory_space<vmem>>, vector<1x16x32xf32>
    %432 = vector.shape_cast %431 : vector<1x16x32xf32> to vector<16x32xf32>
    %433 = vector.shape_cast %398 : vector<16x32xf32> to vector<1x16x32xf32>
    tpu.vector_store %arg7[%430, %c0_190, %c0_191], %433 {strides = array<i32>} : memref<8x16x32xf32, #tpu.memory_space<vmem>>, vector<1x16x32xf32>,
    %c7_i32_192 = arith.constant 7 : i32
    %434 = arith.subi %c7_i32_192, %c4_i32 : i32
    %435 = arith.index_cast %434 : i32 to index
    %c0_193 = arith.constant 0 : index
    %c0_194 = arith.constant 0 : index
    %436 = vector.load %arg8[%435, %c0_193, %c0_194] : memref<8x16x32xf32, #tpu.memory_space<vmem>>, vector<1x16x32xf32>
    %437 = vector.shape_cast %436 : vector<1x16x32xf32> to vector<16x32xf32>
    %438 = vector.shape_cast %429 : vector<16x32xf32> to vector<1x16x32xf32>
    tpu.vector_store %arg8[%435, %c0_193, %c0_194], %438 {strides = array<i32>} : memref<8x16x32xf32, #tpu.memory_space<vmem>>, vector<1x16x32xf32>,
    %c5_i32 = arith.constant 5 : i32
    %439 = arith.index_cast %c5_i32 : i32 to index
    %c0_195 = arith.constant 0 : index
    %c0_196 = arith.constant 0 : index
    %440 = vector.load %arg9[%439, %c0_195, %c0_196] : memref<8x16x128xf32, #tpu.memory_space<vmem>>, vector<1x16x128xf32>
    %441 = vector.shape_cast %440 : vector<1x16x128xf32> to vector<16x128xf32>
    %c0_197 = arith.constant 0 : index
    %c0_198 = arith.constant 0 : index
    %442 = vector.load %arg5[%c0_197, %c0_198] : memref<32x128xf32, #tpu.memory_space<vmem>>, vector<32x128xf32>
    %cst_199 = arith.constant dense<0.000000e+00> : vector<16x128xf32>
    %443 = tpu.matmul %398, %442, %cst_199 {dimension_numbers = #tpu.dot_dimension_numbers<[1], [0], [0], [1], [0, 0, 1, 1], [], []>} : vector<16x32xf32>, vector<32x128xf32>, vector<16x128xf32> -> vector<16x128xf32>
    %444 = arith.addf %441, %443 : vector<16x128xf32>
    %c7_i32_200 = arith.constant 7 : i32
    %445 = arith.subi %c7_i32_200, %c5_i32 : i32
    %446 = arith.index_cast %445 : i32 to index
    %c0_201 = arith.constant 0 : index
    %c0_202 = arith.constant 0 : index
    %447 = vector.load %arg10[%446, %c0_201, %c0_202] : memref<8x16x128xf32, #tpu.memory_space<vmem>>, vector<1x16x128xf32>
    %448 = vector.shape_cast %447 : vector<1x16x128xf32> to vector<16x128xf32>
    %c0_203 = arith.constant 0 : index
    %c0_204 = arith.constant 0 : index
    %449 = vector.load %arg6[%c0_203, %c0_204] : memref<32x128xf32, #tpu.memory_space<vmem>>, vector<32x128xf32>
    %cst_205 = arith.constant dense<0.000000e+00> : vector<16x128xf32>
    %450 = tpu.matmul %429, %449, %cst_205 {dimension_numbers = #tpu.dot_dimension_numbers<[1], [0], [0], [1], [0, 0, 1, 1], [], []>} : vector<16x32xf32>, vector<32x128xf32>, vector<16x128xf32> -> vector<16x128xf32>
    %451 = arith.addf %448, %450 : vector<16x128xf32>
    %452 = vector.extract_strided_slice %444 {offsets = [0, 0], sizes = [16, 32], strides = [1, 1]} : vector<16x128xf32> to vector<16x32xf32>
    %cst_206 = arith.constant 5.000000e-01 : f32
    %453 = vector.broadcast %cst_206 : f32 to vector<16x32xf32>
    %454 = arith.mulf %453, %452 : vector<16x32xf32>
    %455 = math.tanh %454 : vector<16x32xf32>
    %cst_207 = arith.constant 5.000000e-01 : f32
    %456 = vector.broadcast %cst_207 : f32 to vector<16x32xf32>
    %457 = arith.mulf %456, %455 : vector<16x32xf32>
    %cst_208 = arith.constant 5.000000e-01 : f32
    %458 = vector.broadcast %cst_208 : f32 to vector<16x32xf32>
    %459 = arith.addf %457, %458 : vector<16x32xf32>
    %460 = vector.extract_strided_slice %444 {offsets = [0, 32], sizes = [16, 32], strides = [1, 1]} : vector<16x128xf32> to vector<16x32xf32>
    %cst_209 = arith.constant 5.000000e-01 : f32
    %461 = vector.broadcast %cst_209 : f32 to vector<16x32xf32>
    %462 = arith.mulf %461, %460 : vector<16x32xf32>
    %463 = math.tanh %462 : vector<16x32xf32>
    %cst_210 = arith.constant 5.000000e-01 : f32
    %464 = vector.broadcast %cst_210 : f32 to vector<16x32xf32>
    %465 = arith.mulf %464, %463 : vector<16x32xf32>
    %cst_211 = arith.constant 5.000000e-01 : f32
    %466 = vector.broadcast %cst_211 : f32 to vector<16x32xf32>
    %467 = arith.addf %465, %466 : vector<16x32xf32>
    %468 = vector.extract_strided_slice %444 {offsets = [0, 64], sizes = [16, 32], strides = [1, 1]} : vector<16x128xf32> to vector<16x32xf32>
    %469 = math.tanh %468 : vector<16x32xf32>
    %470 = vector.extract_strided_slice %444 {offsets = [0, 96], sizes = [16, 32], strides = [1, 1]} : vector<16x128xf32> to vector<16x32xf32>
    %cst_212 = arith.constant 5.000000e-01 : f32
    %471 = vector.broadcast %cst_212 : f32 to vector<16x32xf32>
    %472 = arith.mulf %471, %470 : vector<16x32xf32>
    %473 = math.tanh %472 : vector<16x32xf32>
    %cst_213 = arith.constant 5.000000e-01 : f32
    %474 = vector.broadcast %cst_213 : f32 to vector<16x32xf32>
    %475 = arith.mulf %474, %473 : vector<16x32xf32>
    %cst_214 = arith.constant 5.000000e-01 : f32
    %476 = vector.broadcast %cst_214 : f32 to vector<16x32xf32>
    %477 = arith.addf %475, %476 : vector<16x32xf32>
    %478 = arith.mulf %467, %396 : vector<16x32xf32>
    %479 = arith.mulf %459, %469 : vector<16x32xf32>
    %480 = arith.addf %478, %479 : vector<16x32xf32>
    %481 = math.tanh %480 : vector<16x32xf32>
    %482 = arith.mulf %477, %481 : vector<16x32xf32>
    %483 = vector.extract_strided_slice %451 {offsets = [0, 0], sizes = [16, 32], strides = [1, 1]} : vector<16x128xf32> to vector<16x32xf32>
    %cst_215 = arith.constant 5.000000e-01 : f32
    %484 = vector.broadcast %cst_215 : f32 to vector<16x32xf32>
    %485 = arith.mulf %484, %483 : vector<16x32xf32>
    %486 = math.tanh %485 : vector<16x32xf32>
    %cst_216 = arith.constant 5.000000e-01 : f32
    %487 = vector.broadcast %cst_216 : f32 to vector<16x32xf32>
    %488 = arith.mulf %487, %486 : vector<16x32xf32>
    %cst_217 = arith.constant 5.000000e-01 : f32
    %489 = vector.broadcast %cst_217 : f32 to vector<16x32xf32>
    %490 = arith.addf %488, %489 : vector<16x32xf32>
    %491 = vector.extract_strided_slice %451 {offsets = [0, 32], sizes = [16, 32], strides = [1, 1]} : vector<16x128xf32> to vector<16x32xf32>
    %cst_218 = arith.constant 5.000000e-01 : f32
    %492 = vector.broadcast %cst_218 : f32 to vector<16x32xf32>
    %493 = arith.mulf %492, %491 : vector<16x32xf32>
    %494 = math.tanh %493 : vector<16x32xf32>
    %cst_219 = arith.constant 5.000000e-01 : f32
    %495 = vector.broadcast %cst_219 : f32 to vector<16x32xf32>
    %496 = arith.mulf %495, %494 : vector<16x32xf32>
    %cst_220 = arith.constant 5.000000e-01 : f32
    %497 = vector.broadcast %cst_220 : f32 to vector<16x32xf32>
    %498 = arith.addf %496, %497 : vector<16x32xf32>
    %499 = vector.extract_strided_slice %451 {offsets = [0, 64], sizes = [16, 32], strides = [1, 1]} : vector<16x128xf32> to vector<16x32xf32>
    %500 = math.tanh %499 : vector<16x32xf32>
    %501 = vector.extract_strided_slice %451 {offsets = [0, 96], sizes = [16, 32], strides = [1, 1]} : vector<16x128xf32> to vector<16x32xf32>
    %cst_221 = arith.constant 5.000000e-01 : f32
    %502 = vector.broadcast %cst_221 : f32 to vector<16x32xf32>
    %503 = arith.mulf %502, %501 : vector<16x32xf32>
    %504 = math.tanh %503 : vector<16x32xf32>
    %cst_222 = arith.constant 5.000000e-01 : f32
    %505 = vector.broadcast %cst_222 : f32 to vector<16x32xf32>
    %506 = arith.mulf %505, %504 : vector<16x32xf32>
    %cst_223 = arith.constant 5.000000e-01 : f32
    %507 = vector.broadcast %cst_223 : f32 to vector<16x32xf32>
    %508 = arith.addf %506, %507 : vector<16x32xf32>
    %509 = arith.mulf %498, %427 : vector<16x32xf32>
    %510 = arith.mulf %490, %500 : vector<16x32xf32>
    %511 = arith.addf %509, %510 : vector<16x32xf32>
    %512 = math.tanh %511 : vector<16x32xf32>
    %513 = arith.mulf %508, %512 : vector<16x32xf32>
    %514 = arith.index_cast %c5_i32 : i32 to index
    %c0_224 = arith.constant 0 : index
    %c0_225 = arith.constant 0 : index
    %515 = vector.load %arg7[%514, %c0_224, %c0_225] : memref<8x16x32xf32, #tpu.memory_space<vmem>>, vector<1x16x32xf32>
    %516 = vector.shape_cast %515 : vector<1x16x32xf32> to vector<16x32xf32>
    %517 = vector.shape_cast %482 : vector<16x32xf32> to vector<1x16x32xf32>
    tpu.vector_store %arg7[%514, %c0_224, %c0_225], %517 {strides = array<i32>} : memref<8x16x32xf32, #tpu.memory_space<vmem>>, vector<1x16x32xf32>,
    %c7_i32_226 = arith.constant 7 : i32
    %518 = arith.subi %c7_i32_226, %c5_i32 : i32
    %519 = arith.index_cast %518 : i32 to index
    %c0_227 = arith.constant 0 : index
    %c0_228 = arith.constant 0 : index
    %520 = vector.load %arg8[%519, %c0_227, %c0_228] : memref<8x16x32xf32, #tpu.memory_space<vmem>>, vector<1x16x32xf32>
    %521 = vector.shape_cast %520 : vector<1x16x32xf32> to vector<16x32xf32>
    %522 = vector.shape_cast %513 : vector<16x32xf32> to vector<1x16x32xf32>
    tpu.vector_store %arg8[%519, %c0_227, %c0_228], %522 {strides = array<i32>} : memref<8x16x32xf32, #tpu.memory_space<vmem>>, vector<1x16x32xf32>,
    %c6_i32 = arith.constant 6 : i32
    %523 = arith.index_cast %c6_i32 : i32 to index
    %c0_229 = arith.constant 0 : index
    %c0_230 = arith.constant 0 : index
    %524 = vector.load %arg9[%523, %c0_229, %c0_230] : memref<8x16x128xf32, #tpu.memory_space<vmem>>, vector<1x16x128xf32>
    %525 = vector.shape_cast %524 : vector<1x16x128xf32> to vector<16x128xf32>
    %c0_231 = arith.constant 0 : index
    %c0_232 = arith.constant 0 : index
    %526 = vector.load %arg5[%c0_231, %c0_232] : memref<32x128xf32, #tpu.memory_space<vmem>>, vector<32x128xf32>
    %cst_233 = arith.constant dense<0.000000e+00> : vector<16x128xf32>
    %527 = tpu.matmul %482, %526, %cst_233 {dimension_numbers = #tpu.dot_dimension_numbers<[1], [0], [0], [1], [0, 0, 1, 1], [], []>} : vector<16x32xf32>, vector<32x128xf32>, vector<16x128xf32> -> vector<16x128xf32>
    %528 = arith.addf %525, %527 : vector<16x128xf32>
    %c7_i32_234 = arith.constant 7 : i32
    %529 = arith.subi %c7_i32_234, %c6_i32 : i32
    %530 = arith.index_cast %529 : i32 to index
    %c0_235 = arith.constant 0 : index
    %c0_236 = arith.constant 0 : index
    %531 = vector.load %arg10[%530, %c0_235, %c0_236] : memref<8x16x128xf32, #tpu.memory_space<vmem>>, vector<1x16x128xf32>
    %532 = vector.shape_cast %531 : vector<1x16x128xf32> to vector<16x128xf32>
    %c0_237 = arith.constant 0 : index
    %c0_238 = arith.constant 0 : index
    %533 = vector.load %arg6[%c0_237, %c0_238] : memref<32x128xf32, #tpu.memory_space<vmem>>, vector<32x128xf32>
    %cst_239 = arith.constant dense<0.000000e+00> : vector<16x128xf32>
    %534 = tpu.matmul %513, %533, %cst_239 {dimension_numbers = #tpu.dot_dimension_numbers<[1], [0], [0], [1], [0, 0, 1, 1], [], []>} : vector<16x32xf32>, vector<32x128xf32>, vector<16x128xf32> -> vector<16x128xf32>
    %535 = arith.addf %532, %534 : vector<16x128xf32>
    %536 = vector.extract_strided_slice %528 {offsets = [0, 0], sizes = [16, 32], strides = [1, 1]} : vector<16x128xf32> to vector<16x32xf32>
    %cst_240 = arith.constant 5.000000e-01 : f32
    %537 = vector.broadcast %cst_240 : f32 to vector<16x32xf32>
    %538 = arith.mulf %537, %536 : vector<16x32xf32>
    %539 = math.tanh %538 : vector<16x32xf32>
    %cst_241 = arith.constant 5.000000e-01 : f32
    %540 = vector.broadcast %cst_241 : f32 to vector<16x32xf32>
    %541 = arith.mulf %540, %539 : vector<16x32xf32>
    %cst_242 = arith.constant 5.000000e-01 : f32
    %542 = vector.broadcast %cst_242 : f32 to vector<16x32xf32>
    %543 = arith.addf %541, %542 : vector<16x32xf32>
    %544 = vector.extract_strided_slice %528 {offsets = [0, 32], sizes = [16, 32], strides = [1, 1]} : vector<16x128xf32> to vector<16x32xf32>
    %cst_243 = arith.constant 5.000000e-01 : f32
    %545 = vector.broadcast %cst_243 : f32 to vector<16x32xf32>
    %546 = arith.mulf %545, %544 : vector<16x32xf32>
    %547 = math.tanh %546 : vector<16x32xf32>
    %cst_244 = arith.constant 5.000000e-01 : f32
    %548 = vector.broadcast %cst_244 : f32 to vector<16x32xf32>
    %549 = arith.mulf %548, %547 : vector<16x32xf32>
    %cst_245 = arith.constant 5.000000e-01 : f32
    %550 = vector.broadcast %cst_245 : f32 to vector<16x32xf32>
    %551 = arith.addf %549, %550 : vector<16x32xf32>
    %552 = vector.extract_strided_slice %528 {offsets = [0, 64], sizes = [16, 32], strides = [1, 1]} : vector<16x128xf32> to vector<16x32xf32>
    %553 = math.tanh %552 : vector<16x32xf32>
    %554 = vector.extract_strided_slice %528 {offsets = [0, 96], sizes = [16, 32], strides = [1, 1]} : vector<16x128xf32> to vector<16x32xf32>
    %cst_246 = arith.constant 5.000000e-01 : f32
    %555 = vector.broadcast %cst_246 : f32 to vector<16x32xf32>
    %556 = arith.mulf %555, %554 : vector<16x32xf32>
    %557 = math.tanh %556 : vector<16x32xf32>
    %cst_247 = arith.constant 5.000000e-01 : f32
    %558 = vector.broadcast %cst_247 : f32 to vector<16x32xf32>
    %559 = arith.mulf %558, %557 : vector<16x32xf32>
    %cst_248 = arith.constant 5.000000e-01 : f32
    %560 = vector.broadcast %cst_248 : f32 to vector<16x32xf32>
    %561 = arith.addf %559, %560 : vector<16x32xf32>
    %562 = arith.mulf %551, %480 : vector<16x32xf32>
    %563 = arith.mulf %543, %553 : vector<16x32xf32>
    %564 = arith.addf %562, %563 : vector<16x32xf32>
    %565 = math.tanh %564 : vector<16x32xf32>
    %566 = arith.mulf %561, %565 : vector<16x32xf32>
    %567 = vector.extract_strided_slice %535 {offsets = [0, 0], sizes = [16, 32], strides = [1, 1]} : vector<16x128xf32> to vector<16x32xf32>
    %cst_249 = arith.constant 5.000000e-01 : f32
    %568 = vector.broadcast %cst_249 : f32 to vector<16x32xf32>
    %569 = arith.mulf %568, %567 : vector<16x32xf32>
    %570 = math.tanh %569 : vector<16x32xf32>
    %cst_250 = arith.constant 5.000000e-01 : f32
    %571 = vector.broadcast %cst_250 : f32 to vector<16x32xf32>
    %572 = arith.mulf %571, %570 : vector<16x32xf32>
    %cst_251 = arith.constant 5.000000e-01 : f32
    %573 = vector.broadcast %cst_251 : f32 to vector<16x32xf32>
    %574 = arith.addf %572, %573 : vector<16x32xf32>
    %575 = vector.extract_strided_slice %535 {offsets = [0, 32], sizes = [16, 32], strides = [1, 1]} : vector<16x128xf32> to vector<16x32xf32>
    %cst_252 = arith.constant 5.000000e-01 : f32
    %576 = vector.broadcast %cst_252 : f32 to vector<16x32xf32>
    %577 = arith.mulf %576, %575 : vector<16x32xf32>
    %578 = math.tanh %577 : vector<16x32xf32>
    %cst_253 = arith.constant 5.000000e-01 : f32
    %579 = vector.broadcast %cst_253 : f32 to vector<16x32xf32>
    %580 = arith.mulf %579, %578 : vector<16x32xf32>
    %cst_254 = arith.constant 5.000000e-01 : f32
    %581 = vector.broadcast %cst_254 : f32 to vector<16x32xf32>
    %582 = arith.addf %580, %581 : vector<16x32xf32>
    %583 = vector.extract_strided_slice %535 {offsets = [0, 64], sizes = [16, 32], strides = [1, 1]} : vector<16x128xf32> to vector<16x32xf32>
    %584 = math.tanh %583 : vector<16x32xf32>
    %585 = vector.extract_strided_slice %535 {offsets = [0, 96], sizes = [16, 32], strides = [1, 1]} : vector<16x128xf32> to vector<16x32xf32>
    %cst_255 = arith.constant 5.000000e-01 : f32
    %586 = vector.broadcast %cst_255 : f32 to vector<16x32xf32>
    %587 = arith.mulf %586, %585 : vector<16x32xf32>
    %588 = math.tanh %587 : vector<16x32xf32>
    %cst_256 = arith.constant 5.000000e-01 : f32
    %589 = vector.broadcast %cst_256 : f32 to vector<16x32xf32>
    %590 = arith.mulf %589, %588 : vector<16x32xf32>
    %cst_257 = arith.constant 5.000000e-01 : f32
    %591 = vector.broadcast %cst_257 : f32 to vector<16x32xf32>
    %592 = arith.addf %590, %591 : vector<16x32xf32>
    %593 = arith.mulf %582, %511 : vector<16x32xf32>
    %594 = arith.mulf %574, %584 : vector<16x32xf32>
    %595 = arith.addf %593, %594 : vector<16x32xf32>
    %596 = math.tanh %595 : vector<16x32xf32>
    %597 = arith.mulf %592, %596 : vector<16x32xf32>
    %598 = arith.index_cast %c6_i32 : i32 to index
    %c0_258 = arith.constant 0 : index
    %c0_259 = arith.constant 0 : index
    %599 = vector.load %arg7[%598, %c0_258, %c0_259] : memref<8x16x32xf32, #tpu.memory_space<vmem>>, vector<1x16x32xf32>
    %600 = vector.shape_cast %599 : vector<1x16x32xf32> to vector<16x32xf32>
    %601 = vector.shape_cast %566 : vector<16x32xf32> to vector<1x16x32xf32>
    tpu.vector_store %arg7[%598, %c0_258, %c0_259], %601 {strides = array<i32>} : memref<8x16x32xf32, #tpu.memory_space<vmem>>, vector<1x16x32xf32>,
    %c7_i32_260 = arith.constant 7 : i32
    %602 = arith.subi %c7_i32_260, %c6_i32 : i32
    %603 = arith.index_cast %602 : i32 to index
    %c0_261 = arith.constant 0 : index
    %c0_262 = arith.constant 0 : index
    %604 = vector.load %arg8[%603, %c0_261, %c0_262] : memref<8x16x32xf32, #tpu.memory_space<vmem>>, vector<1x16x32xf32>
    %605 = vector.shape_cast %604 : vector<1x16x32xf32> to vector<16x32xf32>
    %606 = vector.shape_cast %597 : vector<16x32xf32> to vector<1x16x32xf32>
    tpu.vector_store %arg8[%603, %c0_261, %c0_262], %606 {strides = array<i32>} : memref<8x16x32xf32, #tpu.memory_space<vmem>>, vector<1x16x32xf32>,
    %c7_i32_263 = arith.constant 7 : i32
    %607 = arith.index_cast %c7_i32_263 : i32 to index
    %c0_264 = arith.constant 0 : index
    %c0_265 = arith.constant 0 : index
    %608 = vector.load %arg9[%607, %c0_264, %c0_265] : memref<8x16x128xf32, #tpu.memory_space<vmem>>, vector<1x16x128xf32>
    %609 = vector.shape_cast %608 : vector<1x16x128xf32> to vector<16x128xf32>
    %c0_266 = arith.constant 0 : index
    %c0_267 = arith.constant 0 : index
    %610 = vector.load %arg5[%c0_266, %c0_267] : memref<32x128xf32, #tpu.memory_space<vmem>>, vector<32x128xf32>
    %cst_268 = arith.constant dense<0.000000e+00> : vector<16x128xf32>
    %611 = tpu.matmul %566, %610, %cst_268 {dimension_numbers = #tpu.dot_dimension_numbers<[1], [0], [0], [1], [0, 0, 1, 1], [], []>} : vector<16x32xf32>, vector<32x128xf32>, vector<16x128xf32> -> vector<16x128xf32>
    %612 = arith.addf %609, %611 : vector<16x128xf32>
    %c7_i32_269 = arith.constant 7 : i32
    %613 = arith.subi %c7_i32_269, %c7_i32_263 : i32
    %614 = arith.index_cast %613 : i32 to index
    %c0_270 = arith.constant 0 : index
    %c0_271 = arith.constant 0 : index
    %615 = vector.load %arg10[%614, %c0_270, %c0_271] : memref<8x16x128xf32, #tpu.memory_space<vmem>>, vector<1x16x128xf32>
    %616 = vector.shape_cast %615 : vector<1x16x128xf32> to vector<16x128xf32>
    %c0_272 = arith.constant 0 : index
    %c0_273 = arith.constant 0 : index
    %617 = vector.load %arg6[%c0_272, %c0_273] : memref<32x128xf32, #tpu.memory_space<vmem>>, vector<32x128xf32>
    %cst_274 = arith.constant dense<0.000000e+00> : vector<16x128xf32>
    %618 = tpu.matmul %597, %617, %cst_274 {dimension_numbers = #tpu.dot_dimension_numbers<[1], [0], [0], [1], [0, 0, 1, 1], [], []>} : vector<16x32xf32>, vector<32x128xf32>, vector<16x128xf32> -> vector<16x128xf32>
    %619 = arith.addf %616, %618 : vector<16x128xf32>
    %620 = vector.extract_strided_slice %612 {offsets = [0, 0], sizes = [16, 32], strides = [1, 1]} : vector<16x128xf32> to vector<16x32xf32>
    %cst_275 = arith.constant 5.000000e-01 : f32
    %621 = vector.broadcast %cst_275 : f32 to vector<16x32xf32>
    %622 = arith.mulf %621, %620 : vector<16x32xf32>
    %623 = math.tanh %622 : vector<16x32xf32>
    %cst_276 = arith.constant 5.000000e-01 : f32
    %624 = vector.broadcast %cst_276 : f32 to vector<16x32xf32>
    %625 = arith.mulf %624, %623 : vector<16x32xf32>
    %cst_277 = arith.constant 5.000000e-01 : f32
    %626 = vector.broadcast %cst_277 : f32 to vector<16x32xf32>
    %627 = arith.addf %625, %626 : vector<16x32xf32>
    %628 = vector.extract_strided_slice %612 {offsets = [0, 32], sizes = [16, 32], strides = [1, 1]} : vector<16x128xf32> to vector<16x32xf32>
    %cst_278 = arith.constant 5.000000e-01 : f32
    %629 = vector.broadcast %cst_278 : f32 to vector<16x32xf32>
    %630 = arith.mulf %629, %628 : vector<16x32xf32>
    %631 = math.tanh %630 : vector<16x32xf32>
    %cst_279 = arith.constant 5.000000e-01 : f32
    %632 = vector.broadcast %cst_279 : f32 to vector<16x32xf32>
    %633 = arith.mulf %632, %631 : vector<16x32xf32>
    %cst_280 = arith.constant 5.000000e-01 : f32
    %634 = vector.broadcast %cst_280 : f32 to vector<16x32xf32>
    %635 = arith.addf %633, %634 : vector<16x32xf32>
    %636 = vector.extract_strided_slice %612 {offsets = [0, 64], sizes = [16, 32], strides = [1, 1]} : vector<16x128xf32> to vector<16x32xf32>
    %637 = math.tanh %636 : vector<16x32xf32>
    %638 = vector.extract_strided_slice %612 {offsets = [0, 96], sizes = [16, 32], strides = [1, 1]} : vector<16x128xf32> to vector<16x32xf32>
    %cst_281 = arith.constant 5.000000e-01 : f32
    %639 = vector.broadcast %cst_281 : f32 to vector<16x32xf32>
    %640 = arith.mulf %639, %638 : vector<16x32xf32>
    %641 = math.tanh %640 : vector<16x32xf32>
    %cst_282 = arith.constant 5.000000e-01 : f32
    %642 = vector.broadcast %cst_282 : f32 to vector<16x32xf32>
    %643 = arith.mulf %642, %641 : vector<16x32xf32>
    %cst_283 = arith.constant 5.000000e-01 : f32
    %644 = vector.broadcast %cst_283 : f32 to vector<16x32xf32>
    %645 = arith.addf %643, %644 : vector<16x32xf32>
    %646 = arith.mulf %635, %564 : vector<16x32xf32>
    %647 = arith.mulf %627, %637 : vector<16x32xf32>
    %648 = arith.addf %646, %647 : vector<16x32xf32>
    %649 = math.tanh %648 : vector<16x32xf32>
    %650 = arith.mulf %645, %649 : vector<16x32xf32>
    %651 = vector.extract_strided_slice %619 {offsets = [0, 0], sizes = [16, 32], strides = [1, 1]} : vector<16x128xf32> to vector<16x32xf32>
    %cst_284 = arith.constant 5.000000e-01 : f32
    %652 = vector.broadcast %cst_284 : f32 to vector<16x32xf32>
    %653 = arith.mulf %652, %651 : vector<16x32xf32>
    %654 = math.tanh %653 : vector<16x32xf32>
    %cst_285 = arith.constant 5.000000e-01 : f32
    %655 = vector.broadcast %cst_285 : f32 to vector<16x32xf32>
    %656 = arith.mulf %655, %654 : vector<16x32xf32>
    %cst_286 = arith.constant 5.000000e-01 : f32
    %657 = vector.broadcast %cst_286 : f32 to vector<16x32xf32>
    %658 = arith.addf %656, %657 : vector<16x32xf32>
    %659 = vector.extract_strided_slice %619 {offsets = [0, 32], sizes = [16, 32], strides = [1, 1]} : vector<16x128xf32> to vector<16x32xf32>
    %cst_287 = arith.constant 5.000000e-01 : f32
    %660 = vector.broadcast %cst_287 : f32 to vector<16x32xf32>
    %661 = arith.mulf %660, %659 : vector<16x32xf32>
    %662 = math.tanh %661 : vector<16x32xf32>
    %cst_288 = arith.constant 5.000000e-01 : f32
    %663 = vector.broadcast %cst_288 : f32 to vector<16x32xf32>
    %664 = arith.mulf %663, %662 : vector<16x32xf32>
    %cst_289 = arith.constant 5.000000e-01 : f32
    %665 = vector.broadcast %cst_289 : f32 to vector<16x32xf32>
    %666 = arith.addf %664, %665 : vector<16x32xf32>
    %667 = vector.extract_strided_slice %619 {offsets = [0, 64], sizes = [16, 32], strides = [1, 1]} : vector<16x128xf32> to vector<16x32xf32>
    %668 = math.tanh %667 : vector<16x32xf32>
    %669 = vector.extract_strided_slice %619 {offsets = [0, 96], sizes = [16, 32], strides = [1, 1]} : vector<16x128xf32> to vector<16x32xf32>
    %cst_290 = arith.constant 5.000000e-01 : f32
    %670 = vector.broadcast %cst_290 : f32 to vector<16x32xf32>
    %671 = arith.mulf %670, %669 : vector<16x32xf32>
    %672 = math.tanh %671 : vector<16x32xf32>
    %cst_291 = arith.constant 5.000000e-01 : f32
    %673 = vector.broadcast %cst_291 : f32 to vector<16x32xf32>
    %674 = arith.mulf %673, %672 : vector<16x32xf32>
    %cst_292 = arith.constant 5.000000e-01 : f32
    %675 = vector.broadcast %cst_292 : f32 to vector<16x32xf32>
    %676 = arith.addf %674, %675 : vector<16x32xf32>
    %677 = arith.mulf %666, %595 : vector<16x32xf32>
    %678 = arith.mulf %658, %668 : vector<16x32xf32>
    %679 = arith.addf %677, %678 : vector<16x32xf32>
    %680 = math.tanh %679 : vector<16x32xf32>
    %681 = arith.mulf %676, %680 : vector<16x32xf32>
    %682 = arith.index_cast %c7_i32_263 : i32 to index
    %c0_293 = arith.constant 0 : index
    %c0_294 = arith.constant 0 : index
    %683 = vector.load %arg7[%682, %c0_293, %c0_294] : memref<8x16x32xf32, #tpu.memory_space<vmem>>, vector<1x16x32xf32>
    %684 = vector.shape_cast %683 : vector<1x16x32xf32> to vector<16x32xf32>
    %685 = vector.shape_cast %650 : vector<16x32xf32> to vector<1x16x32xf32>
    tpu.vector_store %arg7[%682, %c0_293, %c0_294], %685 {strides = array<i32>} : memref<8x16x32xf32, #tpu.memory_space<vmem>>, vector<1x16x32xf32>,
    %c7_i32_295 = arith.constant 7 : i32
    %686 = arith.subi %c7_i32_295, %c7_i32_263 : i32
    %687 = arith.index_cast %686 : i32 to index
    %c0_296 = arith.constant 0 : index
    %c0_297 = arith.constant 0 : index
    %688 = vector.load %arg8[%687, %c0_296, %c0_297] : memref<8x16x32xf32, #tpu.memory_space<vmem>>, vector<1x16x32xf32>
    %689 = vector.shape_cast %688 : vector<1x16x32xf32> to vector<16x32xf32>
    %690 = vector.shape_cast %681 : vector<16x32xf32> to vector<1x16x32xf32>
    tpu.vector_store %arg8[%687, %c0_296, %c0_297], %690 {strides = array<i32>} : memref<8x16x32xf32, #tpu.memory_space<vmem>>, vector<1x16x32xf32>,
    %c8_i32 = arith.constant 8 : i32
    %c0_298 = arith.constant 0 : index
    %c0_299 = arith.constant 0 : index
    %691 = vector.load %arg11[%c0_298, %c0_299] : memref<16x32xf32, #tpu.memory_space<vmem>>, vector<16x32xf32>
    tpu.vector_store %arg11[%c0_298, %c0_299], %650 {strides = array<i32>} : memref<16x32xf32, #tpu.memory_space<vmem>>, vector<16x32xf32>,
    %c0_300 = arith.constant 0 : index
    %c0_301 = arith.constant 0 : index
    %692 = vector.load %arg12[%c0_300, %c0_301] : memref<16x32xf32, #tpu.memory_space<vmem>>, vector<16x32xf32>
    tpu.vector_store %arg12[%c0_300, %c0_301], %648 {strides = array<i32>} : memref<16x32xf32, #tpu.memory_space<vmem>>, vector<16x32xf32>,
    %c0_302 = arith.constant 0 : index
    %c0_303 = arith.constant 0 : index
    %693 = vector.load %arg13[%c0_302, %c0_303] : memref<16x32xf32, #tpu.memory_space<vmem>>, vector<16x32xf32>
    tpu.vector_store %arg13[%c0_302, %c0_303], %681 {strides = array<i32>} : memref<16x32xf32, #tpu.memory_space<vmem>>, vector<16x32xf32>,
    %c0_304 = arith.constant 0 : index
    %c0_305 = arith.constant 0 : index
    %694 = vector.load %arg14[%c0_304, %c0_305] : memref<16x32xf32, #tpu.memory_space<vmem>>, vector<16x32xf32>
    tpu.vector_store %arg14[%c0_304, %c0_305], %679 {strides = array<i32>} : memref<16x32xf32, #tpu.memory_space<vmem>>, vector<16x32xf32>,
    return
  }
  func.func @transform_0(%arg0: i32) -> (i32, i32, i32) {
    %c0_i32 = arith.constant 0 : i32
    %c0_i32_0 = arith.constant 0 : i32
    %c0_i32_1 = arith.constant 0 : i32
    return %arg0, %c0_i32, %c0_i32_0 : i32, i32, i32
  }
  func.func @transform_1(%arg0: i32) -> (i32, i32, i32) {
    %c0_i32 = arith.constant 0 : i32
    %0 = arith.subi %c0_i32, %arg0 : i32
    %c0_i32_0 = arith.constant 0 : i32
    %c0_i32_1 = arith.constant 0 : i32
    %c0_i32_2 = arith.constant 0 : i32
    return %0, %c0_i32_0, %c0_i32_1 : i32, i32, i32
  }
  func.func @transform_2(%arg0: i32) -> (i32, i32) {
    %c0_i32 = arith.constant 0 : i32
    %c0_i32_0 = arith.constant 0 : i32
    %c0_i32_1 = arith.constant 0 : i32
    return %c0_i32, %c0_i32_0 : i32, i32
  }
  func.func @transform_3(%arg0: i32) -> (i32, i32) {
    %c0_i32 = arith.constant 0 : i32
    %c0_i32_0 = arith.constant 0 : i32
    %c0_i32_1 = arith.constant 0 : i32
    return %c0_i32, %c0_i32_0 : i32, i32
  }
  func.func @transform_4(%arg0: i32) -> (i32, i32) {
    %c0_i32 = arith.constant 0 : i32
    %c0_i32_0 = arith.constant 0 : i32
    %c0_i32_1 = arith.constant 0 : i32
    return %c0_i32, %c0_i32_0 : i32, i32
  }
  func.func @transform_5(%arg0: i32) -> (i32, i32) {
    %c0_i32 = arith.constant 0 : i32
    %c0_i32_0 = arith.constant 0 : i32
    %c0_i32_1 = arith.constant 0 : i32
    return %c0_i32, %c0_i32_0 : i32, i32
  }
  func.func @transform_6(%arg0: i32) -> (i32, i32, i32) {
    %c0_i32 = arith.constant 0 : i32
    %c0_i32_0 = arith.constant 0 : i32
    %c0_i32_1 = arith.constant 0 : i32
    return %arg0, %c0_i32, %c0_i32_0 : i32, i32, i32
  }
  func.func @transform_7(%arg0: i32) -> (i32, i32, i32) {
    %c0_i32 = arith.constant 0 : i32
    %0 = arith.subi %c0_i32, %arg0 : i32
    %c0_i32_0 = arith.constant 0 : i32
    %c0_i32_1 = arith.constant 0 : i32
    %c0_i32_2 = arith.constant 0 : i32
    return %0, %c0_i32_0, %c0_i32_1 : i32, i32, i32
  }
}

</mosaic_0001>

<llo_original>
// kernel: tpu_custom_call.1
$region0: #{tpu_custom_call.1}
  #allocation0 [shape = 'u32[]', space=smem, size = 0x4, offset = 0x4, fixed_abs, tag = 'smem constant byte address 0x4 - core index']
  #allocation1 [shape = 'u32[144,128]{1,0:T(1,128)}', space=vmem, size = 0x12000, scoped, tag = 'internal scratch']
  #allocation2 [shape = 'f32[8,16,128]{2,1,0:T(8,128)}', space=vmem, size = 0x10000, scoped, tag = 'scratch operand']
  #allocation3 [shape = 'f32[8,16,128]{2,1,0:T(8,128)}', space=vmem, size = 0x10000, scoped, tag = 'scratch operand']
  #allocation4 [shape = 'f32[16,32]{1,0:T(8,128)}', space=vmem, size = 0x2000, scoped, tag = 'scratch operand']
  #allocation5 [shape = 'f32[16,32]{1,0:T(8,128)}', space=vmem, size = 0x2000, scoped, tag = 'scratch operand']
  #allocation6 [shape = 'f32[16,32]{1,0:T(8,128)}', space=vmem, size = 0x2000, scoped, tag = 'scratch operand']
  #allocation7 [shape = 'f32[16,32]{1,0:T(8,128)}', space=vmem, size = 0x2000, scoped, tag = 'scratch operand']
  %s0 = inlined_call_operand.hbm [shape: bf16[8,16,24], index: 0, kind: input, shape index: {}]
  %s1 = inlined_call_operand.hbm [shape: bf16[8,16,24], index: 1, kind: input, shape index: {}]
  %s2 = inlined_call_operand.hbm [shape: bf16[24,128], index: 2, kind: input, shape index: {}]
  %s3 = inlined_call_operand.hbm [shape: bf16[24,128], index: 3, kind: input, shape index: {}]
  %s4 = inlined_call_operand.hbm [shape: f32[32,128], index: 4, kind: input, shape index: {}]
  %s5 = inlined_call_operand.hbm [shape: f32[32,128], index: 5, kind: input, shape index: {}]
  %s6 = inlined_call_operand.hbm [shape: f32[8,16,32], index: 6, kind: output, shape index: {0}]
  %s7 = inlined_call_operand.hbm [shape: f32[8,16,32], index: 7, kind: output, shape index: {1}]
  %8 = xla_tuple %s6, %s7
  %s9 = sld [smem:[#allocation0]]
  $region70: #{tpu_custom_call.1} parent=0
    _
  %s11 = ssub.s32 1, %s9
  %s12 = scalar_select 0, %s11, %s9
  $region1: #{tpu_custom_call.1} parent=0
    #allocation8 [shape = 'u8[32768]{0}', space=vmem, size = 0x8000, scoped, tag = 'input window, operand 0, single buffered']
    #allocation9 [shape = 's32[1]{0}', space=sflag, size = 0x4, scoped, tag = 'scoped memory for tpu_custom_call.1']
    #allocation10 [shape = 's32[1]{0}', space=sflag, size = 0x4, scoped, tag = 'scoped memory for tpu_custom_call.1']
    #allocation11 [shape = 'u8[32768]{0}', space=vmem, size = 0x8000, scoped, tag = 'input window, operand 1, single buffered']
    #allocation12 [shape = 's32[1]{0}', space=sflag, size = 0x4, scoped, tag = 'scoped memory for tpu_custom_call.1']
    #allocation13 [shape = 'u8[6144]{0}', space=vmem, size = 0x1800, scoped, tag = 'input window, operand 2, single buffered']
    #allocation14 [shape = 'u8[6144]{0}', space=vmem, size = 0x1800, scoped, tag = 'input window, operand 3, single buffered']
    #allocation15 [shape = 's32[1]{0}', space=sflag, size = 0x4, scoped, tag = 'scoped memory for tpu_custom_call.1']
    #allocation16 [shape = 'u8[16384]{0}', space=vmem, size = 0x4000, scoped, tag = 'input window, operand 4, single buffered']
    #allocation17 [shape = 'u8[16384]{0}', space=vmem, size = 0x4000, scoped, tag = 'input window, operand 5, single buffered']
    #allocation18 [shape = 's32[1]{0}', space=sflag, size = 0x4, scoped, tag = 'scoped memory for tpu_custom_call.1']
    #allocation19 [shape = 'u8[65536]{0}', space=vmem, size = 0x10000, scoped, tag = 'output window, operand 0, single buffered']
    #allocation20 [shape = 'u8[65536]{0}', space=vmem, size = 0x10000, scoped, tag = 'output window, operand 1, single buffered']
    #allocation21 [shape = 's32[1]{0}', space=sflag, size = 0x4, scoped, tag = 'scoped memory for tpu_custom_call.1']
    %13 = vsyncpa [#allocation9], 0
    %14 = vsyncpa [#allocation12], 0
    %15 = vsyncpa [#allocation15], 0
    %16 = vsyncpa [#allocation18], 0
    %17 = vsyncpa [#allocation10], 0
    %18 = vsyncpa [#allocation21], 0
    // Predicated region
    $region2: #{tpu_custom_call.1} parent=1 // pred_check
      _
    $region3: #{tpu_custom_call.1} parent=1 // pred_check_branch
      %20 = sbr.rel (0) target = $region5
    $region4: #{tpu_custom_call.1} parent=1 // pred_region
      %s22 = ssub.s32 1024, 1024
      %23 = vsyncadd [#allocation9], %s22
      %s24 = sshll.u32 [#allocation8], 4
      %s25 = int_to_ptr.vmem [resolvable:$true] %s24
      %30 = dma.hbm_to_vmem [thread:$0]  %s0, 1024, %s25, [#allocation9], 64, 64, 4
    $region5: #{tpu_custom_call.1} parent=1 // pred_fallthru
      _
    // Predicated region
    $region6: #{tpu_custom_call.1} parent=1 // pred_check
      _
    $region7: #{tpu_custom_call.1} parent=1 // pred_check_branch
      %32 = sbr.rel (0) target = $region9
    $region8: #{tpu_custom_call.1} parent=1 // pred_region
      %s33 = ssub.s32 0, 0
      %s34 = smul.u32 8, %s33
      %s36 = ssub.s32 1024, 1024
      %37 = vsyncadd [#allocation12], %s36
      %s38 = smul.addr %s34, 2
      %s39 = smul.addr %s38, 64
      %s40 = scalar_lea.hbm %s1, %s39
      %s41 = sshll.u32 [#allocation11], 4
      %s42 = int_to_ptr.vmem [resolvable:$true] %s41
      %47 = dma.hbm_to_vmem [thread:$0]  %s40, 1024, %s42, [#allocation12], 64, 64, 4
    $region9: #{tpu_custom_call.1} parent=1 // pred_fallthru
      _
    // Predicated region
    $region10: #{tpu_custom_call.1} parent=1 // pred_check
      _
    $region11: #{tpu_custom_call.1} parent=1 // pred_check_branch
      %49 = sbr.rel (0) target = $region13
    $region12: #{tpu_custom_call.1} parent=1 // pred_region
      %s51 = ssub.s32 192, 192
      %52 = vsyncadd [#allocation12], %s51
      %s53 = sshll.u32 [#allocation13], 4
      %s54 = int_to_ptr.vmem [resolvable:$true] %s53
      %59 = dma.hbm_to_vmem [thread:$0]  %s2, 192, %s54, [#allocation12], 64, 64, 4
    $region13: #{tpu_custom_call.1} parent=1 // pred_fallthru
      _
    // Predicated region
    $region14: #{tpu_custom_call.1} parent=1 // pred_check
      _
    $region15: #{tpu_custom_call.1} parent=1 // pred_check_branch
      %61 = sbr.rel (0) target = $region17
    $region16: #{tpu_custom_call.1} parent=1 // pred_region
      %s63 = ssub.s32 192, 192
      %64 = vsyncadd [#allocation15], %s63
      %s65 = sshll.u32 [#allocation14], 4
      %s66 = int_to_ptr.vmem [resolvable:$true] %s65
      %71 = dma.hbm_to_vmem [thread:$0]  %s3, 192, %s66, [#allocation15], 64, 64, 4
    $region17: #{tpu_custom_call.1} parent=1 // pred_fallthru
      _
    // Predicated region
    $region18: #{tpu_custom_call.1} parent=1 // pred_check
      _
    $region19: #{tpu_custom_call.1} parent=1 // pred_check_branch
      %73 = sbr.rel (0) target = $region21
    $region20: #{tpu_custom_call.1} parent=1 // pred_region
      %s75 = ssub.s32 512, 512
      %76 = vsyncadd [#allocation15], %s75
      %s77 = sshll.u32 [#allocation16], 4
      %s78 = int_to_ptr.vmem [resolvable:$true] %s77
      %83 = dma.hbm_to_vmem [thread:$0]  %s4, 512, %s78, [#allocation15], 128, 128, 8
    $region21: #{tpu_custom_call.1} parent=1 // pred_fallthru
      _
    // Predicated region
    $region22: #{tpu_custom_call.1} parent=1 // pred_check
      _
    $region23: #{tpu_custom_call.1} parent=1 // pred_check_branch
      %85 = sbr.rel (0) target = $region25
    $region24: #{tpu_custom_call.1} parent=1 // pred_region
      %s87 = ssub.s32 512, 512
      %88 = vsyncadd [#allocation18], %s87
      %s89 = sshll.u32 [#allocation17], 4
      %s90 = int_to_ptr.vmem [resolvable:$true] %s89
      %95 = dma.hbm_to_vmem [thread:$0]  %s5, 512, %s90, [#allocation18], 128, 128, 8
    $region25: #{tpu_custom_call.1} parent=1 // pred_fallthru
      _
    // Predicated region
    $region26: #{tpu_custom_call.1} parent=1 // pred_check
      _
    $region27: #{tpu_custom_call.1} parent=1 // pred_check_branch
      %97 = sbr.rel (0) target = $region29
    $region28: #{tpu_custom_call.1} parent=1 // pred_region
      %98 = dma.done [#allocation9], 1024
    $region29: #{tpu_custom_call.1} parent=1 // pred_fallthru
      _
    // Predicated region
    $region30: #{tpu_custom_call.1} parent=1 // pred_check
      _
    $region31: #{tpu_custom_call.1} parent=1 // pred_check_branch
      %100 = sbr.rel (0) target = $region33
    $region32: #{tpu_custom_call.1} parent=1 // pred_region
      %101 = dma.done [#allocation12], 1024
    $region33: #{tpu_custom_call.1} parent=1 // pred_fallthru
      _
    // Predicated region
    $region34: #{tpu_custom_call.1} parent=1 // pred_check
      _
    $region35: #{tpu_custom_call.1} parent=1 // pred_check_branch
      %103 = sbr.rel (0) target = $region37
    $region36: #{tpu_custom_call.1} parent=1 // pred_region
      %104 = dma.done [#allocation12], 192
    $region37: #{tpu_custom_call.1} parent=1 // pred_fallthru
      _
    // Predicated region
    $region38: #{tpu_custom_call.1} parent=1 // pred_check
      _
    $region39: #{tpu_custom_call.1} parent=1 // pred_check_branch
      %106 = sbr.rel (0) target = $region41
    $region40: #{tpu_custom_call.1} parent=1 // pred_region
      %107 = dma.done [#allocation15], 192
    $region41: #{tpu_custom_call.1} parent=1 // pred_fallthru
      _
    // Predicated region
    $region42: #{tpu_custom_call.1} parent=1 // pred_check
      _
    $region43: #{tpu_custom_call.1} parent=1 // pred_check_branch
      %109 = sbr.rel (0) target = $region45
    $region44: #{tpu_custom_call.1} parent=1 // pred_region
      %110 = dma.done [#allocation15], 512
    $region45: #{tpu_custom_call.1} parent=1 // pred_fallthru
      _
    // Predicated region
    $region46: #{tpu_custom_call.1} parent=1 // pred_check
      _
    $region47: #{tpu_custom_call.1} parent=1 // pred_check_branch
      %112 = sbr.rel (0) target = $region49
    $region48: #{tpu_custom_call.1} parent=1 // pred_region
      %113 = dma.done [#allocation18], 512
    $region49: #{tpu_custom_call.1} parent=1 // pred_fallthru
      _
    %s114 = ssub.s32 0, 0
    %s115 = smul.u32 8, %s114
    %s116 = ssub.s32 0, 0
    %s117 = smul.u32 8, %s116
    %p119 = scmp.eq.s32.totalorder 0, 0
    // Predicated region
    $region50: #{tpu_custom_call.1} parent=1 // pred_check
      %p120 = pneg %p119
    $region51: #{tpu_custom_call.1} parent=1 // pred_check_branch
      %122 = sbr.rel (%p120) target = $region53
    $region52: #{tpu_custom_call.1} parent=1 // pred_region
      %vm123 = vcmask 261120
      %124 = vst.msk [vmem:[#allocation4] sm:$0xff] %vm123, 0.0
      %125 = vst.msk [vmem:[#allocation4 + $0x8] sm:$0xff] %vm123, 0.0
      %126 = vst.msk [vmem:[#allocation5] sm:$0xff] %vm123, 0.0
      %127 = vst.msk [vmem:[#allocation5 + $0x8] sm:$0xff] %vm123, 0.0
      %128 = vst.msk [vmem:[#allocation6] sm:$0xff] %vm123, 0.0
      %129 = vst.msk [vmem:[#allocation6 + $0x8] sm:$0xff] %vm123, 0.0
      %130 = vst.msk [vmem:[#allocation7] sm:$0xff] %vm123, 0.0
      %131 = vst.msk [vmem:[#allocation7 + $0x8] sm:$0xff] %vm123, 0.0
    $region53: #{tpu_custom_call.1} parent=1 // pred_fallthru
      _
    %v132 = vld [vmem:[#allocation8] sm:$0xf]
    %v133 = vld [vmem:[#allocation8 + $0x4] sm:$0xf]
    %v134 = vld [vmem:[#allocation8 + $0x8] sm:$0xf]
    %v135 = vld [vmem:[#allocation8 + $0xc] sm:$0xf]
    %v136 = vld [vmem:[#allocation8 + $0x10] sm:$0xf]
    %v137 = vld [vmem:[#allocation8 + $0x14] sm:$0xf]
    %v138 = vld [vmem:[#allocation8 + $0x18] sm:$0xf]
    %v139 = vld [vmem:[#allocation8 + $0x1c] sm:$0xf]
    %v140 = vld [vmem:[#allocation8 + $0x20] sm:$0xf]
    %v141 = vld [vmem:[#allocation8 + $0x24] sm:$0xf]
    %v142 = vld [vmem:[#allocation8 + $0x28] sm:$0xf]
    %v143 = vld [vmem:[#allocation8 + $0x2c] sm:$0xf]
    %v144 = vld [vmem:[#allocation8 + $0x30] sm:$0xf]
    %v145 = vld [vmem:[#allocation8 + $0x34] sm:$0xf]
    %v146 = vld [vmem:[#allocation8 + $0x38] sm:$0xf]
    %v147 = vld [vmem:[#allocation8 + $0x3c] sm:$0xf]
    %v148 = vld [vmem:[#allocation13] sm:$0xf]
    %v149 = vld [vmem:[#allocation13 + $0x4] sm:$0xf]
    %v150 = vld [vmem:[#allocation13 + $0x8] sm:$0xf]
    %v167 = vunpack.c.l.b16 %v132
    %v168 = vunpack.c.l.b16 %v133
    %v169 = vunpack.c.l.b16 %v134
    %v170 = vunpack.c.l.b16 %v135
    %v171 = vunpack.c.l.b16 %v136
    %v172 = vunpack.c.l.b16 %v137
    %v173 = vunpack.c.l.b16 %v138
    %v174 = vunpack.c.l.b16 %v139
    %v175 = vunpack.c.l.b16 %v140
    %v176 = vunpack.c.l.b16 %v141
    %v177 = vunpack.c.l.b16 %v142
    %v178 = vunpack.c.l.b16 %v143
    %v179 = vunpack.c.l.b16 %v144
    %v180 = vunpack.c.l.b16 %v145
    %v181 = vunpack.c.l.b16 %v146
    %v182 = vunpack.c.l.b16 %v147
    %v183 = vpack.c.b16 %v168, %v167
    %v184 = vpack.c.b16 %v170, %v169
    %v185 = vpack.c.b16 %v172, %v171
    %v186 = vpack.c.b16 %v174, %v173
    %v187 = vpack.c.b16 %v176, %v175
    %v188 = vpack.c.b16 %v178, %v177
    %v189 = vpack.c.b16 %v180, %v179
    %v190 = vpack.c.b16 %v182, %v181
    %v194 = vunpack.c.l.b16 %v148
    %v195 = vunpack.c.l.b16 %v149
    %v196 = vunpack.c.l.b16 %v150
    %v197 = vpack.c.b16 %v195, %v194
    %v198 = vpack.c.b16 %v196, %v196
    %vm200 = vcmask 195584
    %v202 = vsel %vm200, %v183, 0
    %v205 = vsel %vm200, %v184, 0
    %v208 = vsel %vm200, %v185, 0
    %v211 = vsel %vm200, %v186, 0
    %v214 = vsel %vm200, %v187, 0
    %v217 = vsel %vm200, %v188, 0
    %v220 = vsel %vm200, %v189, 0
    %v223 = vsel %vm200, %v190, 0
    %vm225 = vcmask 1043456
    %v227 = vsel %vm225, %v198, 0
    %229 = vmatprep.subr.bf16.mxu0 0
    %230 = vmatpush1.bf16.msra.mxu0 %v197
    %231 = vmatprep.subr.bf16.mxu0 0
    %232 = vmatpush1.bf16.msra.mxu0 %v227
    %233 = vmatprep.subr.bf16.mxu0 0
    %234 = vmatpush1.bf16.msra.mxu0 0
    %235 = vmatprep.subr.bf16.mxu0 0
    %236 = vmatpush1.bf16.msra.mxu0 0
    %237 = vmatprep.subr.bf16.mxu0 0
    %238 = vmatpush1.bf16.msra.mxu0 0
    %239 = vmatprep.subr.bf16.mxu0 0
    %240 = vmatpush1.bf16.msra.mxu0 0
    %241 = vmatprep.subr.bf16.mxu0 0
    %242 = vmatpush1.bf16.msra.mxu0 0
    %243 = vmatprep.subr.bf16.mxu0 0
    %244 = vmatpush1.bf16.msra.mxu0 0
    %245 = vmatprep.subr.bf16.mxu0 0
    %246 = vmatpush1.bf16.msra.mxu0 0
    %247 = vmatprep.subr.bf16.mxu0 0
    %248 = vmatpush1.bf16.msra.mxu0 0
    %249 = vmatprep.subr.bf16.mxu0 0
    %250 = vmatpush1.bf16.msra.mxu0 0
    %251 = vmatprep.subr.bf16.mxu0 0
    %252 = vmatpush1.bf16.msra.mxu0 0
    %253 = vmatprep.subr.bf16.mxu0 0
    %254 = vmatpush1.bf16.msra.mxu0 0
    %255 = vmatprep.subr.bf16.mxu0 0
    %256 = vmatpush1.bf16.msra.mxu0 0
    %257 = vmatprep.subr.bf16.mxu0 0
    %258 = vmatpush1.bf16.msra.mxu0 0
    %259 = vmatprep.subr.bf16.mxu0 0
    %260 = vmatpush1.bf16.msra.mxu0 0
    %261 = vmatprep.mubr.bf16.mxu0 0
    %262 = vmatmul.mubr.bf16.gmra.mrb[0].mxu0 %v202
    %v263 = vpop.f32.mrb[0].mxu0
    %v264 = vadd.f32 0.0, %v263
    %v265 = vpop.f32.mrb[0].mxu0
    %v266 = vpop.f32.mrb[0].mxu0
    %v267 = vadd.f32 0.0, %v266
    %v268 = vpop.f32.mrb[0].mxu0
    %269 = vmatprep.mubr.bf16.mxu0 0
    %270 = vmatmul.mubr.bf16.gmra.mrb[0].mxu0 %v205
    %v271 = vpop.f32.mrb[0].mxu0
    %v272 = vadd.f32 0.0, %v271
    %v273 = vpop.f32.mrb[0].mxu0
    %v274 = vpop.f32.mrb[0].mxu0
    %v275 = vadd.f32 0.0, %v274
    %v276 = vpop.f32.mrb[0].mxu0
    %277 = vmatprep.mubr.bf16.mxu0 0
    %278 = vmatmul.mubr.bf16.gmra.mrb[0].mxu0 %v208
    %v279 = vpop.f32.mrb[0].mxu0
    %v280 = vadd.f32 0.0, %v279
    %v281 = vpop.f32.mrb[0].mxu0
    %v282 = vpop.f32.mrb[0].mxu0
    %v283 = vadd.f32 0.0, %v282
    %v284 = vpop.f32.mrb[0].mxu0
    %285 = vmatprep.mubr.bf16.mxu0 0
    %286 = vmatmul.mubr.bf16.gmra.mrb[0].mxu0 %v211
    %v287 = vpop.f32.mrb[0].mxu0
    %v288 = vadd.f32 0.0, %v287
    %v289 = vpop.f32.mrb[0].mxu0
    %v290 = vpop.f32.mrb[0].mxu0
    %v291 = vadd.f32 0.0, %v290
    %v292 = vpop.f32.mrb[0].mxu0
    %293 = vmatprep.mubr.bf16.mxu0 0
    %294 = vmatmul.mubr.bf16.gmra.mrb[0].mxu0 %v214
    %v295 = vpop.f32.mrb[0].mxu0
    %v296 = vadd.f32 0.0, %v295
    %v297 = vpop.f32.mrb[0].mxu0
    %v298 = vpop.f32.mrb[0].mxu0
    %v299 = vadd.f32 0.0, %v298
    %v300 = vpop.f32.mrb[0].mxu0
    %301 = vmatprep.mubr.bf16.mxu0 0
    %302 = vmatmul.mubr.bf16.gmra.mrb[0].mxu0 %v217
    %v303 = vpop.f32.mrb[0].mxu0
    %v304 = vadd.f32 0.0, %v303
    %v305 = vpop.f32.mrb[0].mxu0
    %v306 = vpop.f32.mrb[0].mxu0
    %v307 = vadd.f32 0.0, %v306
    %v308 = vpop.f32.mrb[0].mxu0
    %309 = vmatprep.mubr.bf16.mxu0 0
    %310 = vmatmul.mubr.bf16.gmra.mrb[0].mxu0 %v220
    %v311 = vpop.f32.mrb[0].mxu0
    %v312 = vadd.f32 0.0, %v311
    %v313 = vpop.f32.mrb[0].mxu0
    %v314 = vpop.f32.mrb[0].mxu0
    %v315 = vadd.f32 0.0, %v314
    %v316 = vpop.f32.mrb[0].mxu0
    %317 = vmatprep.mubr.bf16.mxu0 0
    %318 = vmatmul.mubr.bf16.gmra.mrb[0].mxu0 %v223
    %v319 = vpop.f32.mrb[0].mxu0
    %v320 = vadd.f32 0.0, %v319
    %v321 = vpop.f32.mrb[0].mxu0
    %v322 = vpop.f32.mrb[0].mxu0
    %v323 = vadd.f32 0.0, %v322
    %v324 = vpop.f32.mrb[0].mxu0
    %325 = vdwg.mxu0
    %326 = vst [vmem:[#allocation2] sm:$0xff] %v264
    %327 = vst [vmem:[#allocation2 + $0x8] sm:$0xff] %v267
    %328 = vst [vmem:[#allocation2 + $0x10] sm:$0xff] %v272
    %329 = vst [vmem:[#allocation2 + $0x18] sm:$0xff] %v275
    %330 = vst [vmem:[#allocation2 + $0x20] sm:$0xff] %v280
    %331 = vst [vmem:[#allocation2 + $0x28] sm:$0xff] %v283
    %332 = vst [vmem:[#allocation2 + $0x30] sm:$0xff] %v288
    %333 = vst [vmem:[#allocation2 + $0x38] sm:$0xff] %v291
    %334 = vst [vmem:[#allocation2 + $0x40] sm:$0xff] %v296
    %335 = vst [vmem:[#allocation2 + $0x48] sm:$0xff] %v299
    %336 = vst [vmem:[#allocation2 + $0x50] sm:$0xff] %v304
    %337 = vst [vmem:[#allocation2 + $0x58] sm:$0xff] %v307
    %338 = vst [vmem:[#allocation2 + $0x60] sm:$0xff] %v312
    %339 = vst [vmem:[#allocation2 + $0x68] sm:$0xff] %v315
    %340 = vst [vmem:[#allocation2 + $0x70] sm:$0xff] %v320
    %341 = vst [vmem:[#allocation2 + $0x78] sm:$0xff] %v323
    %v342 = vld [vmem:[#allocation11] sm:$0xf]
    %v343 = vld [vmem:[#allocation11 + $0x4] sm:$0xf]
    %v344 = vld [vmem:[#allocation11 + $0x8] sm:$0xf]
    %v345 = vld [vmem:[#allocation11 + $0xc] sm:$0xf]
    %v346 = vld [vmem:[#allocation11 + $0x10] sm:$0xf]
    %v347 = vld [vmem:[#allocation11 + $0x14] sm:$0xf]
    %v348 = vld [vmem:[#allocation11 + $0x18] sm:$0xf]
    %v349 = vld [vmem:[#allocation11 + $0x1c] sm:$0xf]
    %v350 = vld [vmem:[#allocation11 + $0x20] sm:$0xf]
    %v351 = vld [vmem:[#allocation11 + $0x24] sm:$0xf]
    %v352 = vld [vmem:[#allocation11 + $0x28] sm:$0xf]
    %v353 = vld [vmem:[#allocation11 + $0x2c] sm:$0xf]
    %v354 = vld [vmem:[#allocation11 + $0x30] sm:$0xf]
    %v355 = vld [vmem:[#allocation11 + $0x34] sm:$0xf]
    %v356 = vld [vmem:[#allocation11 + $0x38] sm:$0xf]
    %v357 = vld [vmem:[#allocation11 + $0x3c] sm:$0xf]
    %v358 = vld [vmem:[#allocation14] sm:$0xf]
    %v359 = vld [vmem:[#allocation14 + $0x4] sm:$0xf]
    %v360 = vld [vmem:[#allocation14 + $0x8] sm:$0xf]
    %v377 = vunpack.c.l.b16 %v342
    %v378 = vunpack.c.l.b16 %v343
    %v379 = vunpack.c.l.b16 %v344
    %v380 = vunpack.c.l.b16 %v345
    %v381 = vunpack.c.l.b16 %v346
    %v382 = vunpack.c.l.b16 %v347
    %v383 = vunpack.c.l.b16 %v348
    %v384 = vunpack.c.l.b16 %v349
    %v385 = vunpack.c.l.b16 %v350
    %v386 = vunpack.c.l.b16 %v351
    %v387 = vunpack.c.l.b16 %v352
    %v388 = vunpack.c.l.b16 %v353
    %v389 = vunpack.c.l.b16 %v354
    %v390 = vunpack.c.l.b16 %v355
    %v391 = vunpack.c.l.b16 %v356
    %v392 = vunpack.c.l.b16 %v357
    %v393 = vpack.c.b16 %v378, %v377
    %v394 = vpack.c.b16 %v380, %v379
    %v395 = vpack.c.b16 %v382, %v381
    %v396 = vpack.c.b16 %v384, %v383
    %v397 = vpack.c.b16 %v386, %v385
    %v398 = vpack.c.b16 %v388, %v387
    %v399 = vpack.c.b16 %v390, %v389
    %v400 = vpack.c.b16 %v392, %v391
    %v404 = vunpack.c.l.b16 %v358
    %v405 = vunpack.c.l.b16 %v359
    %v406 = vunpack.c.l.b16 %v360
    %v407 = vpack.c.b16 %v405, %v404
    %v408 = vpack.c.b16 %v406, %v406
    %v411 = vsel %vm200, %v393, 0
    %v414 = vsel %vm200, %v394, 0
    %v417 = vsel %vm200, %v395, 0
    %v420 = vsel %vm200, %v396, 0
    %v423 = vsel %vm200, %v397, 0
    %v426 = vsel %vm200, %v398, 0
    %v429 = vsel %vm200, %v399, 0
    %v432 = vsel %vm200, %v400, 0
    %v435 = vsel %vm225, %v408, 0
    %437 = vmatprep.subr.bf16.mxu0 0
    %438 = vmatpush1.bf16.msra.mxu0 %v407
    %439 = vmatprep.subr.bf16.mxu0 0
    %440 = vmatpush1.bf16.msra.mxu0 %v435
    %441 = vmatprep.subr.bf16.mxu0 0
    %442 = vmatpush1.bf16.msra.mxu0 0
    %443 = vmatprep.subr.bf16.mxu0 0
    %444 = vmatpush1.bf16.msra.mxu0 0
    %445 = vmatprep.subr.bf16.mxu0 0
    %446 = vmatpush1.bf16.msra.mxu0 0
    %447 = vmatprep.subr.bf16.mxu0 0
    %448 = vmatpush1.bf16.msra.mxu0 0
    %449 = vmatprep.subr.bf16.mxu0 0
    %450 = vmatpush1.bf16.msra.mxu0 0
    %451 = vmatprep.subr.bf16.mxu0 0
    %452 = vmatpush1.bf16.msra.mxu0 0
    %453 = vmatprep.subr.bf16.mxu0 0
    %454 = vmatpush1.bf16.msra.mxu0 0
    %455 = vmatprep.subr.bf16.mxu0 0
    %456 = vmatpush1.bf16.msra.mxu0 0
    %457 = vmatprep.subr.bf16.mxu0 0
    %458 = vmatpush1.bf16.msra.mxu0 0
    %459 = vmatprep.subr.bf16.mxu0 0
    %460 = vmatpush1.bf16.msra.mxu0 0
    %461 = vmatprep.subr.bf16.mxu0 0
    %462 = vmatpush1.bf16.msra.mxu0 0
    %463 = vmatprep.subr.bf16.mxu0 0
    %464 = vmatpush1.bf16.msra.mxu0 0
    %465 = vmatprep.subr.bf16.mxu0 0
    %466 = vmatpush1.bf16.msra.mxu0 0
    %467 = vmatprep.subr.bf16.mxu0 0
    %468 = vmatpush1.bf16.msra.mxu0 0
    %469 = vmatprep.mubr.bf16.mxu0 0
    %470 = vmatmul.mubr.bf16.gmra.mrb[0].mxu0 %v411
    %v471 = vpop.f32.mrb[0].mxu0
    %v472 = vadd.f32 0.0, %v471
    %v473 = vpop.f32.mrb[0].mxu0
    %v474 = vpop.f32.mrb[0].mxu0
    %v475 = vadd.f32 0.0, %v474
    %v476 = vpop.f32.mrb[0].mxu0
    %477 = vmatprep.mubr.bf16.mxu0 0
    %478 = vmatmul.mubr.bf16.gmra.mrb[0].mxu0 %v414
    %v479 = vpop.f32.mrb[0].mxu0
    %v480 = vadd.f32 0.0, %v479
    %v481 = vpop.f32.mrb[0].mxu0
    %v482 = vpop.f32.mrb[0].mxu0
    %v483 = vadd.f32 0.0, %v482
    %v484 = vpop.f32.mrb[0].mxu0
    %485 = vmatprep.mubr.bf16.mxu0 0
    %486 = vmatmul.mubr.bf16.gmra.mrb[0].mxu0 %v417
    %v487 = vpop.f32.mrb[0].mxu0
    %v488 = vadd.f32 0.0, %v487
    %v489 = vpop.f32.mrb[0].mxu0
    %v490 = vpop.f32.mrb[0].mxu0
    %v491 = vadd.f32 0.0, %v490
    %v492 = vpop.f32.mrb[0].mxu0
    %493 = vmatprep.mubr.bf16.mxu0 0
    %494 = vmatmul.mubr.bf16.gmra.mrb[0].mxu0 %v420
    %v495 = vpop.f32.mrb[0].mxu0
    %v496 = vadd.f32 0.0, %v495
    %v497 = vpop.f32.mrb[0].mxu0
    %v498 = vpop.f32.mrb[0].mxu0
    %v499 = vadd.f32 0.0, %v498
    %v500 = vpop.f32.mrb[0].mxu0
    %501 = vmatprep.mubr.bf16.mxu0 0
    %502 = vmatmul.mubr.bf16.gmra.mrb[0].mxu0 %v423
    %v503 = vpop.f32.mrb[0].mxu0
    %v504 = vadd.f32 0.0, %v503
    %v505 = vpop.f32.mrb[0].mxu0
    %v506 = vpop.f32.mrb[0].mxu0
    %v507 = vadd.f32 0.0, %v506
    %v508 = vpop.f32.mrb[0].mxu0
    %509 = vmatprep.mubr.bf16.mxu0 0
    %510 = vmatmul.mubr.bf16.gmra.mrb[0].mxu0 %v426
    %v511 = vpop.f32.mrb[0].mxu0
    %v512 = vadd.f32 0.0, %v511
    %v513 = vpop.f32.mrb[0].mxu0
    %v514 = vpop.f32.mrb[0].mxu0
    %v515 = vadd.f32 0.0, %v514
    %v516 = vpop.f32.mrb[0].mxu0
    %517 = vmatprep.mubr.bf16.mxu0 0
    %518 = vmatmul.mubr.bf16.gmra.mrb[0].mxu0 %v429
    %v519 = vpop.f32.mrb[0].mxu0
    %v520 = vadd.f32 0.0, %v519
    %v521 = vpop.f32.mrb[0].mxu0
    %v522 = vpop.f32.mrb[0].mxu0
    %v523 = vadd.f32 0.0, %v522
    %v524 = vpop.f32.mrb[0].mxu0
    %525 = vmatprep.mubr.bf16.mxu0 0
    %526 = vmatmul.mubr.bf16.gmra.mrb[0].mxu0 %v432
    %v527 = vpop.f32.mrb[0].mxu0
    %v528 = vadd.f32 0.0, %v527
    %v529 = vpop.f32.mrb[0].mxu0
    %v530 = vpop.f32.mrb[0].mxu0
    %v531 = vadd.f32 0.0, %v530
    %v532 = vpop.f32.mrb[0].mxu0
    %533 = vdwg.mxu0
    %534 = vst [vmem:[#allocation3] sm:$0xff] %v472
    %535 = vst [vmem:[#allocation3 + $0x8] sm:$0xff] %v475
    %536 = vst [vmem:[#allocation3 + $0x10] sm:$0xff] %v480
    %537 = vst [vmem:[#allocation3 + $0x18] sm:$0xff] %v483
    %538 = vst [vmem:[#allocation3 + $0x20] sm:$0xff] %v488
    %539 = vst [vmem:[#allocation3 + $0x28] sm:$0xff] %v491
    %540 = vst [vmem:[#allocation3 + $0x30] sm:$0xff] %v496
    %541 = vst [vmem:[#allocation3 + $0x38] sm:$0xff] %v499
    %542 = vst [vmem:[#allocation3 + $0x40] sm:$0xff] %v504
    %543 = vst [vmem:[#allocation3 + $0x48] sm:$0xff] %v507
    %544 = vst [vmem:[#allocation3 + $0x50] sm:$0xff] %v512
    %545 = vst [vmem:[#allocation3 + $0x58] sm:$0xff] %v515
    %546 = vst [vmem:[#allocation3 + $0x60] sm:$0xff] %v520
    %547 = vst [vmem:[#allocation3 + $0x68] sm:$0xff] %v523
    %548 = vst [vmem:[#allocation3 + $0x70] sm:$0xff] %v528
    %549 = vst [vmem:[#allocation3 + $0x78] sm:$0xff] %v531
    %v550 = vld [vmem:[#allocation4] sm:$0xff]
    %v551 = vld [vmem:[#allocation4 + $0x8] sm:$0xff]
    %v552 = vld [vmem:[#allocation5] sm:$0xff]
    %v553 = vld [vmem:[#allocation5 + $0x8] sm:$0xff]
    %v554 = vld [vmem:[#allocation6] sm:$0xff]
    %v555 = vld [vmem:[#allocation6 + $0x8] sm:$0xff]
    %v556 = vld [vmem:[#allocation7] sm:$0xff]
    %v557 = vld [vmem:[#allocation7 + $0x8] sm:$0xff]
    %v558 = vld [vmem:[#allocation2] sm:$0xff]
    %v559 = vld [vmem:[#allocation2 + $0x8] sm:$0xff]
    %v560 = vld [vmem:[#allocation16] sm:$0xff]
    %v561 = vld [vmem:[#allocation16 + $0x8] sm:$0xff]
    %v562 = vld [vmem:[#allocation16 + $0x10] sm:$0xff]
    %v563 = vld [vmem:[#allocation16 + $0x18] sm:$0xff]
    %vm564 = vcmask 261120
    %v566 = vsel %vm564, %v550, 0
    %v569 = vsel %vm564, %v551, 0
    %571 = vmatprep.subr.mxu0 0.0
    %572 = vmatpush1.msra.mxu0 %v560
    %573 = vmatprep.subr.mxu0 0.0
    %574 = vmatpush1.msra.mxu0 %v561
    %575 = vmatprep.subr.mxu0 0.0
    %576 = vmatpush1.msra.mxu0 %v562
    %577 = vmatprep.subr.mxu0 0.0
    %578 = vmatpush1.msra.mxu0 %v563
    %579 = vmatprep.subr.mxu0 0.0
    %580 = vmatpush1.msra.mxu0 0.0
    %581 = vmatprep.subr.mxu0 0.0
    %582 = vmatpush1.msra.mxu0 0.0
    %583 = vmatprep.subr.mxu0 0.0
    %584 = vmatpush1.msra.mxu0 0.0
    %585 = vmatprep.subr.mxu0 0.0
    %586 = vmatpush1.msra.mxu0 0.0
    %587 = vmatprep.subr.mxu0 0.0
    %588 = vmatpush1.msra.mxu0 0.0
    %589 = vmatprep.subr.mxu0 0.0
    %590 = vmatpush1.msra.mxu0 0.0
    %591 = vmatprep.subr.mxu0 0.0
    %592 = vmatpush1.msra.mxu0 0.0
    %593 = vmatprep.subr.mxu0 0.0
    %594 = vmatpush1.msra.mxu0 0.0
    %595 = vmatprep.subr.mxu0 0.0
    %596 = vmatpush1.msra.mxu0 0.0
    %597 = vmatprep.subr.mxu0 0.0
    %598 = vmatpush1.msra.mxu0 0.0
    %599 = vmatprep.subr.mxu0 0.0
    %600 = vmatpush1.msra.mxu0 0.0
    %601 = vmatprep.subr.mxu0 0.0
    %602 = vmatpush1.msra.mxu0 0.0
    %603 = vmatprep.subr.mxu0 0.0
    %604 = vmatpush1.msra.mxu0 0.0
    %605 = vmatprep.subr.mxu0 0.0
    %606 = vmatpush1.msra.mxu0 0.0
    %607 = vmatprep.subr.mxu0 0.0
    %608 = vmatpush1.msra.mxu0 0.0
    %609 = vmatprep.subr.mxu0 0.0
    %610 = vmatpush1.msra.mxu0 0.0
    %611 = vmatprep.subr.mxu0 0.0
    %612 = vmatpush1.msra.mxu0 0.0
    %613 = vmatprep.subr.mxu0 0.0
    %614 = vmatpush1.msra.mxu0 0.0
    %615 = vmatprep.subr.mxu0 0.0
    %616 = vmatpush1.msra.mxu0 0.0
    %617 = vmatprep.subr.mxu0 0.0
    %618 = vmatpush1.msra.mxu0 0.0
    %619 = vmatprep.subr.mxu0 0.0
    %620 = vmatpush1.msra.mxu0 0.0
    %621 = vmatprep.subr.mxu0 0.0
    %622 = vmatpush1.msra.mxu0 0.0
    %623 = vmatprep.subr.mxu0 0.0
    %624 = vmatpush1.msra.mxu0 0.0
    %625 = vmatprep.subr.mxu0 0.0
    %626 = vmatpush1.msra.mxu0 0.0
    %627 = vmatprep.subr.mxu0 0.0
    %628 = vmatpush1.msra.mxu0 0.0
    %629 = vmatprep.subr.mxu0 0.0
    %630 = vmatpush1.msra.mxu0 0.0
    %631 = vmatprep.subr.mxu0 0.0
    %632 = vmatpush1.msra.mxu0 0.0
    %633 = vmatprep.subr.mxu0 0.0
    %634 = vmatpush1.msra.mxu0 0.0
    %635 = vmatprep.mubr.f32.mxu0 0.0
    %636 = vmatmul.mubr.f32.gmra.mrb[0].mxu0 %v566
    %v637 = vpop.f32.mrb[0].mxu0
    %v638 = vadd.f32 0.0, %v637
    %v639 = vpop.f32.mrb[0].mxu0
    %640 = vmatprep.mubr.f32.mxu0 0.0
    %641 = vmatmul.mubr.f32.gmra.mrb[0].mxu0 %v569
    %v642 = vpop.f32.mrb[0].mxu0
    %v643 = vadd.f32 0.0, %v642
    %v644 = vpop.f32.mrb[0].mxu0
    %645 = vdwg.mxu0
    %v646 = vadd.f32 %v558, %v638
    %v647 = vadd.f32 %v559, %v643
    %s648 = scalar_lea.vmem [#allocation3], 112
    %v649 = vld [vmem:[%s648] sm:$0xff]
    %v650 = vld [vmem:[%s648 + $0x8] sm:$0xff]
    %v651 = vld [vmem:[#allocation17] sm:$0xff]
    %v652 = vld [vmem:[#allocation17 + $0x8] sm:$0xff]
    %v653 = vld [vmem:[#allocation17 + $0x10] sm:$0xff]
    %v654 = vld [vmem:[#allocation17 + $0x18] sm:$0xff]
    %v656 = vsel %vm564, %v554, 0
    %v659 = vsel %vm564, %v555, 0
    %661 = vmatprep.subr.mxu0 0.0
    %662 = vmatpush1.msra.mxu0 %v651
    %663 = vmatprep.subr.mxu0 0.0
    %664 = vmatpush1.msra.mxu0 %v652
    %665 = vmatprep.subr.mxu0 0.0
    %666 = vmatpush1.msra.mxu0 %v653
    %667 = vmatprep.subr.mxu0 0.0
    %668 = vmatpush1.msra.mxu0 %v654
    %669 = vmatprep.subr.mxu0 0.0
    %670 = vmatpush1.msra.mxu0 0.0
    %671 = vmatprep.subr.mxu0 0.0
    %672 = vmatpush1.msra.mxu0 0.0
    %673 = vmatprep.subr.mxu0 0.0
    %674 = vmatpush1.msra.mxu0 0.0
    %675 = vmatprep.subr.mxu0 0.0
    %676 = vmatpush1.msra.mxu0 0.0
    %677 = vmatprep.subr.mxu0 0.0
    %678 = vmatpush1.msra.mxu0 0.0
    %679 = vmatprep.subr.mxu0 0.0
    %680 = vmatpush1.msra.mxu0 0.0
    %681 = vmatprep.subr.mxu0 0.0
    %682 = vmatpush1.msra.mxu0 0.0
    %683 = vmatprep.subr.mxu0 0.0
    %684 = vmatpush1.msra.mxu0 0.0
    %685 = vmatprep.subr.mxu0 0.0
    %686 = vmatpush1.msra.mxu0 0.0
    %687 = vmatprep.subr.mxu0 0.0
    %688 = vmatpush1.msra.mxu0 0.0
    %689 = vmatprep.subr.mxu0 0.0
    %690 = vmatpush1.msra.mxu0 0.0
    %691 = vmatprep.subr.mxu0 0.0
    %692 = vmatpush1.msra.mxu0 0.0
    %693 = vmatprep.subr.mxu0 0.0
    %694 = vmatpush1.msra.mxu0 0.0
    %695 = vmatprep.subr.mxu0 0.0
    %696 = vmatpush1.msra.mxu0 0.0
    %697 = vmatprep.subr.mxu0 0.0
    %698 = vmatpush1.msra.mxu0 0.0
    %699 = vmatprep.subr.mxu0 0.0
    %700 = vmatpush1.msra.mxu0 0.0
    %701 = vmatprep.subr.mxu0 0.0
    %702 = vmatpush1.msra.mxu0 0.0
    %703 = vmatprep.subr.mxu0 0.0
    %704 = vmatpush1.msra.mxu0 0.0
    %705 = vmatprep.subr.mxu0 0.0
    %706 = vmatpush1.msra.mxu0 0.0
    %707 = vmatprep.subr.mxu0 0.0
    %708 = vmatpush1.msra.mxu0 0.0
    %709 = vmatprep.subr.mxu0 0.0
    %710 = vmatpush1.msra.mxu0 0.0
    %711 = vmatprep.subr.mxu0 0.0
    %712 = vmatpush1.msra.mxu0 0.0
    %713 = vmatprep.subr.mxu0 0.0
    %714 = vmatpush1.msra.mxu0 0.0
    %715 = vmatprep.subr.mxu0 0.0
    %716 = vmatpush1.msra.mxu0 0.0
    %717 = vmatprep.subr.mxu0 0.0
    %718 = vmatpush1.msra.mxu0 0.0
    %719 = vmatprep.subr.mxu0 0.0
    %720 = vmatpush1.msra.mxu0 0.0
    %721 = vmatprep.subr.mxu0 0.0
    %722 = vmatpush1.msra.mxu0 0.0
    %723 = vmatprep.subr.mxu0 0.0
    %724 = vmatpush1.msra.mxu0 0.0
    %725 = vmatprep.mubr.f32.mxu0 0.0
    %726 = vmatmul.mubr.f32.gmra.mrb[0].mxu0 %v656
    %v727 = vpop.f32.mrb[0].mxu0
    %v728 = vadd.f32 0.0, %v727
    %v729 = vpop.f32.mrb[0].mxu0
    %730 = vmatprep.mubr.f32.mxu0 0.0
    %731 = vmatmul.mubr.f32.gmra.mrb[0].mxu0 %v659
    %v732 = vpop.f32.mrb[0].mxu0
    %v733 = vadd.f32 0.0, %v732
    %v734 = vpop.f32.mrb[0].mxu0
    %735 = vdwg.mxu0
    %v736 = vadd.f32 %v649, %v728
    %v737 = vadd.f32 %v650, %v733
    %v738 = vmul.f32 %v646, 0.5
    %v739 = vmul.f32 %v647, 0.5
    %v740 = vtanh.pop %v738
    %v741 = vtanh.pop %v739
    %v742 = vmul.f32 %v740, 0.5
    %v743 = vmul.f32 %v741, 0.5
    %v744 = vadd.f32 %v742, 0.5
    %v745 = vadd.f32 %v743, 0.5
    %v746 = vtanh.pop %v646
    %v747 = vtanh.pop %v647
    %750 = vrot.lane.b32.xlu0 %v552, 32
    %v751 = vpop.permute.xlu0 %750
    %752 = vrot.lane.b32.xlu0 %v553, 32
    %v753 = vpop.permute.xlu0 %752
    %v756 = vmul.f32 %v744, %v751
    %v757 = vmul.f32 %v745, %v753
    %760 = vrot.lane.b32.xlu0 %v746, 64
    %v761 = vpop.permute.xlu0 %760
    %762 = vrot.lane.b32.xlu0 %v747, 64
    %v763 = vpop.permute.xlu0 %762
    %v766 = vmul.f32 %v744, %v761
    %v767 = vmul.f32 %v745, %v763
    %770 = vrot.lane.b32.xlu0 %v766, 32
    %v771 = vpop.permute.xlu0 %770
    %772 = vrot.lane.b32.xlu0 %v767, 32
    %v773 = vpop.permute.xlu0 %772
    %v776 = vadd.f32 %v756, %v771
    %v777 = vadd.f32 %v757, %v773
    %v778 = vtanh.pop %v776
    %v779 = vtanh.pop %v777
    %782 = vrot.lane.b32.xlu0 %v778, 64
    %v783 = vpop.permute.xlu0 %782
    %784 = vrot.lane.b32.xlu0 %v779, 64
    %v785 = vpop.permute.xlu0 %784
    %v788 = vmul.f32 %v744, %v783
    %v789 = vmul.f32 %v745, %v785
    %v790 = vmul.f32 %v736, 0.5
    %v791 = vmul.f32 %v737, 0.5
    %v792 = vtanh.pop %v790
    %v793 = vtanh.pop %v791
    %v794 = vmul.f32 %v792, 0.5
    %v795 = vmul.f32 %v793, 0.5
    %v796 = vadd.f32 %v794, 0.5
    %v797 = vadd.f32 %v795, 0.5
    %v798 = vtanh.pop %v736
    %v799 = vtanh.pop %v737
    %802 = vrot.lane.b32.xlu0 %v556, 32
    %v803 = vpop.permute.xlu0 %802
    %804 = vrot.lane.b32.xlu0 %v557, 32
    %v805 = vpop.permute.xlu0 %804
    %v808 = vmul.f32 %v796, %v803
    %v809 = vmul.f32 %v797, %v805
    %812 = vrot.lane.b32.xlu0 %v798, 64
    %v813 = vpop.permute.xlu0 %812
    %814 = vrot.lane.b32.xlu0 %v799, 64
    %v815 = vpop.permute.xlu0 %814
    %v818 = vmul.f32 %v796, %v813
    %v819 = vmul.f32 %v797, %v815
    %822 = vrot.lane.b32.xlu0 %v818, 32
    %v823 = vpop.permute.xlu0 %822
    %824 = vrot.lane.b32.xlu0 %v819, 32
    %v825 = vpop.permute.xlu0 %824
    %v828 = vadd.f32 %v808, %v823
    %v829 = vadd.f32 %v809, %v825
    %v830 = vtanh.pop %v828
    %v831 = vtanh.pop %v829
    %834 = vrot.lane.b32.xlu0 %v830, 64
    %v835 = vpop.permute.xlu0 %834
    %836 = vrot.lane.b32.xlu0 %v831, 64
    %v837 = vpop.permute.xlu0 %836
    %v840 = vmul.f32 %v796, %v835
    %v841 = vmul.f32 %v797, %v837
    %844 = vrot.lane.b32.xlu0 %v788, 32
    %v845 = vpop.permute.xlu0 %844
    %846 = vrot.lane.b32.xlu0 %v789, 32
    %v847 = vpop.permute.xlu0 %846
    %850 = vst.msk [vmem:[#allocation19] sm:$0xff] %vm564, %v845
    %851 = vst.msk [vmem:[#allocation19 + $0x8] sm:$0xff] %vm564, %v847
    %854 = vrot.lane.b32.xlu0 %v840, 32
    %v855 = vpop.permute.xlu0 %854
    %856 = vrot.lane.b32.xlu0 %v841, 32
    %v857 = vpop.permute.xlu0 %856
    %s860 = scalar_lea.vmem [#allocation20], 112
    %861 = vst.msk [vmem:[%s860] sm:$0xff] %vm564, %v855
    %862 = vst.msk [vmem:[%s860 + $0x8] sm:$0xff] %vm564, %v857
    %s863 = scalar_lea.vmem [#allocation2], 16
    %v864 = vld [vmem:[%s863] sm:$0xff]
    %v865 = vld [vmem:[%s863 + $0x8] sm:$0xff]
    %v866 = vld [vmem:[#allocation16] sm:$0xff]
    %v867 = vld [vmem:[#allocation16 + $0x8] sm:$0xff]
    %v868 = vld [vmem:[#allocation16 + $0x10] sm:$0xff]
    %v869 = vld [vmem:[#allocation16 + $0x18] sm:$0xff]
    %v870 = vsel %vm564, %v845, 0
    %v872 = vsel %vm564, %v847, 0
    %874 = vmatprep.subr.mxu0 0.0
    %875 = vmatpush1.msra.mxu0 %v866
    %876 = vmatprep.subr.mxu0 0.0
    %877 = vmatpush1.msra.mxu0 %v867
    %878 = vmatprep.subr.mxu0 0.0
    %879 = vmatpush1.msra.mxu0 %v868
    %880 = vmatprep.subr.mxu0 0.0
    %881 = vmatpush1.msra.mxu0 %v869
    %882 = vmatprep.subr.mxu0 0.0
    %883 = vmatpush1.msra.mxu0 0.0
    %884 = vmatprep.subr.mxu0 0.0
    %885 = vmatpush1.msra.mxu0 0.0
    %886 = vmatprep.subr.mxu0 0.0
    %887 = vmatpush1.msra.mxu0 0.0
    %888 = vmatprep.subr.mxu0 0.0
    %889 = vmatpush1.msra.mxu0 0.0
    %890 = vmatprep.subr.mxu0 0.0
    %891 = vmatpush1.msra.mxu0 0.0
    %892 = vmatprep.subr.mxu0 0.0
    %893 = vmatpush1.msra.mxu0 0.0
    %894 = vmatprep.subr.mxu0 0.0
    %895 = vmatpush1.msra.mxu0 0.0
    %896 = vmatprep.subr.mxu0 0.0
    %897 = vmatpush1.msra.mxu0 0.0
    %898 = vmatprep.subr.mxu0 0.0
    %899 = vmatpush1.msra.mxu0 0.0
    %900 = vmatprep.subr.mxu0 0.0
    %901 = vmatpush1.msra.mxu0 0.0
    %902 = vmatprep.subr.mxu0 0.0
    %903 = vmatpush1.msra.mxu0 0.0
    %904 = vmatprep.subr.mxu0 0.0
    %905 = vmatpush1.msra.mxu0 0.0
    %906 = vmatprep.subr.mxu0 0.0
    %907 = vmatpush1.msra.mxu0 0.0
    %908 = vmatprep.subr.mxu0 0.0
    %909 = vmatpush1.msra.mxu0 0.0
    %910 = vmatprep.subr.mxu0 0.0
    %911 = vmatpush1.msra.mxu0 0.0
    %912 = vmatprep.subr.mxu0 0.0
    %913 = vmatpush1.msra.mxu0 0.0
    %914 = vmatprep.subr.mxu0 0.0
    %915 = vmatpush1.msra.mxu0 0.0
    %916 = vmatprep.subr.mxu0 0.0
    %917 = vmatpush1.msra.mxu0 0.0
    %918 = vmatprep.subr.mxu0 0.0
    %919 = vmatpush1.msra.mxu0 0.0
    %920 = vmatprep.subr.mxu0 0.0
    %921 = vmatpush1.msra.mxu0 0.0
    %922 = vmatprep.subr.mxu0 0.0
    %923 = vmatpush1.msra.mxu0 0.0
    %924 = vmatprep.subr.mxu0 0.0
    %925 = vmatpush1.msra.mxu0 0.0
    %926 = vmatprep.subr.mxu0 0.0
    %927 = vmatpush1.msra.mxu0 0.0
    %928 = vmatprep.subr.mxu0 0.0
    %929 = vmatpush1.msra.mxu0 0.0
    %930 = vmatprep.subr.mxu0 0.0
    %931 = vmatpush1.msra.mxu0 0.0
    %932 = vmatprep.subr.mxu0 0.0
    %933 = vmatpush1.msra.mxu0 0.0
    %934 = vmatprep.subr.mxu0 0.0
    %935 = vmatpush1.msra.mxu0 0.0
    %936 = vmatprep.subr.mxu0 0.0
    %937 = vmatpush1.msra.mxu0 0.0
    %938 = vmatprep.mubr.f32.mxu0 0.0
    %939 = vmatmul.mubr.f32.gmra.mrb[0].mxu0 %v870
    %v940 = vpop.f32.mrb[0].mxu0
    %v941 = vadd.f32 0.0, %v940
    %v942 = vpop.f32.mrb[0].mxu0
    %943 = vmatprep.mubr.f32.mxu0 0.0
    %944 = vmatmul.mubr.f32.gmra.mrb[0].mxu0 %v872
    %v945 = vpop.f32.mrb[0].mxu0
    %v946 = vadd.f32 0.0, %v945
    %v947 = vpop.f32.mrb[0].mxu0
    %948 = vdwg.mxu0
    %v949 = vadd.f32 %v864, %v941
    %v950 = vadd.f32 %v865, %v946
    %s951 = scalar_lea.vmem [#allocation3], 96
    %v952 = vld [vmem:[%s951] sm:$0xff]
    %v953 = vld [vmem:[%s951 + $0x8] sm:$0xff]
    %v954 = vld [vmem:[#allocation17] sm:$0xff]
    %v955 = vld [vmem:[#allocation17 + $0x8] sm:$0xff]
    %v956 = vld [vmem:[#allocation17 + $0x10] sm:$0xff]
    %v957 = vld [vmem:[#allocation17 + $0x18] sm:$0xff]
    %v958 = vsel %vm564, %v855, 0
    %v960 = vsel %vm564, %v857, 0
    %962 = vmatprep.subr.mxu0 0.0
    %963 = vmatpush1.msra.mxu0 %v954
    %964 = vmatprep.subr.mxu0 0.0
    %965 = vmatpush1.msra.mxu0 %v955
    %966 = vmatprep.subr.mxu0 0.0
    %967 = vmatpush1.msra.mxu0 %v956
    %968 = vmatprep.subr.mxu0 0.0
    %969 = vmatpush1.msra.mxu0 %v957
    %970 = vmatprep.subr.mxu0 0.0
    %971 = vmatpush1.msra.mxu0 0.0
    %972 = vmatprep.subr.mxu0 0.0
    %973 = vmatpush1.msra.mxu0 0.0
    %974 = vmatprep.subr.mxu0 0.0
    %975 = vmatpush1.msra.mxu0 0.0
    %976 = vmatprep.subr.mxu0 0.0
    %977 = vmatpush1.msra.mxu0 0.0
    %978 = vmatprep.subr.mxu0 0.0
    %979 = vmatpush1.msra.mxu0 0.0
    %980 = vmatprep.subr.mxu0 0.0
    %981 = vmatpush1.msra.mxu0 0.0
    %982 = vmatprep.subr.mxu0 0.0
    %983 = vmatpush1.msra.mxu0 0.0
    %984 = vmatprep.subr.mxu0 0.0
    %985 = vmatpush1.msra.mxu0 0.0
    %986 = vmatprep.subr.mxu0 0.0
    %987 = vmatpush1.msra.mxu0 0.0
    %988 = vmatprep.subr.mxu0 0.0
    %989 = vmatpush1.msra.mxu0 0.0
    %990 = vmatprep.subr.mxu0 0.0
    %991 = vmatpush1.msra.mxu0 0.0
    %992 = vmatprep.subr.mxu0 0.0
    %993 = vmatpush1.msra.mxu0 0.0
    %994 = vmatprep.subr.mxu0 0.0
    %995 = vmatpush1.msra.mxu0 0.0
    %996 = vmatprep.subr.mxu0 0.0
    %997 = vmatpush1.msra.mxu0 0.0
    %998 = vmatprep.subr.mxu0 0.0
    %999 = vmatpush1.msra.mxu0 0.0
    %1000 = vmatprep.subr.mxu0 0.0
    %1001 = vmatpush1.msra.mxu0 0.0
    %1002 = vmatprep.subr.mxu0 0.0
    %1003 = vmatpush1.msra.mxu0 0.0
    %1004 = vmatprep.subr.mxu0 0.0
    %1005 = vmatpush1.msra.mxu0 0.0
    %1006 = vmatprep.subr.mxu0 0.0
    %1007 = vmatpush1.msra.mxu0 0.0
    %1008 = vmatprep.subr.mxu0 0.0
    %1009 = vmatpush1.msra.mxu0 0.0
    %1010 = vmatprep.subr.mxu0 0.0
    %1011 = vmatpush1.msra.mxu0 0.0
    %1012 = vmatprep.subr.mxu0 0.0
    %1013 = vmatpush1.msra.mxu0 0.0
    %1014 = vmatprep.subr.mxu0 0.0
    %1015 = vmatpush1.msra.mxu0 0.0
    %1016 = vmatprep.subr.mxu0 0.0
    %1017 = vmatpush1.msra.mxu0 0.0
    %1018 = vmatprep.subr.mxu0 0.0
    %1019 = vmatpush1.msra.mxu0 0.0
    %1020 = vmatprep.subr.mxu0 0.0
    %1021 = vmatpush1.msra.mxu0 0.0
    %1022 = vmatprep.subr.mxu0 0.0
    %1023 = vmatpush1.msra.mxu0 0.0
    %1024 = vmatprep.subr.mxu0 0.0
    %1025 = vmatpush1.msra.mxu0 0.0
    %1026 = vmatprep.mubr.f32.mxu0 0.0
    %1027 = vmatmul.mubr.f32.gmra.mrb[0].mxu0 %v958
    %v1028 = vpop.f32.mrb[0].mxu0
    %v1029 = vadd.f32 0.0, %v1028
    %v1030 = vpop.f32.mrb[0].mxu0
    %1031 = vmatprep.mubr.f32.mxu0 0.0
    %1032 = vmatmul.mubr.f32.gmra.mrb[0].mxu0 %v960
    %v1033 = vpop.f32.mrb[0].mxu0
    %v1034 = vadd.f32 0.0, %v1033
    %v1035 = vpop.f32.mrb[0].mxu0
    %1036 = vdwg.mxu0
    %v1037 = vadd.f32 %v952, %v1029
    %v1038 = vadd.f32 %v953, %v1034
    %v1039 = vmul.f32 %v949, 0.5
    %v1040 = vmul.f32 %v950, 0.5
    %v1041 = vtanh.pop %v1039
    %v1042 = vtanh.pop %v1040
    %v1043 = vmul.f32 %v1041, 0.5
    %v1044 = vmul.f32 %v1042, 0.5
    %v1045 = vadd.f32 %v1043, 0.5
    %v1046 = vadd.f32 %v1044, 0.5
    %v1047 = vtanh.pop %v949
    %v1048 = vtanh.pop %v950
    %v1049 = vmul.f32 %v1045, %v776
    %v1050 = vmul.f32 %v1046, %v777
    %1053 = vrot.lane.b32.xlu0 %v1047, 64
    %v1054 = vpop.permute.xlu0 %1053
    %1055 = vrot.lane.b32.xlu0 %v1048, 64
    %v1056 = vpop.permute.xlu0 %1055
    %v1059 = vmul.f32 %v1045, %v1054
    %v1060 = vmul.f32 %v1046, %v1056
    %1063 = vrot.lane.b32.xlu0 %v1059, 32
    %v1064 = vpop.permute.xlu0 %1063
    %1065 = vrot.lane.b32.xlu0 %v1060, 32
    %v1066 = vpop.permute.xlu0 %1065
    %v1069 = vadd.f32 %v1049, %v1064
    %v1070 = vadd.f32 %v1050, %v1066
    %v1071 = vtanh.pop %v1069
    %v1072 = vtanh.pop %v1070
    %1075 = vrot.lane.b32.xlu0 %v1071, 64
    %v1076 = vpop.permute.xlu0 %1075
    %1077 = vrot.lane.b32.xlu0 %v1072, 64
    %v1078 = vpop.permute.xlu0 %1077
    %v1081 = vmul.f32 %v1045, %v1076
    %v1082 = vmul.f32 %v1046, %v1078
    %v1083 = vmul.f32 %v1037, 0.5
    %v1084 = vmul.f32 %v1038, 0.5
    %v1085 = vtanh.pop %v1083
    %v1086 = vtanh.pop %v1084
    %v1087 = vmul.f32 %v1085, 0.5
    %v1088 = vmul.f32 %v1086, 0.5
    %v1089 = vadd.f32 %v1087, 0.5
    %v1090 = vadd.f32 %v1088, 0.5
    %v1091 = vtanh.pop %v1037
    %v1092 = vtanh.pop %v1038
    %v1093 = vmul.f32 %v1089, %v828
    %v1094 = vmul.f32 %v1090, %v829
    %1097 = vrot.lane.b32.xlu0 %v1091, 64
    %v1098 = vpop.permute.xlu0 %1097
    %1099 = vrot.lane.b32.xlu0 %v1092, 64
    %v1100 = vpop.permute.xlu0 %1099
    %v1103 = vmul.f32 %v1089, %v1098
    %v1104 = vmul.f32 %v1090, %v1100
    %1107 = vrot.lane.b32.xlu0 %v1103, 32
    %v1108 = vpop.permute.xlu0 %1107
    %1109 = vrot.lane.b32.xlu0 %v1104, 32
    %v1110 = vpop.permute.xlu0 %1109
    %v1113 = vadd.f32 %v1093, %v1108
    %v1114 = vadd.f32 %v1094, %v1110
    %v1115 = vtanh.pop %v1113
    %v1116 = vtanh.pop %v1114
    %1119 = vrot.lane.b32.xlu0 %v1115, 64
    %v1120 = vpop.permute.xlu0 %1119
    %1121 = vrot.lane.b32.xlu0 %v1116, 64
    %v1122 = vpop.permute.xlu0 %1121
    %v1125 = vmul.f32 %v1089, %v1120
    %v1126 = vmul.f32 %v1090, %v1122
    %1129 = vrot.lane.b32.xlu0 %v1081, 32
    %v1130 = vpop.permute.xlu0 %1129
    %1131 = vrot.lane.b32.xlu0 %v1082, 32
    %v1132 = vpop.permute.xlu0 %1131
    %s1135 = scalar_lea.vmem [#allocation19], 16
    %1136 = vst.msk [vmem:[%s1135] sm:$0xff] %vm564, %v1130
    %1137 = vst.msk [vmem:[%s1135 + $0x8] sm:$0xff] %vm564, %v1132
    %1140 = vrot.lane.b32.xlu0 %v1125, 32
    %v1141 = vpop.permute.xlu0 %1140
    %1142 = vrot.lane.b32.xlu0 %v1126, 32
    %v1143 = vpop.permute.xlu0 %1142
    %s1146 = scalar_lea.vmem [#allocation20], 96
    %1147 = vst.msk [vmem:[%s1146] sm:$0xff] %vm564, %v1141
    %1148 = vst.msk [vmem:[%s1146 + $0x8] sm:$0xff] %vm564, %v1143
    %s1149 = scalar_lea.vmem [#allocation2], 32
    %v1150 = vld [vmem:[%s1149] sm:$0xff]
    %v1151 = vld [vmem:[%s1149 + $0x8] sm:$0xff]
    %v1152 = vld [vmem:[#allocation16] sm:$0xff]
    %v1153 = vld [vmem:[#allocation16 + $0x8] sm:$0xff]
    %v1154 = vld [vmem:[#allocation16 + $0x10] sm:$0xff]
    %v1155 = vld [vmem:[#allocation16 + $0x18] sm:$0xff]
    %v1156 = vsel %vm564, %v1130, 0
    %v1158 = vsel %vm564, %v1132, 0
    %1160 = vmatprep.subr.mxu0 0.0
    %1161 = vmatpush1.msra.mxu0 %v1152
    %1162 = vmatprep.subr.mxu0 0.0
    %1163 = vmatpush1.msra.mxu0 %v1153
    %1164 = vmatprep.subr.mxu0 0.0
    %1165 = vmatpush1.msra.mxu0 %v1154
    %1166 = vmatprep.subr.mxu0 0.0
    %1167 = vmatpush1.msra.mxu0 %v1155
    %1168 = vmatprep.subr.mxu0 0.0
    %1169 = vmatpush1.msra.mxu0 0.0
    %1170 = vmatprep.subr.mxu0 0.0
    %1171 = vmatpush1.msra.mxu0 0.0
    %1172 = vmatprep.subr.mxu0 0.0
    %1173 = vmatpush1.msra.mxu0 0.0
    %1174 = vmatprep.subr.mxu0 0.0
    %1175 = vmatpush1.msra.mxu0 0.0
    %1176 = vmatprep.subr.mxu0 0.0
    %1177 = vmatpush1.msra.mxu0 0.0
    %1178 = vmatprep.subr.mxu0 0.0
    %1179 = vmatpush1.msra.mxu0 0.0
    %1180 = vmatprep.subr.mxu0 0.0
    %1181 = vmatpush1.msra.mxu0 0.0
    %1182 = vmatprep.subr.mxu0 0.0
    %1183 = vmatpush1.msra.mxu0 0.0
    %1184 = vmatprep.subr.mxu0 0.0
    %1185 = vmatpush1.msra.mxu0 0.0
    %1186 = vmatprep.subr.mxu0 0.0
    %1187 = vmatpush1.msra.mxu0 0.0
    %1188 = vmatprep.subr.mxu0 0.0
    %1189 = vmatpush1.msra.mxu0 0.0
    %1190 = vmatprep.subr.mxu0 0.0
    %1191 = vmatpush1.msra.mxu0 0.0
    %1192 = vmatprep.subr.mxu0 0.0
    %1193 = vmatpush1.msra.mxu0 0.0
    %1194 = vmatprep.subr.mxu0 0.0
    %1195 = vmatpush1.msra.mxu0 0.0
    %1196 = vmatprep.subr.mxu0 0.0
    %1197 = vmatpush1.msra.mxu0 0.0
    %1198 = vmatprep.subr.mxu0 0.0
    %1199 = vmatpush1.msra.mxu0 0.0
    %1200 = vmatprep.subr.mxu0 0.0
    %1201 = vmatpush1.msra.mxu0 0.0
    %1202 = vmatprep.subr.mxu0 0.0
    %1203 = vmatpush1.msra.mxu0 0.0
    %1204 = vmatprep.subr.mxu0 0.0
    %1205 = vmatpush1.msra.mxu0 0.0
    %1206 = vmatprep.subr.mxu0 0.0
    %1207 = vmatpush1.msra.mxu0 0.0
    %1208 = vmatprep.subr.mxu0 0.0
    %1209 = vmatpush1.msra.mxu0 0.0
    %1210 = vmatprep.subr.mxu0 0.0
    %1211 = vmatpush1.msra.mxu0 0.0
    %1212 = vmatprep.subr.mxu0 0.0
    %1213 = vmatpush1.msra.mxu0 0.0
    %1214 = vmatprep.subr.mxu0 0.0
    %1215 = vmatpush1.msra.mxu0 0.0
    %1216 = vmatprep.subr.mxu0 0.0
    %1217 = vmatpush1.msra.mxu0 0.0
    %1218 = vmatprep.subr.mxu0 0.0
    %1219 = vmatpush1.msra.mxu0 0.0
    %1220 = vmatprep.subr.mxu0 0.0
    %1221 = vmatpush1.msra.mxu0 0.0
    %1222 = vmatprep.subr.mxu0 0.0
    %1223 = vmatpush1.msra.mxu0 0.0
    %1224 = vmatprep.mubr.f32.mxu0 0.0
    %1225 = vmatmul.mubr.f32.gmra.mrb[0].mxu0 %v1156
    %v1226 = vpop.f32.mrb[0].mxu0
    %v1227 = vadd.f32 0.0, %v1226
    %v1228 = vpop.f32.mrb[0].mxu0
    %1229 = vmatprep.mubr.f32.mxu0 0.0
    %1230 = vmatmul.mubr.f32.gmra.mrb[0].mxu0 %v1158
    %v1231 = vpop.f32.mrb[0].mxu0
    %v1232 = vadd.f32 0.0, %v1231
    %v1233 = vpop.f32.mrb[0].mxu0
    %1234 = vdwg.mxu0
    %v1235 = vadd.f32 %v1150, %v1227
    %v1236 = vadd.f32 %v1151, %v1232
    %s1237 = scalar_lea.vmem [#allocation3], 80
    %v1238 = vld [vmem:[%s1237] sm:$0xff]
    %v1239 = vld [vmem:[%s1237 + $0x8] sm:$0xff]
    %v1240 = vld [vmem:[#allocation17] sm:$0xff]
    %v1241 = vld [vmem:[#allocation17 + $0x8] sm:$0xff]
    %v1242 = vld [vmem:[#allocation17 + $0x10] sm:$0xff]
    %v1243 = vld [vmem:[#allocation17 + $0x18] sm:$0xff]
    %v1244 = vsel %vm564, %v1141, 0
    %v1246 = vsel %vm564, %v1143, 0
    %1248 = vmatprep.subr.mxu0 0.0
    %1249 = vmatpush1.msra.mxu0 %v1240
    %1250 = vmatprep.subr.mxu0 0.0
    %1251 = vmatpush1.msra.mxu0 %v1241
    %1252 = vmatprep.subr.mxu0 0.0
    %1253 = vmatpush1.msra.mxu0 %v1242
    %1254 = vmatprep.subr.mxu0 0.0
    %1255 = vmatpush1.msra.mxu0 %v1243
    %1256 = vmatprep.subr.mxu0 0.0
    %1257 = vmatpush1.msra.mxu0 0.0
    %1258 = vmatprep.subr.mxu0 0.0
    %1259 = vmatpush1.msra.mxu0 0.0
    %1260 = vmatprep.subr.mxu0 0.0
    %1261 = vmatpush1.msra.mxu0 0.0
    %1262 = vmatprep.subr.mxu0 0.0
    %1263 = vmatpush1.msra.mxu0 0.0
    %1264 = vmatprep.subr.mxu0 0.0
    %1265 = vmatpush1.msra.mxu0 0.0
    %1266 = vmatprep.subr.mxu0 0.0
    %1267 = vmatpush1.msra.mxu0 0.0
    %1268 = vmatprep.subr.mxu0 0.0
    %1269 = vmatpush1.msra.mxu0 0.0
    %1270 = vmatprep.subr.mxu0 0.0
    %1271 = vmatpush1.msra.mxu0 0.0
    %1272 = vmatprep.subr.mxu0 0.0
    %1273 = vmatpush1.msra.mxu0 0.0
    %1274 = vmatprep.subr.mxu0 0.0
    %1275 = vmatpush1.msra.mxu0 0.0
    %1276 = vmatprep.subr.mxu0 0.0
    %1277 = vmatpush1.msra.mxu0 0.0
    %1278 = vmatprep.subr.mxu0 0.0
    %1279 = vmatpush1.msra.mxu0 0.0
    %1280 = vmatprep.subr.mxu0 0.0
    %1281 = vmatpush1.msra.mxu0 0.0
    %1282 = vmatprep.subr.mxu0 0.0
    %1283 = vmatpush1.msra.mxu0 0.0
    %1284 = vmatprep.subr.mxu0 0.0
    %1285 = vmatpush1.msra.mxu0 0.0
    %1286 = vmatprep.subr.mxu0 0.0
    %1287 = vmatpush1.msra.mxu0 0.0
    %1288 = vmatprep.subr.mxu0 0.0
    %1289 = vmatpush1.msra.mxu0 0.0
    %1290 = vmatprep.subr.mxu0 0.0
    %1291 = vmatpush1.msra.mxu0 0.0
    %1292 = vmatprep.subr.mxu0 0.0
    %1293 = vmatpush1.msra.mxu0 0.0
    %1294 = vmatprep.subr.mxu0 0.0
    %1295 = vmatpush1.msra.mxu0 0.0
    %1296 = vmatprep.subr.mxu0 0.0
    %1297 = vmatpush1.msra.mxu0 0.0
    %1298 = vmatprep.subr.mxu0 0.0
    %1299 = vmatpush1.msra.mxu0 0.0
    %1300 = vmatprep.subr.mxu0 0.0
    %1301 = vmatpush1.msra.mxu0 0.0
    %1302 = vmatprep.subr.mxu0 0.0
    %1303 = vmatpush1.msra.mxu0 0.0
    %1304 = vmatprep.subr.mxu0 0.0
    %1305 = vmatpush1.msra.mxu0 0.0
    %1306 = vmatprep.subr.mxu0 0.0
    %1307 = vmatpush1.msra.mxu0 0.0
    %1308 = vmatprep.subr.mxu0 0.0
    %1309 = vmatpush1.msra.mxu0 0.0
    %1310 = vmatprep.subr.mxu0 0.0
    %1311 = vmatpush1.msra.mxu0 0.0
    %1312 = vmatprep.mubr.f32.mxu0 0.0
    %1313 = vmatmul.mubr.f32.gmra.mrb[0].mxu0 %v1244
    %v1314 = vpop.f32.mrb[0].mxu0
    %v1315 = vadd.f32 0.0, %v1314
    %v1316 = vpop.f32.mrb[0].mxu0
    %1317 = vmatprep.mubr.f32.mxu0 0.0
    %1318 = vmatmul.mubr.f32.gmra.mrb[0].mxu0 %v1246
    %v1319 = vpop.f32.mrb[0].mxu0
    %v1320 = vadd.f32 0.0, %v1319
    %v1321 = vpop.f32.mrb[0].mxu0
    %1322 = vdwg.mxu0
    %v1323 = vadd.f32 %v1238, %v1315
    %v1324 = vadd.f32 %v1239, %v1320
    %v1325 = vmul.f32 %v1235, 0.5
    %v1326 = vmul.f32 %v1236, 0.5
    %v1327 = vtanh.pop %v1325
    %v1328 = vtanh.pop %v1326
    %v1329 = vmul.f32 %v1327, 0.5
    %v1330 = vmul.f32 %v1328, 0.5
    %v1331 = vadd.f32 %v1329, 0.5
    %v1332 = vadd.f32 %v1330, 0.5
    %v1333 = vtanh.pop %v1235
    %v1334 = vtanh.pop %v1236
    %v1335 = vmul.f32 %v1331, %v1069
    %v1336 = vmul.f32 %v1332, %v1070
    %1339 = vrot.lane.b32.xlu0 %v1333, 64
    %v1340 = vpop.permute.xlu0 %1339
    %1341 = vrot.lane.b32.xlu0 %v1334, 64
    %v1342 = vpop.permute.xlu0 %1341
    %v1345 = vmul.f32 %v1331, %v1340
    %v1346 = vmul.f32 %v1332, %v1342
    %1349 = vrot.lane.b32.xlu0 %v1345, 32
    %v1350 = vpop.permute.xlu0 %1349
    %1351 = vrot.lane.b32.xlu0 %v1346, 32
    %v1352 = vpop.permute.xlu0 %1351
    %v1355 = vadd.f32 %v1335, %v1350
    %v1356 = vadd.f32 %v1336, %v1352
    %v1357 = vtanh.pop %v1355
    %v1358 = vtanh.pop %v1356
    %1361 = vrot.lane.b32.xlu0 %v1357, 64
    %v1362 = vpop.permute.xlu0 %1361
    %1363 = vrot.lane.b32.xlu0 %v1358, 64
    %v1364 = vpop.permute.xlu0 %1363
    %v1367 = vmul.f32 %v1331, %v1362
    %v1368 = vmul.f32 %v1332, %v1364
    %v1369 = vmul.f32 %v1323, 0.5
    %v1370 = vmul.f32 %v1324, 0.5
    %v1371 = vtanh.pop %v1369
    %v1372 = vtanh.pop %v1370
    %v1373 = vmul.f32 %v1371, 0.5
    %v1374 = vmul.f32 %v1372, 0.5
    %v1375 = vadd.f32 %v1373, 0.5
    %v1376 = vadd.f32 %v1374, 0.5
    %v1377 = vtanh.pop %v1323
    %v1378 = vtanh.pop %v1324
    %v1379 = vmul.f32 %v1375, %v1113
    %v1380 = vmul.f32 %v1376, %v1114
    %1383 = vrot.lane.b32.xlu0 %v1377, 64
    %v1384 = vpop.permute.xlu0 %1383
    %1385 = vrot.lane.b32.xlu0 %v1378, 64
    %v1386 = vpop.permute.xlu0 %1385
    %v1389 = vmul.f32 %v1375, %v1384
    %v1390 = vmul.f32 %v1376, %v1386
    %1393 = vrot.lane.b32.xlu0 %v1389, 32
    %v1394 = vpop.permute.xlu0 %1393
    %1395 = vrot.lane.b32.xlu0 %v1390, 32
    %v1396 = vpop.permute.xlu0 %1395
    %v1399 = vadd.f32 %v1379, %v1394
    %v1400 = vadd.f32 %v1380, %v1396
    %v1401 = vtanh.pop %v1399
    %v1402 = vtanh.pop %v1400
    %1405 = vrot.lane.b32.xlu0 %v1401, 64
    %v1406 = vpop.permute.xlu0 %1405
    %1407 = vrot.lane.b32.xlu0 %v1402, 64
    %v1408 = vpop.permute.xlu0 %1407
    %v1411 = vmul.f32 %v1375, %v1406
    %v1412 = vmul.f32 %v1376, %v1408
    %1415 = vrot.lane.b32.xlu0 %v1367, 32
    %v1416 = vpop.permute.xlu0 %1415
    %1417 = vrot.lane.b32.xlu0 %v1368, 32
    %v1418 = vpop.permute.xlu0 %1417
    %s1421 = scalar_lea.vmem [#allocation19], 32
    %1422 = vst.msk [vmem:[%s1421] sm:$0xff] %vm564, %v1416
    %1423 = vst.msk [vmem:[%s1421 + $0x8] sm:$0xff] %vm564, %v1418
    %1426 = vrot.lane.b32.xlu0 %v1411, 32
    %v1427 = vpop.permute.xlu0 %1426
    %1428 = vrot.lane.b32.xlu0 %v1412, 32
    %v1429 = vpop.permute.xlu0 %1428
    %s1432 = scalar_lea.vmem [#allocation20], 80
    %1433 = vst.msk [vmem:[%s1432] sm:$0xff] %vm564, %v1427
    %1434 = vst.msk [vmem:[%s1432 + $0x8] sm:$0xff] %vm564, %v1429
    %s1435 = scalar_lea.vmem [#allocation2], 48
    %v1436 = vld [vmem:[%s1435] sm:$0xff]
    %v1437 = vld [vmem:[%s1435 + $0x8] sm:$0xff]
    %v1438 = vld [vmem:[#allocation16] sm:$0xff]
    %v1439 = vld [vmem:[#allocation16 + $0x8] sm:$0xff]
    %v1440 = vld [vmem:[#allocation16 + $0x10] sm:$0xff]
    %v1441 = vld [vmem:[#allocation16 + $0x18] sm:$0xff]
    %v1442 = vsel %vm564, %v1416, 0
    %v1444 = vsel %vm564, %v1418, 0
    %1446 = vmatprep.subr.mxu0 0.0
    %1447 = vmatpush1.msra.mxu0 %v1438
    %1448 = vmatprep.subr.mxu0 0.0
    %1449 = vmatpush1.msra.mxu0 %v1439
    %1450 = vmatprep.subr.mxu0 0.0
    %1451 = vmatpush1.msra.mxu0 %v1440
    %1452 = vmatprep.subr.mxu0 0.0
    %1453 = vmatpush1.msra.mxu0 %v1441
    %1454 = vmatprep.subr.mxu0 0.0
    %1455 = vmatpush1.msra.mxu0 0.0
    %1456 = vmatprep.subr.mxu0 0.0
    %1457 = vmatpush1.msra.mxu0 0.0
    %1458 = vmatprep.subr.mxu0 0.0
    %1459 = vmatpush1.msra.mxu0 0.0
    %1460 = vmatprep.subr.mxu0 0.0
    %1461 = vmatpush1.msra.mxu0 0.0
    %1462 = vmatprep.subr.mxu0 0.0
    %1463 = vmatpush1.msra.mxu0 0.0
    %1464 = vmatprep.subr.mxu0 0.0
    %1465 = vmatpush1.msra.mxu0 0.0
    %1466 = vmatprep.subr.mxu0 0.0
    %1467 = vmatpush1.msra.mxu0 0.0
    %1468 = vmatprep.subr.mxu0 0.0
    %1469 = vmatpush1.msra.mxu0 0.0
    %1470 = vmatprep.subr.mxu0 0.0
    %1471 = vmatpush1.msra.mxu0 0.0
    %1472 = vmatprep.subr.mxu0 0.0
    %1473 = vmatpush1.msra.mxu0 0.0
    %1474 = vmatprep.subr.mxu0 0.0
    %1475 = vmatpush1.msra.mxu0 0.0
    %1476 = vmatprep.subr.mxu0 0.0
    %1477 = vmatpush1.msra.mxu0 0.0
    %1478 = vmatprep.subr.mxu0 0.0
    %1479 = vmatpush1.msra.mxu0 0.0
    %1480 = vmatprep.subr.mxu0 0.0
    %1481 = vmatpush1.msra.mxu0 0.0
    %1482 = vmatprep.subr.mxu0 0.0
    %1483 = vmatpush1.msra.mxu0 0.0
    %1484 = vmatprep.subr.mxu0 0.0
    %1485 = vmatpush1.msra.mxu0 0.0
    %1486 = vmatprep.subr.mxu0 0.0
    %1487 = vmatpush1.msra.mxu0 0.0
    %1488 = vmatprep.subr.mxu0 0.0
    %1489 = vmatpush1.msra.mxu0 0.0
    %1490 = vmatprep.subr.mxu0 0.0
    %1491 = vmatpush1.msra.mxu0 0.0
    %1492 = vmatprep.subr.mxu0 0.0
    %1493 = vmatpush1.msra.mxu0 0.0
    %1494 = vmatprep.subr.mxu0 0.0
    %1495 = vmatpush1.msra.mxu0 0.0
    %1496 = vmatprep.subr.mxu0 0.0
    %1497 = vmatpush1.msra.mxu0 0.0
    %1498 = vmatprep.subr.mxu0 0.0
    %1499 = vmatpush1.msra.mxu0 0.0
    %1500 = vmatprep.subr.mxu0 0.0
    %1501 = vmatpush1.msra.mxu0 0.0
    %1502 = vmatprep.subr.mxu0 0.0
    %1503 = vmatpush1.msra.mxu0 0.0
    %1504 = vmatprep.subr.mxu0 0.0
    %1505 = vmatpush1.msra.mxu0 0.0
    %1506 = vmatprep.subr.mxu0 0.0
    %1507 = vmatpush1.msra.mxu0 0.0
    %1508 = vmatprep.subr.mxu0 0.0
    %1509 = vmatpush1.msra.mxu0 0.0
    %1510 = vmatprep.mubr.f32.mxu0 0.0
    %1511 = vmatmul.mubr.f32.gmra.mrb[0].mxu0 %v1442
    %v1512 = vpop.f32.mrb[0].mxu0
    %v1513 = vadd.f32 0.0, %v1512
    %v1514 = vpop.f32.mrb[0].mxu0
    %1515 = vmatprep.mubr.f32.mxu0 0.0
    %1516 = vmatmul.mubr.f32.gmra.mrb[0].mxu0 %v1444
    %v1517 = vpop.f32.mrb[0].mxu0
    %v1518 = vadd.f32 0.0, %v1517
    %v1519 = vpop.f32.mrb[0].mxu0
    %1520 = vdwg.mxu0
    %v1521 = vadd.f32 %v1436, %v1513
    %v1522 = vadd.f32 %v1437, %v1518
    %s1523 = scalar_lea.vmem [#allocation3], 64
    %v1524 = vld [vmem:[%s1523] sm:$0xff]
    %v1525 = vld [vmem:[%s1523 + $0x8] sm:$0xff]
    %v1526 = vld [vmem:[#allocation17] sm:$0xff]
    %v1527 = vld [vmem:[#allocation17 + $0x8] sm:$0xff]
    %v1528 = vld [vmem:[#allocation17 + $0x10] sm:$0xff]
    %v1529 = vld [vmem:[#allocation17 + $0x18] sm:$0xff]
    %v1530 = vsel %vm564, %v1427, 0
    %v1532 = vsel %vm564, %v1429, 0
    %1534 = vmatprep.subr.mxu0 0.0
    %1535 = vmatpush1.msra.mxu0 %v1526
    %1536 = vmatprep.subr.mxu0 0.0
    %1537 = vmatpush1.msra.mxu0 %v1527
    %1538 = vmatprep.subr.mxu0 0.0
    %1539 = vmatpush1.msra.mxu0 %v1528
    %1540 = vmatprep.subr.mxu0 0.0
    %1541 = vmatpush1.msra.mxu0 %v1529
    %1542 = vmatprep.subr.mxu0 0.0
    %1543 = vmatpush1.msra.mxu0 0.0
    %1544 = vmatprep.subr.mxu0 0.0
    %1545 = vmatpush1.msra.mxu0 0.0
    %1546 = vmatprep.subr.mxu0 0.0
    %1547 = vmatpush1.msra.mxu0 0.0
    %1548 = vmatprep.subr.mxu0 0.0
    %1549 = vmatpush1.msra.mxu0 0.0
    %1550 = vmatprep.subr.mxu0 0.0
    %1551 = vmatpush1.msra.mxu0 0.0
    %1552 = vmatprep.subr.mxu0 0.0
    %1553 = vmatpush1.msra.mxu0 0.0
    %1554 = vmatprep.subr.mxu0 0.0
    %1555 = vmatpush1.msra.mxu0 0.0
    %1556 = vmatprep.subr.mxu0 0.0
    %1557 = vmatpush1.msra.mxu0 0.0
    %1558 = vmatprep.subr.mxu0 0.0
    %1559 = vmatpush1.msra.mxu0 0.0
    %1560 = vmatprep.subr.mxu0 0.0
    %1561 = vmatpush1.msra.mxu0 0.0
    %1562 = vmatprep.subr.mxu0 0.0
    %1563 = vmatpush1.msra.mxu0 0.0
    %1564 = vmatprep.subr.mxu0 0.0
    %1565 = vmatpush1.msra.mxu0 0.0
    %1566 = vmatprep.subr.mxu0 0.0
    %1567 = vmatpush1.msra.mxu0 0.0
    %1568 = vmatprep.subr.mxu0 0.0
    %1569 = vmatpush1.msra.mxu0 0.0
    %1570 = vmatprep.subr.mxu0 0.0
    %1571 = vmatpush1.msra.mxu0 0.0
    %1572 = vmatprep.subr.mxu0 0.0
    %1573 = vmatpush1.msra.mxu0 0.0
    %1574 = vmatprep.subr.mxu0 0.0
    %1575 = vmatpush1.msra.mxu0 0.0
    %1576 = vmatprep.subr.mxu0 0.0
    %1577 = vmatpush1.msra.mxu0 0.0
    %1578 = vmatprep.subr.mxu0 0.0
    %1579 = vmatpush1.msra.mxu0 0.0
    %1580 = vmatprep.subr.mxu0 0.0
    %1581 = vmatpush1.msra.mxu0 0.0
    %1582 = vmatprep.subr.mxu0 0.0
    %1583 = vmatpush1.msra.mxu0 0.0
    %1584 = vmatprep.subr.mxu0 0.0
    %1585 = vmatpush1.msra.mxu0 0.0
    %1586 = vmatprep.subr.mxu0 0.0
    %1587 = vmatpush1.msra.mxu0 0.0
    %1588 = vmatprep.subr.mxu0 0.0
    %1589 = vmatpush1.msra.mxu0 0.0
    %1590 = vmatprep.subr.mxu0 0.0
    %1591 = vmatpush1.msra.mxu0 0.0
    %1592 = vmatprep.subr.mxu0 0.0
    %1593 = vmatpush1.msra.mxu0 0.0
    %1594 = vmatprep.subr.mxu0 0.0
    %1595 = vmatpush1.msra.mxu0 0.0
    %1596 = vmatprep.subr.mxu0 0.0
    %1597 = vmatpush1.msra.mxu0 0.0
    %1598 = vmatprep.mubr.f32.mxu0 0.0
    %1599 = vmatmul.mubr.f32.gmra.mrb[0].mxu0 %v1530
    %v1600 = vpop.f32.mrb[0].mxu0
    %v1601 = vadd.f32 0.0, %v1600
    %v1602 = vpop.f32.mrb[0].mxu0
    %1603 = vmatprep.mubr.f32.mxu0 0.0
    %1604 = vmatmul.mubr.f32.gmra.mrb[0].mxu0 %v1532
    %v1605 = vpop.f32.mrb[0].mxu0
    %v1606 = vadd.f32 0.0, %v1605
    %v1607 = vpop.f32.mrb[0].mxu0
    %1608 = vdwg.mxu0
    %v1609 = vadd.f32 %v1524, %v1601
    %v1610 = vadd.f32 %v1525, %v1606
    %v1611 = vmul.f32 %v1521, 0.5
    %v1612 = vmul.f32 %v1522, 0.5
    %v1613 = vtanh.pop %v1611
    %v1614 = vtanh.pop %v1612
    %v1615 = vmul.f32 %v1613, 0.5
    %v1616 = vmul.f32 %v1614, 0.5
    %v1617 = vadd.f32 %v1615, 0.5
    %v1618 = vadd.f32 %v1616, 0.5
    %v1619 = vtanh.pop %v1521
    %v1620 = vtanh.pop %v1522
    %v1621 = vmul.f32 %v1617, %v1355
    %v1622 = vmul.f32 %v1618, %v1356
    %1625 = vrot.lane.b32.xlu0 %v1619, 64
    %v1626 = vpop.permute.xlu0 %1625
    %1627 = vrot.lane.b32.xlu0 %v1620, 64
    %v1628 = vpop.permute.xlu0 %1627
    %v1631 = vmul.f32 %v1617, %v1626
    %v1632 = vmul.f32 %v1618, %v1628
    %1635 = vrot.lane.b32.xlu0 %v1631, 32
    %v1636 = vpop.permute.xlu0 %1635
    %1637 = vrot.lane.b32.xlu0 %v1632, 32
    %v1638 = vpop.permute.xlu0 %1637
    %v1641 = vadd.f32 %v1621, %v1636
    %v1642 = vadd.f32 %v1622, %v1638
    %v1643 = vtanh.pop %v1641
    %v1644 = vtanh.pop %v1642
    %1647 = vrot.lane.b32.xlu0 %v1643, 64
    %v1648 = vpop.permute.xlu0 %1647
    %1649 = vrot.lane.b32.xlu0 %v1644, 64
    %v1650 = vpop.permute.xlu0 %1649
    %v1653 = vmul.f32 %v1617, %v1648
    %v1654 = vmul.f32 %v1618, %v1650
    %v1655 = vmul.f32 %v1609, 0.5
    %v1656 = vmul.f32 %v1610, 0.5
    %v1657 = vtanh.pop %v1655
    %v1658 = vtanh.pop %v1656
    %v1659 = vmul.f32 %v1657, 0.5
    %v1660 = vmul.f32 %v1658, 0.5
    %v1661 = vadd.f32 %v1659, 0.5
    %v1662 = vadd.f32 %v1660, 0.5
    %v1663 = vtanh.pop %v1609
    %v1664 = vtanh.pop %v1610
    %v1665 = vmul.f32 %v1661, %v1399
    %v1666 = vmul.f32 %v1662, %v1400
    %1669 = vrot.lane.b32.xlu0 %v1663, 64
    %v1670 = vpop.permute.xlu0 %1669
    %1671 = vrot.lane.b32.xlu0 %v1664, 64
    %v1672 = vpop.permute.xlu0 %1671
    %v1675 = vmul.f32 %v1661, %v1670
    %v1676 = vmul.f32 %v1662, %v1672
    %1679 = vrot.lane.b32.xlu0 %v1675, 32
    %v1680 = vpop.permute.xlu0 %1679
    %1681 = vrot.lane.b32.xlu0 %v1676, 32
    %v1682 = vpop.permute.xlu0 %1681
    %v1685 = vadd.f32 %v1665, %v1680
    %v1686 = vadd.f32 %v1666, %v1682
    %v1687 = vtanh.pop %v1685
    %v1688 = vtanh.pop %v1686
    %1691 = vrot.lane.b32.xlu0 %v1687, 64
    %v1692 = vpop.permute.xlu0 %1691
    %1693 = vrot.lane.b32.xlu0 %v1688, 64
    %v1694 = vpop.permute.xlu0 %1693
    %v1697 = vmul.f32 %v1661, %v1692
    %v1698 = vmul.f32 %v1662, %v1694
    %1701 = vrot.lane.b32.xlu0 %v1653, 32
    %v1702 = vpop.permute.xlu0 %1701
    %1703 = vrot.lane.b32.xlu0 %v1654, 32
    %v1704 = vpop.permute.xlu0 %1703
    %s1707 = scalar_lea.vmem [#allocation19], 48
    %1708 = vst.msk [vmem:[%s1707] sm:$0xff] %vm564, %v1702
    %1709 = vst.msk [vmem:[%s1707 + $0x8] sm:$0xff] %vm564, %v1704
    %1712 = vrot.lane.b32.xlu0 %v1697, 32
    %v1713 = vpop.permute.xlu0 %1712
    %1714 = vrot.lane.b32.xlu0 %v1698, 32
    %v1715 = vpop.permute.xlu0 %1714
    %s1718 = scalar_lea.vmem [#allocation20], 64
    %1719 = vst.msk [vmem:[%s1718] sm:$0xff] %vm564, %v1713
    %1720 = vst.msk [vmem:[%s1718 + $0x8] sm:$0xff] %vm564, %v1715
    %s1721 = scalar_lea.vmem [#allocation2], 64
    %v1722 = vld [vmem:[%s1721] sm:$0xff]
    %v1723 = vld [vmem:[%s1721 + $0x8] sm:$0xff]
    %v1724 = vld [vmem:[#allocation16] sm:$0xff]
    %v1725 = vld [vmem:[#allocation16 + $0x8] sm:$0xff]
    %v1726 = vld [vmem:[#allocation16 + $0x10] sm:$0xff]
    %v1727 = vld [vmem:[#allocation16 + $0x18] sm:$0xff]
    %v1728 = vsel %vm564, %v1702, 0
    %v1730 = vsel %vm564, %v1704, 0
    %1732 = vmatprep.subr.mxu0 0.0
    %1733 = vmatpush1.msra.mxu0 %v1724
    %1734 = vmatprep.subr.mxu0 0.0
    %1735 = vmatpush1.msra.mxu0 %v1725
    %1736 = vmatprep.subr.mxu0 0.0
    %1737 = vmatpush1.msra.mxu0 %v1726
    %1738 = vmatprep.subr.mxu0 0.0
    %1739 = vmatpush1.msra.mxu0 %v1727
    %1740 = vmatprep.subr.mxu0 0.0
    %1741 = vmatpush1.msra.mxu0 0.0
    %1742 = vmatprep.subr.mxu0 0.0
    %1743 = vmatpush1.msra.mxu0 0.0
    %1744 = vmatprep.subr.mxu0 0.0
    %1745 = vmatpush1.msra.mxu0 0.0
    %1746 = vmatprep.subr.mxu0 0.0
    %1747 = vmatpush1.msra.mxu0 0.0
    %1748 = vmatprep.subr.mxu0 0.0
    %1749 = vmatpush1.msra.mxu0 0.0
    %1750 = vmatprep.subr.mxu0 0.0
    %1751 = vmatpush1.msra.mxu0 0.0
    %1752 = vmatprep.subr.mxu0 0.0
    %1753 = vmatpush1.msra.mxu0 0.0
    %1754 = vmatprep.subr.mxu0 0.0
    %1755 = vmatpush1.msra.mxu0 0.0
    %1756 = vmatprep.subr.mxu0 0.0
    %1757 = vmatpush1.msra.mxu0 0.0
    %1758 = vmatprep.subr.mxu0 0.0
    %1759 = vmatpush1.msra.mxu0 0.0
    %1760 = vmatprep.subr.mxu0 0.0
    %1761 = vmatpush1.msra.mxu0 0.0
    %1762 = vmatprep.subr.mxu0 0.0
    %1763 = vmatpush1.msra.mxu0 0.0
    %1764 = vmatprep.subr.mxu0 0.0
    %1765 = vmatpush1.msra.mxu0 0.0
    %1766 = vmatprep.subr.mxu0 0.0
    %1767 = vmatpush1.msra.mxu0 0.0
    %1768 = vmatprep.subr.mxu0 0.0
    %1769 = vmatpush1.msra.mxu0 0.0
    %1770 = vmatprep.subr.mxu0 0.0
    %1771 = vmatpush1.msra.mxu0 0.0
    %1772 = vmatprep.subr.mxu0 0.0
    %1773 = vmatpush1.msra.mxu0 0.0
    %1774 = vmatprep.subr.mxu0 0.0
    %1775 = vmatpush1.msra.mxu0 0.0
    %1776 = vmatprep.subr.mxu0 0.0
    %1777 = vmatpush1.msra.mxu0 0.0
    %1778 = vmatprep.subr.mxu0 0.0
    %1779 = vmatpush1.msra.mxu0 0.0
    %1780 = vmatprep.subr.mxu0 0.0
    %1781 = vmatpush1.msra.mxu0 0.0
    %1782 = vmatprep.subr.mxu0 0.0
    %1783 = vmatpush1.msra.mxu0 0.0
    %1784 = vmatprep.subr.mxu0 0.0
    %1785 = vmatpush1.msra.mxu0 0.0
    %1786 = vmatprep.subr.mxu0 0.0
    %1787 = vmatpush1.msra.mxu0 0.0
    %1788 = vmatprep.subr.mxu0 0.0
    %1789 = vmatpush1.msra.mxu0 0.0
    %1790 = vmatprep.subr.mxu0 0.0
    %1791 = vmatpush1.msra.mxu0 0.0
    %1792 = vmatprep.subr.mxu0 0.0
    %1793 = vmatpush1.msra.mxu0 0.0
    %1794 = vmatprep.subr.mxu0 0.0
    %1795 = vmatpush1.msra.mxu0 0.0
    %1796 = vmatprep.mubr.f32.mxu0 0.0
    %1797 = vmatmul.mubr.f32.gmra.mrb[0].mxu0 %v1728
    %v1798 = vpop.f32.mrb[0].mxu0
    %v1799 = vadd.f32 0.0, %v1798
    %v1800 = vpop.f32.mrb[0].mxu0
    %1801 = vmatprep.mubr.f32.mxu0 0.0
    %1802 = vmatmul.mubr.f32.gmra.mrb[0].mxu0 %v1730
    %v1803 = vpop.f32.mrb[0].mxu0
    %v1804 = vadd.f32 0.0, %v1803
    %v1805 = vpop.f32.mrb[0].mxu0
    %1806 = vdwg.mxu0
    %v1807 = vadd.f32 %v1722, %v1799
    %v1808 = vadd.f32 %v1723, %v1804
    %s1809 = scalar_lea.vmem [#allocation3], 48
    %v1810 = vld [vmem:[%s1809] sm:$0xff]
    %v1811 = vld [vmem:[%s1809 + $0x8] sm:$0xff]
    %v1812 = vld [vmem:[#allocation17] sm:$0xff]
    %v1813 = vld [vmem:[#allocation17 + $0x8] sm:$0xff]
    %v1814 = vld [vmem:[#allocation17 + $0x10] sm:$0xff]
    %v1815 = vld [vmem:[#allocation17 + $0x18] sm:$0xff]
    %v1816 = vsel %vm564, %v1713, 0
    %v1818 = vsel %vm564, %v1715, 0
    %1820 = vmatprep.subr.mxu0 0.0
    %1821 = vmatpush1.msra.mxu0 %v1812
    %1822 = vmatprep.subr.mxu0 0.0
    %1823 = vmatpush1.msra.mxu0 %v1813
    %1824 = vmatprep.subr.mxu0 0.0
    %1825 = vmatpush1.msra.mxu0 %v1814
    %1826 = vmatprep.subr.mxu0 0.0
    %1827 = vmatpush1.msra.mxu0 %v1815
    %1828 = vmatprep.subr.mxu0 0.0
    %1829 = vmatpush1.msra.mxu0 0.0
    %1830 = vmatprep.subr.mxu0 0.0
    %1831 = vmatpush1.msra.mxu0 0.0
    %1832 = vmatprep.subr.mxu0 0.0
    %1833 = vmatpush1.msra.mxu0 0.0
    %1834 = vmatprep.subr.mxu0 0.0
    %1835 = vmatpush1.msra.mxu0 0.0
    %1836 = vmatprep.subr.mxu0 0.0
    %1837 = vmatpush1.msra.mxu0 0.0
    %1838 = vmatprep.subr.mxu0 0.0
    %1839 = vmatpush1.msra.mxu0 0.0
    %1840 = vmatprep.subr.mxu0 0.0
    %1841 = vmatpush1.msra.mxu0 0.0
    %1842 = vmatprep.subr.mxu0 0.0
    %1843 = vmatpush1.msra.mxu0 0.0
    %1844 = vmatprep.subr.mxu0 0.0
    %1845 = vmatpush1.msra.mxu0 0.0
    %1846 = vmatprep.subr.mxu0 0.0
    %1847 = vmatpush1.msra.mxu0 0.0
    %1848 = vmatprep.subr.mxu0 0.0
    %1849 = vmatpush1.msra.mxu0 0.0
    %1850 = vmatprep.subr.mxu0 0.0
    %1851 = vmatpush1.msra.mxu0 0.0
    %1852 = vmatprep.subr.mxu0 0.0
    %1853 = vmatpush1.msra.mxu0 0.0
    %1854 = vmatprep.subr.mxu0 0.0
    %1855 = vmatpush1.msra.mxu0 0.0
    %1856 = vmatprep.subr.mxu0 0.0
    %1857 = vmatpush1.msra.mxu0 0.0
    %1858 = vmatprep.subr.mxu0 0.0
    %1859 = vmatpush1.msra.mxu0 0.0
    %1860 = vmatprep.subr.mxu0 0.0
    %1861 = vmatpush1.msra.mxu0 0.0
    %1862 = vmatprep.subr.mxu0 0.0
    %1863 = vmatpush1.msra.mxu0 0.0
    %1864 = vmatprep.subr.mxu0 0.0
    %1865 = vmatpush1.msra.mxu0 0.0
    %1866 = vmatprep.subr.mxu0 0.0
    %1867 = vmatpush1.msra.mxu0 0.0
    %1868 = vmatprep.subr.mxu0 0.0
    %1869 = vmatpush1.msra.mxu0 0.0
    %1870 = vmatprep.subr.mxu0 0.0
    %1871 = vmatpush1.msra.mxu0 0.0
    %1872 = vmatprep.subr.mxu0 0.0
    %1873 = vmatpush1.msra.mxu0 0.0
    %1874 = vmatprep.subr.mxu0 0.0
    %1875 = vmatpush1.msra.mxu0 0.0
    %1876 = vmatprep.subr.mxu0 0.0
    %1877 = vmatpush1.msra.mxu0 0.0
    %1878 = vmatprep.subr.mxu0 0.0
    %1879 = vmatpush1.msra.mxu0 0.0
    %1880 = vmatprep.subr.mxu0 0.0
    %1881 = vmatpush1.msra.mxu0 0.0
    %1882 = vmatprep.subr.mxu0 0.0
    %1883 = vmatpush1.msra.mxu0 0.0
    %1884 = vmatprep.mubr.f32.mxu0 0.0
    %1885 = vmatmul.mubr.f32.gmra.mrb[0].mxu0 %v1816
    %v1886 = vpop.f32.mrb[0].mxu0
    %v1887 = vadd.f32 0.0, %v1886
    %v1888 = vpop.f32.mrb[0].mxu0
    %1889 = vmatprep.mubr.f32.mxu0 0.0
    %1890 = vmatmul.mubr.f32.gmra.mrb[0].mxu0 %v1818
    %v1891 = vpop.f32.mrb[0].mxu0
    %v1892 = vadd.f32 0.0, %v1891
    %v1893 = vpop.f32.mrb[0].mxu0
    %1894 = vdwg.mxu0
    %v1895 = vadd.f32 %v1810, %v1887
    %v1896 = vadd.f32 %v1811, %v1892
    %v1897 = vmul.f32 %v1807, 0.5
    %v1898 = vmul.f32 %v1808, 0.5
    %v1899 = vtanh.pop %v1897
    %v1900 = vtanh.pop %v1898
    %v1901 = vmul.f32 %v1899, 0.5
    %v1902 = vmul.f32 %v1900, 0.5
    %v1903 = vadd.f32 %v1901, 0.5
    %v1904 = vadd.f32 %v1902, 0.5
    %v1905 = vtanh.pop %v1807
    %v1906 = vtanh.pop %v1808
    %v1907 = vmul.f32 %v1903, %v1641
    %v1908 = vmul.f32 %v1904, %v1642
    %1911 = vrot.lane.b32.xlu0 %v1905, 64
    %v1912 = vpop.permute.xlu0 %1911
    %1913 = vrot.lane.b32.xlu0 %v1906, 64
    %v1914 = vpop.permute.xlu0 %1913
    %v1917 = vmul.f32 %v1903, %v1912
    %v1918 = vmul.f32 %v1904, %v1914
    %1921 = vrot.lane.b32.xlu0 %v1917, 32
    %v1922 = vpop.permute.xlu0 %1921
    %1923 = vrot.lane.b32.xlu0 %v1918, 32
    %v1924 = vpop.permute.xlu0 %1923
    %v1927 = vadd.f32 %v1907, %v1922
    %v1928 = vadd.f32 %v1908, %v1924
    %v1929 = vtanh.pop %v1927
    %v1930 = vtanh.pop %v1928
    %1933 = vrot.lane.b32.xlu0 %v1929, 64
    %v1934 = vpop.permute.xlu0 %1933
    %1935 = vrot.lane.b32.xlu0 %v1930, 64
    %v1936 = vpop.permute.xlu0 %1935
    %v1939 = vmul.f32 %v1903, %v1934
    %v1940 = vmul.f32 %v1904, %v1936
    %v1941 = vmul.f32 %v1895, 0.5
    %v1942 = vmul.f32 %v1896, 0.5
    %v1943 = vtanh.pop %v1941
    %v1944 = vtanh.pop %v1942
    %v1945 = vmul.f32 %v1943, 0.5
    %v1946 = vmul.f32 %v1944, 0.5
    %v1947 = vadd.f32 %v1945, 0.5
    %v1948 = vadd.f32 %v1946, 0.5
    %v1949 = vtanh.pop %v1895
    %v1950 = vtanh.pop %v1896
    %v1951 = vmul.f32 %v1947, %v1685
    %v1952 = vmul.f32 %v1948, %v1686
    %1955 = vrot.lane.b32.xlu0 %v1949, 64
    %v1956 = vpop.permute.xlu0 %1955
    %1957 = vrot.lane.b32.xlu0 %v1950, 64
    %v1958 = vpop.permute.xlu0 %1957
    %v1961 = vmul.f32 %v1947, %v1956
    %v1962 = vmul.f32 %v1948, %v1958
    %1965 = vrot.lane.b32.xlu0 %v1961, 32
    %v1966 = vpop.permute.xlu0 %1965
    %1967 = vrot.lane.b32.xlu0 %v1962, 32
    %v1968 = vpop.permute.xlu0 %1967
    %v1971 = vadd.f32 %v1951, %v1966
    %v1972 = vadd.f32 %v1952, %v1968
    %v1973 = vtanh.pop %v1971
    %v1974 = vtanh.pop %v1972
    %1977 = vrot.lane.b32.xlu0 %v1973, 64
    %v1978 = vpop.permute.xlu0 %1977
    %1979 = vrot.lane.b32.xlu0 %v1974, 64
    %v1980 = vpop.permute.xlu0 %1979
    %v1983 = vmul.f32 %v1947, %v1978
    %v1984 = vmul.f32 %v1948, %v1980
    %1987 = vrot.lane.b32.xlu0 %v1939, 32
    %v1988 = vpop.permute.xlu0 %1987
    %1989 = vrot.lane.b32.xlu0 %v1940, 32
    %v1990 = vpop.permute.xlu0 %1989
    %s1993 = scalar_lea.vmem [#allocation19], 64
    %1994 = vst.msk [vmem:[%s1993] sm:$0xff] %vm564, %v1988
    %1995 = vst.msk [vmem:[%s1993 + $0x8] sm:$0xff] %vm564, %v1990
    %1998 = vrot.lane.b32.xlu0 %v1983, 32
    %v1999 = vpop.permute.xlu0 %1998
    %2000 = vrot.lane.b32.xlu0 %v1984, 32
    %v2001 = vpop.permute.xlu0 %2000
    %s2004 = scalar_lea.vmem [#allocation20], 48
    %2005 = vst.msk [vmem:[%s2004] sm:$0xff] %vm564, %v1999
    %2006 = vst.msk [vmem:[%s2004 + $0x8] sm:$0xff] %vm564, %v2001
    %s2007 = scalar_lea.vmem [#allocation2], 80
    %v2008 = vld [vmem:[%s2007] sm:$0xff]
    %v2009 = vld [vmem:[%s2007 + $0x8] sm:$0xff]
    %v2010 = vld [vmem:[#allocation16] sm:$0xff]
    %v2011 = vld [vmem:[#allocation16 + $0x8] sm:$0xff]
    %v2012 = vld [vmem:[#allocation16 + $0x10] sm:$0xff]
    %v2013 = vld [vmem:[#allocation16 + $0x18] sm:$0xff]
    %v2014 = vsel %vm564, %v1988, 0
    %v2016 = vsel %vm564, %v1990, 0
    %2018 = vmatprep.subr.mxu0 0.0
    %2019 = vmatpush1.msra.mxu0 %v2010
    %2020 = vmatprep.subr.mxu0 0.0
    %2021 = vmatpush1.msra.mxu0 %v2011
    %2022 = vmatprep.subr.mxu0 0.0
    %2023 = vmatpush1.msra.mxu0 %v2012
    %2024 = vmatprep.subr.mxu0 0.0
    %2025 = vmatpush1.msra.mxu0 %v2013
    %2026 = vmatprep.subr.mxu0 0.0
    %2027 = vmatpush1.msra.mxu0 0.0
    %2028 = vmatprep.subr.mxu0 0.0
    %2029 = vmatpush1.msra.mxu0 0.0
    %2030 = vmatprep.subr.mxu0 0.0
    %2031 = vmatpush1.msra.mxu0 0.0
    %2032 = vmatprep.subr.mxu0 0.0
    %2033 = vmatpush1.msra.mxu0 0.0
    %2034 = vmatprep.subr.mxu0 0.0
    %2035 = vmatpush1.msra.mxu0 0.0
    %2036 = vmatprep.subr.mxu0 0.0
    %2037 = vmatpush1.msra.mxu0 0.0
    %2038 = vmatprep.subr.mxu0 0.0
    %2039 = vmatpush1.msra.mxu0 0.0
    %2040 = vmatprep.subr.mxu0 0.0
    %2041 = vmatpush1.msra.mxu0 0.0
    %2042 = vmatprep.subr.mxu0 0.0
    %2043 = vmatpush1.msra.mxu0 0.0
    %2044 = vmatprep.subr.mxu0 0.0
    %2045 = vmatpush1.msra.mxu0 0.0
    %2046 = vmatprep.subr.mxu0 0.0
    %2047 = vmatpush1.msra.mxu0 0.0
    %2048 = vmatprep.subr.mxu0 0.0
    %2049 = vmatpush1.msra.mxu0 0.0
    %2050 = vmatprep.subr.mxu0 0.0
    %2051 = vmatpush1.msra.mxu0 0.0
    %2052 = vmatprep.subr.mxu0 0.0
    %2053 = vmatpush1.msra.mxu0 0.0
    %2054 = vmatprep.subr.mxu0 0.0
    %2055 = vmatpush1.msra.mxu0 0.0
    %2056 = vmatprep.subr.mxu0 0.0
    %2057 = vmatpush1.msra.mxu0 0.0
    %2058 = vmatprep.subr.mxu0 0.0
    %2059 = vmatpush1.msra.mxu0 0.0
    %2060 = vmatprep.subr.mxu0 0.0
    %2061 = vmatpush1.msra.mxu0 0.0
    %2062 = vmatprep.subr.mxu0 0.0
    %2063 = vmatpush1.msra.mxu0 0.0
    %2064 = vmatprep.subr.mxu0 0.0
    %2065 = vmatpush1.msra.mxu0 0.0
    %2066 = vmatprep.subr.mxu0 0.0
    %2067 = vmatpush1.msra.mxu0 0.0
    %2068 = vmatprep.subr.mxu0 0.0
    %2069 = vmatpush1.msra.mxu0 0.0
    %2070 = vmatprep.subr.mxu0 0.0
    %2071 = vmatpush1.msra.mxu0 0.0
    %2072 = vmatprep.subr.mxu0 0.0
    %2073 = vmatpush1.msra.mxu0 0.0
    %2074 = vmatprep.subr.mxu0 0.0
    %2075 = vmatpush1.msra.mxu0 0.0
    %2076 = vmatprep.subr.mxu0 0.0
    %2077 = vmatpush1.msra.mxu0 0.0
    %2078 = vmatprep.subr.mxu0 0.0
    %2079 = vmatpush1.msra.mxu0 0.0
    %2080 = vmatprep.subr.mxu0 0.0
    %2081 = vmatpush1.msra.mxu0 0.0
    %2082 = vmatprep.mubr.f32.mxu0 0.0
    %2083 = vmatmul.mubr.f32.gmra.mrb[0].mxu0 %v2014
    %v2084 = vpop.f32.mrb[0].mxu0
    %v2085 = vadd.f32 0.0, %v2084
    %v2086 = vpop.f32.mrb[0].mxu0
    %2087 = vmatprep.mubr.f32.mxu0 0.0
    %2088 = vmatmul.mubr.f32.gmra.mrb[0].mxu0 %v2016
    %v2089 = vpop.f32.mrb[0].mxu0
    %v2090 = vadd.f32 0.0, %v2089
    %v2091 = vpop.f32.mrb[0].mxu0
    %2092 = vdwg.mxu0
    %v2093 = vadd.f32 %v2008, %v2085
    %v2094 = vadd.f32 %v2009, %v2090
    %s2095 = scalar_lea.vmem [#allocation3], 32
    %v2096 = vld [vmem:[%s2095] sm:$0xff]
    %v2097 = vld [vmem:[%s2095 + $0x8] sm:$0xff]
    %v2098 = vld [vmem:[#allocation17] sm:$0xff]
    %v2099 = vld [vmem:[#allocation17 + $0x8] sm:$0xff]
    %v2100 = vld [vmem:[#allocation17 + $0x10] sm:$0xff]
    %v2101 = vld [vmem:[#allocation17 + $0x18] sm:$0xff]
    %v2102 = vsel %vm564, %v1999, 0
    %v2104 = vsel %vm564, %v2001, 0
    %2106 = vmatprep.subr.mxu0 0.0
    %2107 = vmatpush1.msra.mxu0 %v2098
    %2108 = vmatprep.subr.mxu0 0.0
    %2109 = vmatpush1.msra.mxu0 %v2099
    %2110 = vmatprep.subr.mxu0 0.0
    %2111 = vmatpush1.msra.mxu0 %v2100
    %2112 = vmatprep.subr.mxu0 0.0
    %2113 = vmatpush1.msra.mxu0 %v2101
    %2114 = vmatprep.subr.mxu0 0.0
    %2115 = vmatpush1.msra.mxu0 0.0
    %2116 = vmatprep.subr.mxu0 0.0
    %2117 = vmatpush1.msra.mxu0 0.0
    %2118 = vmatprep.subr.mxu0 0.0
    %2119 = vmatpush1.msra.mxu0 0.0
    %2120 = vmatprep.subr.mxu0 0.0
    %2121 = vmatpush1.msra.mxu0 0.0
    %2122 = vmatprep.subr.mxu0 0.0
    %2123 = vmatpush1.msra.mxu0 0.0
    %2124 = vmatprep.subr.mxu0 0.0
    %2125 = vmatpush1.msra.mxu0 0.0
    %2126 = vmatprep.subr.mxu0 0.0
    %2127 = vmatpush1.msra.mxu0 0.0
    %2128 = vmatprep.subr.mxu0 0.0
    %2129 = vmatpush1.msra.mxu0 0.0
    %2130 = vmatprep.subr.mxu0 0.0
    %2131 = vmatpush1.msra.mxu0 0.0
    %2132 = vmatprep.subr.mxu0 0.0
    %2133 = vmatpush1.msra.mxu0 0.0
    %2134 = vmatprep.subr.mxu0 0.0
    %2135 = vmatpush1.msra.mxu0 0.0
    %2136 = vmatprep.subr.mxu0 0.0
    %2137 = vmatpush1.msra.mxu0 0.0
    %2138 = vmatprep.subr.mxu0 0.0
    %2139 = vmatpush1.msra.mxu0 0.0
    %2140 = vmatprep.subr.mxu0 0.0
    %2141 = vmatpush1.msra.mxu0 0.0
    %2142 = vmatprep.subr.mxu0 0.0
    %2143 = vmatpush1.msra.mxu0 0.0
    %2144 = vmatprep.subr.mxu0 0.0
    %2145 = vmatpush1.msra.mxu0 0.0
    %2146 = vmatprep.subr.mxu0 0.0
    %2147 = vmatpush1.msra.mxu0 0.0
    %2148 = vmatprep.subr.mxu0 0.0
    %2149 = vmatpush1.msra.mxu0 0.0
    %2150 = vmatprep.subr.mxu0 0.0
    %2151 = vmatpush1.msra.mxu0 0.0
    %2152 = vmatprep.subr.mxu0 0.0
    %2153 = vmatpush1.msra.mxu0 0.0
    %2154 = vmatprep.subr.mxu0 0.0
    %2155 = vmatpush1.msra.mxu0 0.0
    %2156 = vmatprep.subr.mxu0 0.0
    %2157 = vmatpush1.msra.mxu0 0.0
    %2158 = vmatprep.subr.mxu0 0.0
    %2159 = vmatpush1.msra.mxu0 0.0
    %2160 = vmatprep.subr.mxu0 0.0
    %2161 = vmatpush1.msra.mxu0 0.0
    %2162 = vmatprep.subr.mxu0 0.0
    %2163 = vmatpush1.msra.mxu0 0.0
    %2164 = vmatprep.subr.mxu0 0.0
    %2165 = vmatpush1.msra.mxu0 0.0
    %2166 = vmatprep.subr.mxu0 0.0
    %2167 = vmatpush1.msra.mxu0 0.0
    %2168 = vmatprep.subr.mxu0 0.0
    %2169 = vmatpush1.msra.mxu0 0.0
    %2170 = vmatprep.mubr.f32.mxu0 0.0
    %2171 = vmatmul.mubr.f32.gmra.mrb[0].mxu0 %v2102
    %v2172 = vpop.f32.mrb[0].mxu0
    %v2173 = vadd.f32 0.0, %v2172
    %v2174 = vpop.f32.mrb[0].mxu0
    %2175 = vmatprep.mubr.f32.mxu0 0.0
    %2176 = vmatmul.mubr.f32.gmra.mrb[0].mxu0 %v2104
    %v2177 = vpop.f32.mrb[0].mxu0
    %v2178 = vadd.f32 0.0, %v2177
    %v2179 = vpop.f32.mrb[0].mxu0
    %2180 = vdwg.mxu0
    %v2181 = vadd.f32 %v2096, %v2173
    %v2182 = vadd.f32 %v2097, %v2178
    %v2183 = vmul.f32 %v2093, 0.5
    %v2184 = vmul.f32 %v2094, 0.5
    %v2185 = vtanh.pop %v2183
    %v2186 = vtanh.pop %v2184
    %v2187 = vmul.f32 %v2185, 0.5
    %v2188 = vmul.f32 %v2186, 0.5
    %v2189 = vadd.f32 %v2187, 0.5
    %v2190 = vadd.f32 %v2188, 0.5
    %v2191 = vtanh.pop %v2093
    %v2192 = vtanh.pop %v2094
    %v2193 = vmul.f32 %v2189, %v1927
    %v2194 = vmul.f32 %v2190, %v1928
    %2197 = vrot.lane.b32.xlu0 %v2191, 64
    %v2198 = vpop.permute.xlu0 %2197
    %2199 = vrot.lane.b32.xlu0 %v2192, 64
    %v2200 = vpop.permute.xlu0 %2199
    %v2203 = vmul.f32 %v2189, %v2198
    %v2204 = vmul.f32 %v2190, %v2200
    %2207 = vrot.lane.b32.xlu0 %v2203, 32
    %v2208 = vpop.permute.xlu0 %2207
    %2209 = vrot.lane.b32.xlu0 %v2204, 32
    %v2210 = vpop.permute.xlu0 %2209
    %v2213 = vadd.f32 %v2193, %v2208
    %v2214 = vadd.f32 %v2194, %v2210
    %v2215 = vtanh.pop %v2213
    %v2216 = vtanh.pop %v2214
    %2219 = vrot.lane.b32.xlu0 %v2215, 64
    %v2220 = vpop.permute.xlu0 %2219
    %2221 = vrot.lane.b32.xlu0 %v2216, 64
    %v2222 = vpop.permute.xlu0 %2221
    %v2225 = vmul.f32 %v2189, %v2220
    %v2226 = vmul.f32 %v2190, %v2222
    %v2227 = vmul.f32 %v2181, 0.5
    %v2228 = vmul.f32 %v2182, 0.5
    %v2229 = vtanh.pop %v2227
    %v2230 = vtanh.pop %v2228
    %v2231 = vmul.f32 %v2229, 0.5
    %v2232 = vmul.f32 %v2230, 0.5
    %v2233 = vadd.f32 %v2231, 0.5
    %v2234 = vadd.f32 %v2232, 0.5
    %v2235 = vtanh.pop %v2181
    %v2236 = vtanh.pop %v2182
    %v2237 = vmul.f32 %v2233, %v1971
    %v2238 = vmul.f32 %v2234, %v1972
    %2241 = vrot.lane.b32.xlu0 %v2235, 64
    %v2242 = vpop.permute.xlu0 %2241
    %2243 = vrot.lane.b32.xlu0 %v2236, 64
    %v2244 = vpop.permute.xlu0 %2243
    %v2247 = vmul.f32 %v2233, %v2242
    %v2248 = vmul.f32 %v2234, %v2244
    %2251 = vrot.lane.b32.xlu0 %v2247, 32
    %v2252 = vpop.permute.xlu0 %2251
    %2253 = vrot.lane.b32.xlu0 %v2248, 32
    %v2254 = vpop.permute.xlu0 %2253
    %v2257 = vadd.f32 %v2237, %v2252
    %v2258 = vadd.f32 %v2238, %v2254
    %v2259 = vtanh.pop %v2257
    %v2260 = vtanh.pop %v2258
    %2263 = vrot.lane.b32.xlu0 %v2259, 64
    %v2264 = vpop.permute.xlu0 %2263
    %2265 = vrot.lane.b32.xlu0 %v2260, 64
    %v2266 = vpop.permute.xlu0 %2265
    %v2269 = vmul.f32 %v2233, %v2264
    %v2270 = vmul.f32 %v2234, %v2266
    %2273 = vrot.lane.b32.xlu0 %v2225, 32
    %v2274 = vpop.permute.xlu0 %2273
    %2275 = vrot.lane.b32.xlu0 %v2226, 32
    %v2276 = vpop.permute.xlu0 %2275
    %s2279 = scalar_lea.vmem [#allocation19], 80
    %2280 = vst.msk [vmem:[%s2279] sm:$0xff] %vm564, %v2274
    %2281 = vst.msk [vmem:[%s2279 + $0x8] sm:$0xff] %vm564, %v2276
    %2284 = vrot.lane.b32.xlu0 %v2269, 32
    %v2285 = vpop.permute.xlu0 %2284
    %2286 = vrot.lane.b32.xlu0 %v2270, 32
    %v2287 = vpop.permute.xlu0 %2286
    %s2290 = scalar_lea.vmem [#allocation20], 32
    %2291 = vst.msk [vmem:[%s2290] sm:$0xff] %vm564, %v2285
    %2292 = vst.msk [vmem:[%s2290 + $0x8] sm:$0xff] %vm564, %v2287
    %s2293 = scalar_lea.vmem [#allocation2], 96
    %v2294 = vld [vmem:[%s2293] sm:$0xff]
    %v2295 = vld [vmem:[%s2293 + $0x8] sm:$0xff]
    %v2296 = vld [vmem:[#allocation16] sm:$0xff]
    %v2297 = vld [vmem:[#allocation16 + $0x8] sm:$0xff]
    %v2298 = vld [vmem:[#allocation16 + $0x10] sm:$0xff]
    %v2299 = vld [vmem:[#allocation16 + $0x18] sm:$0xff]
    %v2300 = vsel %vm564, %v2274, 0
    %v2302 = vsel %vm564, %v2276, 0
    %2304 = vmatprep.subr.mxu0 0.0
    %2305 = vmatpush1.msra.mxu0 %v2296
    %2306 = vmatprep.subr.mxu0 0.0
    %2307 = vmatpush1.msra.mxu0 %v2297
    %2308 = vmatprep.subr.mxu0 0.0
    %2309 = vmatpush1.msra.mxu0 %v2298
    %2310 = vmatprep.subr.mxu0 0.0
    %2311 = vmatpush1.msra.mxu0 %v2299
    %2312 = vmatprep.subr.mxu0 0.0
    %2313 = vmatpush1.msra.mxu0 0.0
    %2314 = vmatprep.subr.mxu0 0.0
    %2315 = vmatpush1.msra.mxu0 0.0
    %2316 = vmatprep.subr.mxu0 0.0
    %2317 = vmatpush1.msra.mxu0 0.0
    %2318 = vmatprep.subr.mxu0 0.0
    %2319 = vmatpush1.msra.mxu0 0.0
    %2320 = vmatprep.subr.mxu0 0.0
    %2321 = vmatpush1.msra.mxu0 0.0
    %2322 = vmatprep.subr.mxu0 0.0
    %2323 = vmatpush1.msra.mxu0 0.0
    %2324 = vmatprep.subr.mxu0 0.0
    %2325 = vmatpush1.msra.mxu0 0.0
    %2326 = vmatprep.subr.mxu0 0.0
    %2327 = vmatpush1.msra.mxu0 0.0
    %2328 = vmatprep.subr.mxu0 0.0
    %2329 = vmatpush1.msra.mxu0 0.0
    %2330 = vmatprep.subr.mxu0 0.0
    %2331 = vmatpush1.msra.mxu0 0.0
    %2332 = vmatprep.subr.mxu0 0.0
    %2333 = vmatpush1.msra.mxu0 0.0
    %2334 = vmatprep.subr.mxu0 0.0
    %2335 = vmatpush1.msra.mxu0 0.0
    %2336 = vmatprep.subr.mxu0 0.0
    %2337 = vmatpush1.msra.mxu0 0.0
    %2338 = vmatprep.subr.mxu0 0.0
    %2339 = vmatpush1.msra.mxu0 0.0
    %2340 = vmatprep.subr.mxu0 0.0
    %2341 = vmatpush1.msra.mxu0 0.0
    %2342 = vmatprep.subr.mxu0 0.0
    %2343 = vmatpush1.msra.mxu0 0.0
    %2344 = vmatprep.subr.mxu0 0.0
    %2345 = vmatpush1.msra.mxu0 0.0
    %2346 = vmatprep.subr.mxu0 0.0
    %2347 = vmatpush1.msra.mxu0 0.0
    %2348 = vmatprep.subr.mxu0 0.0
    %2349 = vmatpush1.msra.mxu0 0.0
    %2350 = vmatprep.subr.mxu0 0.0
    %2351 = vmatpush1.msra.mxu0 0.0
    %2352 = vmatprep.subr.mxu0 0.0
    %2353 = vmatpush1.msra.mxu0 0.0
    %2354 = vmatprep.subr.mxu0 0.0
    %2355 = vmatpush1.msra.mxu0 0.0
    %2356 = vmatprep.subr.mxu0 0.0
    %2357 = vmatpush1.msra.mxu0 0.0
    %2358 = vmatprep.subr.mxu0 0.0
    %2359 = vmatpush1.msra.mxu0 0.0
    %2360 = vmatprep.subr.mxu0 0.0
    %2361 = vmatpush1.msra.mxu0 0.0
    %2362 = vmatprep.subr.mxu0 0.0
    %2363 = vmatpush1.msra.mxu0 0.0
    %2364 = vmatprep.subr.mxu0 0.0
    %2365 = vmatpush1.msra.mxu0 0.0
    %2366 = vmatprep.subr.mxu0 0.0
    %2367 = vmatpush1.msra.mxu0 0.0
    %2368 = vmatprep.mubr.f32.mxu0 0.0
    %2369 = vmatmul.mubr.f32.gmra.mrb[0].mxu0 %v2300
    %v2370 = vpop.f32.mrb[0].mxu0
    %v2371 = vadd.f32 0.0, %v2370
    %v2372 = vpop.f32.mrb[0].mxu0
    %2373 = vmatprep.mubr.f32.mxu0 0.0
    %2374 = vmatmul.mubr.f32.gmra.mrb[0].mxu0 %v2302
    %v2375 = vpop.f32.mrb[0].mxu0
    %v2376 = vadd.f32 0.0, %v2375
    %v2377 = vpop.f32.mrb[0].mxu0
    %2378 = vdwg.mxu0
    %v2379 = vadd.f32 %v2294, %v2371
    %v2380 = vadd.f32 %v2295, %v2376
    %s2381 = scalar_lea.vmem [#allocation3], 16
    %v2382 = vld [vmem:[%s2381] sm:$0xff]
    %v2383 = vld [vmem:[%s2381 + $0x8] sm:$0xff]
    %v2384 = vld [vmem:[#allocation17] sm:$0xff]
    %v2385 = vld [vmem:[#allocation17 + $0x8] sm:$0xff]
    %v2386 = vld [vmem:[#allocation17 + $0x10] sm:$0xff]
    %v2387 = vld [vmem:[#allocation17 + $0x18] sm:$0xff]
    %v2388 = vsel %vm564, %v2285, 0
    %v2390 = vsel %vm564, %v2287, 0
    %2392 = vmatprep.subr.mxu0 0.0
    %2393 = vmatpush1.msra.mxu0 %v2384
    %2394 = vmatprep.subr.mxu0 0.0
    %2395 = vmatpush1.msra.mxu0 %v2385
    %2396 = vmatprep.subr.mxu0 0.0
    %2397 = vmatpush1.msra.mxu0 %v2386
    %2398 = vmatprep.subr.mxu0 0.0
    %2399 = vmatpush1.msra.mxu0 %v2387
    %2400 = vmatprep.subr.mxu0 0.0
    %2401 = vmatpush1.msra.mxu0 0.0
    %2402 = vmatprep.subr.mxu0 0.0
    %2403 = vmatpush1.msra.mxu0 0.0
    %2404 = vmatprep.subr.mxu0 0.0
    %2405 = vmatpush1.msra.mxu0 0.0
    %2406 = vmatprep.subr.mxu0 0.0
    %2407 = vmatpush1.msra.mxu0 0.0
    %2408 = vmatprep.subr.mxu0 0.0
    %2409 = vmatpush1.msra.mxu0 0.0
    %2410 = vmatprep.subr.mxu0 0.0
    %2411 = vmatpush1.msra.mxu0 0.0
    %2412 = vmatprep.subr.mxu0 0.0
    %2413 = vmatpush1.msra.mxu0 0.0
    %2414 = vmatprep.subr.mxu0 0.0
    %2415 = vmatpush1.msra.mxu0 0.0
    %2416 = vmatprep.subr.mxu0 0.0
    %2417 = vmatpush1.msra.mxu0 0.0
    %2418 = vmatprep.subr.mxu0 0.0
    %2419 = vmatpush1.msra.mxu0 0.0
    %2420 = vmatprep.subr.mxu0 0.0
    %2421 = vmatpush1.msra.mxu0 0.0
    %2422 = vmatprep.subr.mxu0 0.0
    %2423 = vmatpush1.msra.mxu0 0.0
    %2424 = vmatprep.subr.mxu0 0.0
    %2425 = vmatpush1.msra.mxu0 0.0
    %2426 = vmatprep.subr.mxu0 0.0
    %2427 = vmatpush1.msra.mxu0 0.0
    %2428 = vmatprep.subr.mxu0 0.0
    %2429 = vmatpush1.msra.mxu0 0.0
    %2430 = vmatprep.subr.mxu0 0.0
    %2431 = vmatpush1.msra.mxu0 0.0
    %2432 = vmatprep.subr.mxu0 0.0
    %2433 = vmatpush1.msra.mxu0 0.0
    %2434 = vmatprep.subr.mxu0 0.0
    %2435 = vmatpush1.msra.mxu0 0.0
    %2436 = vmatprep.subr.mxu0 0.0
    %2437 = vmatpush1.msra.mxu0 0.0
    %2438 = vmatprep.subr.mxu0 0.0
    %2439 = vmatpush1.msra.mxu0 0.0
    %2440 = vmatprep.subr.mxu0 0.0
    %2441 = vmatpush1.msra.mxu0 0.0
    %2442 = vmatprep.subr.mxu0 0.0
    %2443 = vmatpush1.msra.mxu0 0.0
    %2444 = vmatprep.subr.mxu0 0.0
    %2445 = vmatpush1.msra.mxu0 0.0
    %2446 = vmatprep.subr.mxu0 0.0
    %2447 = vmatpush1.msra.mxu0 0.0
    %2448 = vmatprep.subr.mxu0 0.0
    %2449 = vmatpush1.msra.mxu0 0.0
    %2450 = vmatprep.subr.mxu0 0.0
    %2451 = vmatpush1.msra.mxu0 0.0
    %2452 = vmatprep.subr.mxu0 0.0
    %2453 = vmatpush1.msra.mxu0 0.0
    %2454 = vmatprep.subr.mxu0 0.0
    %2455 = vmatpush1.msra.mxu0 0.0
    %2456 = vmatprep.mubr.f32.mxu0 0.0
    %2457 = vmatmul.mubr.f32.gmra.mrb[0].mxu0 %v2388
    %v2458 = vpop.f32.mrb[0].mxu0
    %v2459 = vadd.f32 0.0, %v2458
    %v2460 = vpop.f32.mrb[0].mxu0
    %2461 = vmatprep.mubr.f32.mxu0 0.0
    %2462 = vmatmul.mubr.f32.gmra.mrb[0].mxu0 %v2390
    %v2463 = vpop.f32.mrb[0].mxu0
    %v2464 = vadd.f32 0.0, %v2463
    %v2465 = vpop.f32.mrb[0].mxu0
    %2466 = vdwg.mxu0
    %v2467 = vadd.f32 %v2382, %v2459
    %v2468 = vadd.f32 %v2383, %v2464
    %v2469 = vmul.f32 %v2379, 0.5
    %v2470 = vmul.f32 %v2380, 0.5
    %v2471 = vtanh.pop %v2469
    %v2472 = vtanh.pop %v2470
    %v2473 = vmul.f32 %v2471, 0.5
    %v2474 = vmul.f32 %v2472, 0.5
    %v2475 = vadd.f32 %v2473, 0.5
    %v2476 = vadd.f32 %v2474, 0.5
    %v2477 = vtanh.pop %v2379
    %v2478 = vtanh.pop %v2380
    %v2479 = vmul.f32 %v2475, %v2213
    %v2480 = vmul.f32 %v2476, %v2214
    %2483 = vrot.lane.b32.xlu0 %v2477, 64
    %v2484 = vpop.permute.xlu0 %2483
    %2485 = vrot.lane.b32.xlu0 %v2478, 64
    %v2486 = vpop.permute.xlu0 %2485
    %v2489 = vmul.f32 %v2475, %v2484
    %v2490 = vmul.f32 %v2476, %v2486
    %2493 = vrot.lane.b32.xlu0 %v2489, 32
    %v2494 = vpop.permute.xlu0 %2493
    %2495 = vrot.lane.b32.xlu0 %v2490, 32
    %v2496 = vpop.permute.xlu0 %2495
    %v2499 = vadd.f32 %v2479, %v2494
    %v2500 = vadd.f32 %v2480, %v2496
    %v2501 = vtanh.pop %v2499
    %v2502 = vtanh.pop %v2500
    %2505 = vrot.lane.b32.xlu0 %v2501, 64
    %v2506 = vpop.permute.xlu0 %2505
    %2507 = vrot.lane.b32.xlu0 %v2502, 64
    %v2508 = vpop.permute.xlu0 %2507
    %v2511 = vmul.f32 %v2475, %v2506
    %v2512 = vmul.f32 %v2476, %v2508
    %v2513 = vmul.f32 %v2467, 0.5
    %v2514 = vmul.f32 %v2468, 0.5
    %v2515 = vtanh.pop %v2513
    %v2516 = vtanh.pop %v2514
    %v2517 = vmul.f32 %v2515, 0.5
    %v2518 = vmul.f32 %v2516, 0.5
    %v2519 = vadd.f32 %v2517, 0.5
    %v2520 = vadd.f32 %v2518, 0.5
    %v2521 = vtanh.pop %v2467
    %v2522 = vtanh.pop %v2468
    %v2523 = vmul.f32 %v2519, %v2257
    %v2524 = vmul.f32 %v2520, %v2258
    %2527 = vrot.lane.b32.xlu0 %v2521, 64
    %v2528 = vpop.permute.xlu0 %2527
    %2529 = vrot.lane.b32.xlu0 %v2522, 64
    %v2530 = vpop.permute.xlu0 %2529
    %v2533 = vmul.f32 %v2519, %v2528
    %v2534 = vmul.f32 %v2520, %v2530
    %2537 = vrot.lane.b32.xlu0 %v2533, 32
    %v2538 = vpop.permute.xlu0 %2537
    %2539 = vrot.lane.b32.xlu0 %v2534, 32
    %v2540 = vpop.permute.xlu0 %2539
    %v2543 = vadd.f32 %v2523, %v2538
    %v2544 = vadd.f32 %v2524, %v2540
    %v2545 = vtanh.pop %v2543
    %v2546 = vtanh.pop %v2544
    %2549 = vrot.lane.b32.xlu0 %v2545, 64
    %v2550 = vpop.permute.xlu0 %2549
    %2551 = vrot.lane.b32.xlu0 %v2546, 64
    %v2552 = vpop.permute.xlu0 %2551
    %v2555 = vmul.f32 %v2519, %v2550
    %v2556 = vmul.f32 %v2520, %v2552
    %2559 = vrot.lane.b32.xlu0 %v2511, 32
    %v2560 = vpop.permute.xlu0 %2559
    %2561 = vrot.lane.b32.xlu0 %v2512, 32
    %v2562 = vpop.permute.xlu0 %2561
    %s2565 = scalar_lea.vmem [#allocation19], 96
    %2566 = vst.msk [vmem:[%s2565] sm:$0xff] %vm564, %v2560
    %2567 = vst.msk [vmem:[%s2565 + $0x8] sm:$0xff] %vm564, %v2562
    %2570 = vrot.lane.b32.xlu0 %v2555, 32
    %v2571 = vpop.permute.xlu0 %2570
    %2572 = vrot.lane.b32.xlu0 %v2556, 32
    %v2573 = vpop.permute.xlu0 %2572
    %s2576 = scalar_lea.vmem [#allocation20], 16
    %2577 = vst.msk [vmem:[%s2576] sm:$0xff] %vm564, %v2571
    %2578 = vst.msk [vmem:[%s2576 + $0x8] sm:$0xff] %vm564, %v2573
    %s2579 = scalar_lea.vmem [#allocation2], 112
    %v2580 = vld [vmem:[%s2579] sm:$0xff]
    %v2581 = vld [vmem:[%s2579 + $0x8] sm:$0xff]
    %v2582 = vld [vmem:[#allocation16] sm:$0xff]
    %v2583 = vld [vmem:[#allocation16 + $0x8] sm:$0xff]
    %v2584 = vld [vmem:[#allocation16 + $0x10] sm:$0xff]
    %v2585 = vld [vmem:[#allocation16 + $0x18] sm:$0xff]
    %v2586 = vsel %vm564, %v2560, 0
    %v2588 = vsel %vm564, %v2562, 0
    %2590 = vmatprep.subr.mxu0 0.0
    %2591 = vmatpush1.msra.mxu0 %v2582
    %2592 = vmatprep.subr.mxu0 0.0
    %2593 = vmatpush1.msra.mxu0 %v2583
    %2594 = vmatprep.subr.mxu0 0.0
    %2595 = vmatpush1.msra.mxu0 %v2584
    %2596 = vmatprep.subr.mxu0 0.0
    %2597 = vmatpush1.msra.mxu0 %v2585
    %2598 = vmatprep.subr.mxu0 0.0
    %2599 = vmatpush1.msra.mxu0 0.0
    %2600 = vmatprep.subr.mxu0 0.0
    %2601 = vmatpush1.msra.mxu0 0.0
    %2602 = vmatprep.subr.mxu0 0.0
    %2603 = vmatpush1.msra.mxu0 0.0
    %2604 = vmatprep.subr.mxu0 0.0
    %2605 = vmatpush1.msra.mxu0 0.0
    %2606 = vmatprep.subr.mxu0 0.0
    %2607 = vmatpush1.msra.mxu0 0.0
    %2608 = vmatprep.subr.mxu0 0.0
    %2609 = vmatpush1.msra.mxu0 0.0
    %2610 = vmatprep.subr.mxu0 0.0
    %2611 = vmatpush1.msra.mxu0 0.0
    %2612 = vmatprep.subr.mxu0 0.0
    %2613 = vmatpush1.msra.mxu0 0.0
    %2614 = vmatprep.subr.mxu0 0.0
    %2615 = vmatpush1.msra.mxu0 0.0
    %2616 = vmatprep.subr.mxu0 0.0
    %2617 = vmatpush1.msra.mxu0 0.0
    %2618 = vmatprep.subr.mxu0 0.0
    %2619 = vmatpush1.msra.mxu0 0.0
    %2620 = vmatprep.subr.mxu0 0.0
    %2621 = vmatpush1.msra.mxu0 0.0
    %2622 = vmatprep.subr.mxu0 0.0
    %2623 = vmatpush1.msra.mxu0 0.0
    %2624 = vmatprep.subr.mxu0 0.0
    %2625 = vmatpush1.msra.mxu0 0.0
    %2626 = vmatprep.subr.mxu0 0.0
    %2627 = vmatpush1.msra.mxu0 0.0
    %2628 = vmatprep.subr.mxu0 0.0
    %2629 = vmatpush1.msra.mxu0 0.0
    %2630 = vmatprep.subr.mxu0 0.0
    %2631 = vmatpush1.msra.mxu0 0.0
    %2632 = vmatprep.subr.mxu0 0.0
    %2633 = vmatpush1.msra.mxu0 0.0
    %2634 = vmatprep.subr.mxu0 0.0
    %2635 = vmatpush1.msra.mxu0 0.0
    %2636 = vmatprep.subr.mxu0 0.0
    %2637 = vmatpush1.msra.mxu0 0.0
    %2638 = vmatprep.subr.mxu0 0.0
    %2639 = vmatpush1.msra.mxu0 0.0
    %2640 = vmatprep.subr.mxu0 0.0
    %2641 = vmatpush1.msra.mxu0 0.0
    %2642 = vmatprep.subr.mxu0 0.0
    %2643 = vmatpush1.msra.mxu0 0.0
    %2644 = vmatprep.subr.mxu0 0.0
    %2645 = vmatpush1.msra.mxu0 0.0
    %2646 = vmatprep.subr.mxu0 0.0
    %2647 = vmatpush1.msra.mxu0 0.0
    %2648 = vmatprep.subr.mxu0 0.0
    %2649 = vmatpush1.msra.mxu0 0.0
    %2650 = vmatprep.subr.mxu0 0.0
    %2651 = vmatpush1.msra.mxu0 0.0
    %2652 = vmatprep.subr.mxu0 0.0
    %2653 = vmatpush1.msra.mxu0 0.0
    %2654 = vmatprep.mubr.f32.mxu0 0.0
    %2655 = vmatmul.mubr.f32.gmra.mrb[0].mxu0 %v2586
    %v2656 = vpop.f32.mrb[0].mxu0
    %v2657 = vadd.f32 0.0, %v2656
    %v2658 = vpop.f32.mrb[0].mxu0
    %2659 = vmatprep.mubr.f32.mxu0 0.0
    %2660 = vmatmul.mubr.f32.gmra.mrb[0].mxu0 %v2588
    %v2661 = vpop.f32.mrb[0].mxu0
    %v2662 = vadd.f32 0.0, %v2661
    %v2663 = vpop.f32.mrb[0].mxu0
    %2664 = vdwg.mxu0
    %v2665 = vadd.f32 %v2580, %v2657
    %v2666 = vadd.f32 %v2581, %v2662
    %v2667 = vld [vmem:[#allocation3] sm:$0xff]
    %v2668 = vld [vmem:[#allocation3 + $0x8] sm:$0xff]
    %v2669 = vld [vmem:[#allocation17] sm:$0xff]
    %v2670 = vld [vmem:[#allocation17 + $0x8] sm:$0xff]
    %v2671 = vld [vmem:[#allocation17 + $0x10] sm:$0xff]
    %v2672 = vld [vmem:[#allocation17 + $0x18] sm:$0xff]
    %v2673 = vsel %vm564, %v2571, 0
    %v2675 = vsel %vm564, %v2573, 0
    %2677 = vmatprep.subr.mxu0 0.0
    %2678 = vmatpush1.msra.mxu0 %v2669
    %2679 = vmatprep.subr.mxu0 0.0
    %2680 = vmatpush1.msra.mxu0 %v2670
    %2681 = vmatprep.subr.mxu0 0.0
    %2682 = vmatpush1.msra.mxu0 %v2671
    %2683 = vmatprep.subr.mxu0 0.0
    %2684 = vmatpush1.msra.mxu0 %v2672
    %2685 = vmatprep.subr.mxu0 0.0
    %2686 = vmatpush1.msra.mxu0 0.0
    %2687 = vmatprep.subr.mxu0 0.0
    %2688 = vmatpush1.msra.mxu0 0.0
    %2689 = vmatprep.subr.mxu0 0.0
    %2690 = vmatpush1.msra.mxu0 0.0
    %2691 = vmatprep.subr.mxu0 0.0
    %2692 = vmatpush1.msra.mxu0 0.0
    %2693 = vmatprep.subr.mxu0 0.0
    %2694 = vmatpush1.msra.mxu0 0.0
    %2695 = vmatprep.subr.mxu0 0.0
    %2696 = vmatpush1.msra.mxu0 0.0
    %2697 = vmatprep.subr.mxu0 0.0
    %2698 = vmatpush1.msra.mxu0 0.0
    %2699 = vmatprep.subr.mxu0 0.0
    %2700 = vmatpush1.msra.mxu0 0.0
    %2701 = vmatprep.subr.mxu0 0.0
    %2702 = vmatpush1.msra.mxu0 0.0
    %2703 = vmatprep.subr.mxu0 0.0
    %2704 = vmatpush1.msra.mxu0 0.0
    %2705 = vmatprep.subr.mxu0 0.0
    %2706 = vmatpush1.msra.mxu0 0.0
    %2707 = vmatprep.subr.mxu0 0.0
    %2708 = vmatpush1.msra.mxu0 0.0
    %2709 = vmatprep.subr.mxu0 0.0
    %2710 = vmatpush1.msra.mxu0 0.0
    %2711 = vmatprep.subr.mxu0 0.0
    %2712 = vmatpush1.msra.mxu0 0.0
    %2713 = vmatprep.subr.mxu0 0.0
    %2714 = vmatpush1.msra.mxu0 0.0
    %2715 = vmatprep.subr.mxu0 0.0
    %2716 = vmatpush1.msra.mxu0 0.0
    %2717 = vmatprep.subr.mxu0 0.0
    %2718 = vmatpush1.msra.mxu0 0.0
    %2719 = vmatprep.subr.mxu0 0.0
    %2720 = vmatpush1.msra.mxu0 0.0
    %2721 = vmatprep.subr.mxu0 0.0
    %2722 = vmatpush1.msra.mxu0 0.0
    %2723 = vmatprep.subr.mxu0 0.0
    %2724 = vmatpush1.msra.mxu0 0.0
    %2725 = vmatprep.subr.mxu0 0.0
    %2726 = vmatpush1.msra.mxu0 0.0
    %2727 = vmatprep.subr.mxu0 0.0
    %2728 = vmatpush1.msra.mxu0 0.0
    %2729 = vmatprep.subr.mxu0 0.0
    %2730 = vmatpush1.msra.mxu0 0.0
    %2731 = vmatprep.subr.mxu0 0.0
    %2732 = vmatpush1.msra.mxu0 0.0
    %2733 = vmatprep.subr.mxu0 0.0
    %2734 = vmatpush1.msra.mxu0 0.0
    %2735 = vmatprep.subr.mxu0 0.0
    %2736 = vmatpush1.msra.mxu0 0.0
    %2737 = vmatprep.subr.mxu0 0.0
    %2738 = vmatpush1.msra.mxu0 0.0
    %2739 = vmatprep.subr.mxu0 0.0
    %2740 = vmatpush1.msra.mxu0 0.0
    %2741 = vmatprep.mubr.f32.mxu0 0.0
    %2742 = vmatmul.mubr.f32.gmra.mrb[0].mxu0 %v2673
    %v2743 = vpop.f32.mrb[0].mxu0
    %v2744 = vadd.f32 0.0, %v2743
    %v2745 = vpop.f32.mrb[0].mxu0
    %2746 = vmatprep.mubr.f32.mxu0 0.0
    %2747 = vmatmul.mubr.f32.gmra.mrb[0].mxu0 %v2675
    %v2748 = vpop.f32.mrb[0].mxu0
    %v2749 = vadd.f32 0.0, %v2748
    %v2750 = vpop.f32.mrb[0].mxu0
    %2751 = vdwg.mxu0
    %v2752 = vadd.f32 %v2667, %v2744
    %v2753 = vadd.f32 %v2668, %v2749
    %v2754 = vmul.f32 %v2665, 0.5
    %v2755 = vmul.f32 %v2666, 0.5
    %v2756 = vtanh.pop %v2754
    %v2757 = vtanh.pop %v2755
    %v2758 = vmul.f32 %v2756, 0.5
    %v2759 = vmul.f32 %v2757, 0.5
    %v2760 = vadd.f32 %v2758, 0.5
    %v2761 = vadd.f32 %v2759, 0.5
    %v2762 = vtanh.pop %v2665
    %v2763 = vtanh.pop %v2666
    %v2764 = vmul.f32 %v2760, %v2499
    %v2765 = vmul.f32 %v2761, %v2500
    %2768 = vrot.lane.b32.xlu0 %v2762, 64
    %v2769 = vpop.permute.xlu0 %2768
    %2770 = vrot.lane.b32.xlu0 %v2763, 64
    %v2771 = vpop.permute.xlu0 %2770
    %v2774 = vmul.f32 %v2760, %v2769
    %v2775 = vmul.f32 %v2761, %v2771
    %2778 = vrot.lane.b32.xlu0 %v2774, 32
    %v2779 = vpop.permute.xlu0 %2778
    %2780 = vrot.lane.b32.xlu0 %v2775, 32
    %v2781 = vpop.permute.xlu0 %2780
    %v2784 = vadd.f32 %v2764, %v2779
    %v2785 = vadd.f32 %v2765, %v2781
    %v2786 = vtanh.pop %v2784
    %v2787 = vtanh.pop %v2785
    %2790 = vrot.lane.b32.xlu0 %v2786, 64
    %v2791 = vpop.permute.xlu0 %2790
    %2792 = vrot.lane.b32.xlu0 %v2787, 64
    %v2793 = vpop.permute.xlu0 %2792
    %v2796 = vmul.f32 %v2760, %v2791
    %v2797 = vmul.f32 %v2761, %v2793
    %v2798 = vmul.f32 %v2752, 0.5
    %v2799 = vmul.f32 %v2753, 0.5
    %v2800 = vtanh.pop %v2798
    %v2801 = vtanh.pop %v2799
    %v2802 = vmul.f32 %v2800, 0.5
    %v2803 = vmul.f32 %v2801, 0.5
    %v2804 = vadd.f32 %v2802, 0.5
    %v2805 = vadd.f32 %v2803, 0.5
    %v2806 = vtanh.pop %v2752
    %v2807 = vtanh.pop %v2753
    %v2808 = vmul.f32 %v2804, %v2543
    %v2809 = vmul.f32 %v2805, %v2544
    %2812 = vrot.lane.b32.xlu0 %v2806, 64
    %v2813 = vpop.permute.xlu0 %2812
    %2814 = vrot.lane.b32.xlu0 %v2807, 64
    %v2815 = vpop.permute.xlu0 %2814
    %v2818 = vmul.f32 %v2804, %v2813
    %v2819 = vmul.f32 %v2805, %v2815
    %2822 = vrot.lane.b32.xlu0 %v2818, 32
    %v2823 = vpop.permute.xlu0 %2822
    %2824 = vrot.lane.b32.xlu0 %v2819, 32
    %v2825 = vpop.permute.xlu0 %2824
    %v2828 = vadd.f32 %v2808, %v2823
    %v2829 = vadd.f32 %v2809, %v2825
    %v2830 = vtanh.pop %v2828
    %v2831 = vtanh.pop %v2829
    %2834 = vrot.lane.b32.xlu0 %v2830, 64
    %v2835 = vpop.permute.xlu0 %2834
    %2836 = vrot.lane.b32.xlu0 %v2831, 64
    %v2837 = vpop.permute.xlu0 %2836
    %v2840 = vmul.f32 %v2804, %v2835
    %v2841 = vmul.f32 %v2805, %v2837
    %2844 = vrot.lane.b32.xlu0 %v2796, 32
    %v2845 = vpop.permute.xlu0 %2844
    %2846 = vrot.lane.b32.xlu0 %v2797, 32
    %v2847 = vpop.permute.xlu0 %2846
    %s2850 = scalar_lea.vmem [#allocation19], 112
    %2851 = vst.msk [vmem:[%s2850] sm:$0xff] %vm564, %v2845
    %2852 = vst.msk [vmem:[%s2850 + $0x8] sm:$0xff] %vm564, %v2847
    %2855 = vrot.lane.b32.xlu0 %v2840, 32
    %v2856 = vpop.permute.xlu0 %2855
    %2857 = vrot.lane.b32.xlu0 %v2841, 32
    %v2858 = vpop.permute.xlu0 %2857
    %2861 = vst.msk [vmem:[#allocation20] sm:$0xff] %vm564, %v2856
    %2862 = vst.msk [vmem:[#allocation20 + $0x8] sm:$0xff] %vm564, %v2858
    %2863 = vst.msk [vmem:[#allocation4] sm:$0xff] %vm564, %v2845
    %2864 = vst.msk [vmem:[#allocation4 + $0x8] sm:$0xff] %vm564, %v2847
    %2867 = vrot.lane.b32.xlu0 %v2784, 96
    %v2868 = vpop.permute.xlu0 %2867
    %2869 = vrot.lane.b32.xlu0 %v2785, 96
    %v2870 = vpop.permute.xlu0 %2869
    %2873 = vst.msk [vmem:[#allocation5] sm:$0xff] %vm564, %v2868
    %2874 = vst.msk [vmem:[#allocation5 + $0x8] sm:$0xff] %vm564, %v2870
    %2875 = vst.msk [vmem:[#allocation6] sm:$0xff] %vm564, %v2856
    %2876 = vst.msk [vmem:[#allocation6 + $0x8] sm:$0xff] %vm564, %v2858
    %2879 = vrot.lane.b32.xlu0 %v2828, 96
    %v2880 = vpop.permute.xlu0 %2879
    %2881 = vrot.lane.b32.xlu0 %v2829, 96
    %v2882 = vpop.permute.xlu0 %2881
    %2885 = vst.msk [vmem:[#allocation7] sm:$0xff] %vm564, %v2880
    %2886 = vst.msk [vmem:[#allocation7 + $0x8] sm:$0xff] %vm564, %v2882
    // Predicated region
    $region54: #{tpu_custom_call.1} parent=1 // pred_check
      _
    $region55: #{tpu_custom_call.1} parent=1 // pred_check_branch
      %2888 = sbr.rel (0) target = $region57
    $region56: #{tpu_custom_call.1} parent=1 // pred_region
      %s2890 = ssub.s32 2048, 2048
      %2891 = vsyncadd [#allocation10], %s2890
      %s2892 = sshll.u32 [#allocation19], 4
      %s2893 = int_to_ptr.vmem [resolvable:$true] %s2892
      %2898 = dma.vmem_to_hbm [thread:$0]  %s2893, 2048, %s6, [#allocation10], 128, 128, 8
    $region57: #{tpu_custom_call.1} parent=1 // pred_fallthru
      _
    // Predicated region
    $region58: #{tpu_custom_call.1} parent=1 // pred_check
      _
    $region59: #{tpu_custom_call.1} parent=1 // pred_check_branch
      %2900 = sbr.rel (0) target = $region61
    $region60: #{tpu_custom_call.1} parent=1 // pred_region
      %s2901 = ssub.s32 0, 0
      %s2902 = smul.u32 8, %s2901
      %s2904 = ssub.s32 2048, 2048
      %2905 = vsyncadd [#allocation21], %s2904
      %s2906 = smul.addr %s2902, 2
      %s2907 = smul.addr %s2906, 128
      %s2908 = scalar_lea.hbm %s7, %s2907
      %s2909 = sshll.u32 [#allocation20], 4
      %s2910 = int_to_ptr.vmem [resolvable:$true] %s2909
      %2915 = dma.vmem_to_hbm [thread:$0]  %s2910, 2048, %s2908, [#allocation21], 128, 128, 8
    $region61: #{tpu_custom_call.1} parent=1 // pred_fallthru
      _
    // Predicated region
    $region62: #{tpu_custom_call.1} parent=1 // pred_check
      _
    $region63: #{tpu_custom_call.1} parent=1 // pred_check_branch
      %2917 = sbr.rel (0) target = $region65
    $region64: #{tpu_custom_call.1} parent=1 // pred_region
      %2918 = dma.done [#allocation10], 2048
    $region65: #{tpu_custom_call.1} parent=1 // pred_fallthru
      _
    // Predicated region
    $region66: #{tpu_custom_call.1} parent=1 // pred_check
      _
    $region67: #{tpu_custom_call.1} parent=1 // pred_check_branch
      %2920 = sbr.rel (0) target = $region69
    $region68: #{tpu_custom_call.1} parent=1 // pred_region
      %2921 = dma.done [#allocation21], 2048
    $region69: #{tpu_custom_call.1} parent=1 // pred_fallthru
      _
    %2922 = vsyncpa [#allocation9], 1
    %2923 = vsyncpa [#allocation12], 1
    %2924 = vsyncpa [#allocation15], 1
    %2925 = vsyncpa [#allocation18], 1
    %2926 = vsyncpa [#allocation10], 1
    %2927 = vsyncpa [#allocation21], 1

</llo_original>
